<compile_context>
chip_gen: v6e
topology: v6e:2x2x1
jax: 0.10.0
libtpu: 0.0.40
codegen_flags: <defaults>
</compile_context>

<pallas_src>
import functools

import jax
import jax.numpy as jnp
from jax.experimental import pallas as pl
from jax.experimental.pallas import tpu as pltpu


# ---------------------------------------------------------------------------
# In-kernel helper: accumulate a KHxKW conv as per-tap MXU matmuls into a
# VMEM f32 scratch accumulator.  The input arrives phase-decomposed (one
# sub-grid per (kh % s, kw % s) phase), so every tap is a unit-stride static
# window of one phase -> no strided loads and no HBM im2col blow-up.
# ---------------------------------------------------------------------------
def _accum_conv(x_ref, w_ref, acc_ref, *, tap_phase, Hout, Wout):
    # x_ref: (1, P, Hph, Wph, Cin) bf16 phases, w_ref: (T, Cin, Cout) bf16
    M = Hout * Wout
    Cin = x_ref.shape[-1]
    acc_ref[...] = jnp.zeros_like(acc_ref)
    for t, (p, oh, ow) in enumerate(tap_phase):       # static unroll over taps
        patch = x_ref[0, p, oh:oh + Hout, ow:ow + Wout, :].reshape(M, Cin)
        acc_ref[...] += jnp.dot(patch, w_ref[t],
                                preferred_element_type=jnp.float32)


def _conv_bn_kernel(x_ref, w_ref, s_ref, b_ref, o_ref, acc_ref, *,
                    tap_phase, Hout, Wout, relu):
    _accum_conv(x_ref, w_ref, acc_ref, tap_phase=tap_phase, Hout=Hout, Wout=Wout)
    y = acc_ref[...] * s_ref[0] + b_ref[0]            # folded BN affine (f32)
    if relu:
        y = jnp.maximum(y, 0.0)
    o_ref[0] = y.astype(o_ref.dtype)


def _conv_bn_res_kernel(x_ref, w_ref, s_ref, b_ref, r_ref, o_ref, acc_ref, *,
                        tap_phase, Hout, Wout):
    _accum_conv(x_ref, w_ref, acc_ref, tap_phase=tap_phase, Hout=Hout, Wout=Wout)
    y = acc_ref[...] * s_ref[0] + b_ref[0] + r_ref[0]  # BN + residual (f32)
    o_ref[0] = jnp.maximum(y, 0.0).astype(o_ref.dtype)


def _conv_bn_down_kernel(x_ref, w_ref, s_ref, b_ref, wd_ref, sd_ref, bd_ref,
                         y_ref, id_ref, acc_ref, *,
                         tap_phase, dslot, doff, Hout, Wout):
    """Fused: y = relu(bn1(conv3x3_s(x)));  id = bn_d(1x1-proj_s(x)).
    Both convs read the same phase-decomposed input block (x read once)."""
    M = Hout * Wout
    Cin = x_ref.shape[-1]
    _accum_conv(x_ref, w_ref, acc_ref, tap_phase=tap_phase, Hout=Hout, Wout=Wout)
    y = jnp.maximum(acc_ref[...] * s_ref[0] + b_ref[0], 0.0)
    y_ref[0] = y.astype(y_ref.dtype)                   # bf16 intra-block value
    # 1x1 projection shortcut: its single tap sits at padded offset (1,1).
    xd = x_ref[0, dslot, doff:doff + Hout, doff:doff + Wout, :].reshape(M, Cin)
    idn = jnp.dot(xd, wd_ref[...], preferred_element_type=jnp.float32)
    id_ref[0] = (idn * sd_ref[0] + bd_ref[0]).astype(id_ref.dtype)


# ---------------------------------------------------------------------------
# Wrapper glue: pad + phase-decompose (plain JAX, ~1x activation traffic)
# ---------------------------------------------------------------------------
def _phase_input(x, KH, KW, stride):
    """Returns (phases, Hout, Wout, tap_phase, phase_list).

    phases    : (N, P, Hph, Wph, C), one sub-grid per distinct (kh%s, kw%s).
    tap_phase : per tap (phase slot, row offset, col offset); each tap is a
                unit-stride (Hout, Wout) window of its phase.
    """
    N, H, W, C = x.shape
    s = stride
    pad = (KH - 1) // 2                                # 'same'-style padding
    Hout = (H + 2 * pad - KH) // s + 1
    Wout = (W + 2 * pad - KW) // s + 1
    Hph = Hout + (KH - 1) // s
    Wph = Wout + (KW - 1) // s
    xp = jnp.pad(x, ((0, 0),
                     (pad, s * Hph - pad - H),
                     (pad, s * Wph - pad - W),
                     (0, 0)))
    phase_list, tap_phase = [], []
    for kh in range(KH):
        for kw in range(KW):
            ab = (kh % s, kw % s)
            if ab not in phase_list:
                phase_list.append(ab)
            tap_phase.append((phase_list.index(ab), kh // s, kw // s))
    phases = jnp.stack([xp[:, a::s, b::s, :] for (a, b) in phase_list], axis=1)
    return phases, Hout, Wout, tuple(tap_phase), phase_list


def _weight_specs(T, Cin, Cout):
    return [
        pl.BlockSpec((T, Cin, Cout), lambda n: (0, 0, 0)),
        pl.BlockSpec((1, Cout), lambda n: (0, 0)),
        pl.BlockSpec((1, Cout), lambda n: (0, 0)),
    ]


# ---------------------------------------------------------------------------
# pallas_call wrappers
# ---------------------------------------------------------------------------
def conv_bn(x, w, scale, bias, *, stride=1, relu=True):
    """Conv + folded BN (+ReLU).  x: (N,H,W,Cin) f32; w: (KH,KW,Cin,Cout)."""
    N, H, W, Cin = x.shape
    KH, KW, _, Cout = w.shape
    phases, Hout, Wout, tap_phase, _ = _phase_input(
        x.astype(jnp.bfloat16), KH, KW, stride)
    _, P, Hph, Wph, _ = phases.shape
    M = Hout * Wout
    T = KH * KW
    w_m = w.reshape(T, Cin, Cout).astype(jnp.bfloat16)
    s_m = scale.reshape(1, Cout).astype(jnp.float32)
    b_m = bias.reshape(1, Cout).astype(jnp.float32)
    kern = functools.partial(_conv_bn_kernel, tap_phase=tap_phase,
                             Hout=Hout, Wout=Wout, relu=relu)
    out = pl.pallas_call(
        kern,
        out_shape=jax.ShapeDtypeStruct((N, M, Cout), jnp.float32),
        grid=(N,),
        in_specs=[pl.BlockSpec((1, P, Hph, Wph, Cin), lambda n: (n, 0, 0, 0, 0))]
                 + _weight_specs(T, Cin, Cout),
        out_specs=pl.BlockSpec((1, M, Cout), lambda n: (n, 0, 0)),
        scratch_shapes=[pltpu.VMEM((M, Cout), jnp.float32)],
        compiler_params=pltpu.CompilerParams(dimension_semantics=("parallel",)),
        cost_estimate=pl.CostEstimate(
            flops=2 * N * M * T * Cin * Cout, transcendentals=0,
            bytes_accessed=phases.size * 2 + w_m.size * 2 + N * M * Cout * 4),
    )(phases, w_m, s_m, b_m)
    return out.reshape(N, Hout, Wout, Cout)


def conv_bn_with_proj(x, p_main, p_down, *, stride):
    """Fused main-path 3x3 conv (+BN+ReLU) and 1x1 projection shortcut (+BN).
    Returns (y bf16 NHWC, identity f32 (N, Hout*Wout, Cout))."""
    N, H, W, Cin = x.shape
    KH, KW, _, Cout = p_main["w"].shape
    phases, Hout, Wout, tap_phase, phase_list = _phase_input(
        x.astype(jnp.bfloat16), KH, KW, stride)
    _, P, Hph, Wph, _ = phases.shape
    M = Hout * Wout
    T = KH * KW
    dslot = phase_list.index((1 % stride, 1 % stride))
    doff = 1 // stride
    w1 = p_main["w"].reshape(T, Cin, Cout).astype(jnp.bfloat16)
    s1 = p_main["s"].reshape(1, Cout).astype(jnp.float32)
    b1 = p_main["b"].reshape(1, Cout).astype(jnp.float32)
    wd = p_down["w"].reshape(Cin, Cout).astype(jnp.bfloat16)
    sd = p_down["s"].reshape(1, Cout).astype(jnp.float32)
    bd = p_down["b"].reshape(1, Cout).astype(jnp.float32)
    kern = functools.partial(_conv_bn_down_kernel, tap_phase=tap_phase,
                             dslot=dslot, doff=doff, Hout=Hout, Wout=Wout)
    y, idn = pl.pallas_call(
        kern,
        out_shape=(jax.ShapeDtypeStruct((N, M, Cout), jnp.bfloat16),
                   jax.ShapeDtypeStruct((N, M, Cout), jnp.float32)),
        grid=(N,),
        in_specs=[pl.BlockSpec((1, P, Hph, Wph, Cin), lambda n: (n, 0, 0, 0, 0))]
                 + _weight_specs(T, Cin, Cout)
                 + [pl.BlockSpec((Cin, Cout), lambda n: (0, 0)),
                    pl.BlockSpec((1, Cout), lambda n: (0, 0)),
                    pl.BlockSpec((1, Cout), lambda n: (0, 0))],
        out_specs=(pl.BlockSpec((1, M, Cout), lambda n: (n, 0, 0)),
                   pl.BlockSpec((1, M, Cout), lambda n: (n, 0, 0))),
        scratch_shapes=[pltpu.VMEM((M, Cout), jnp.float32)],
        compiler_params=pltpu.CompilerParams(dimension_semantics=("parallel",)),
        cost_estimate=pl.CostEstimate(
            flops=2 * N * M * (T + 1) * Cin * Cout, transcendentals=0,
            bytes_accessed=phases.size * 2 + (w1.size + wd.size) * 2
                           + N * M * Cout * (2 + 4)),
    )(phases, w1, s1, b1, wd, sd, bd)
    return y.reshape(N, Hout, Wout, Cout), idn


def conv_bn_add_relu(x, p, identity):
    """3x3 stride-1 conv + BN + residual add + ReLU (BasicBlock second conv).
    x: (N,H,W,Cmid) bf16 NHWC;  identity: (N, H*W, Cout) f32."""
    N, H, W, Cin = x.shape
    KH, KW, _, Cout = p["w"].shape
    phases, Hout, Wout, tap_phase, _ = _phase_input(
        x.astype(jnp.bfloat16), KH, KW, 1)
    _, P, Hph, Wph, _ = phases.shape
    M = Hout * Wout
    T = KH * KW
    w_m = p["w"].reshape(T, Cin, Cout).astype(jnp.bfloat16)
    s_m = p["s"].reshape(1, Cout).astype(jnp.float32)
    b_m = p["b"].reshape(1, Cout).astype(jnp.float32)
    kern = functools.partial(_conv_bn_res_kernel, tap_phase=tap_phase,
                             Hout=Hout, Wout=Wout)
    out = pl.pallas_call(
        kern,
        out_shape=jax.ShapeDtypeStruct((N, M, Cout), jnp.float32),
        grid=(N,),
        in_specs=[pl.BlockSpec((1, P, Hph, Wph, Cin), lambda n: (n, 0, 0, 0, 0))]
                 + _weight_specs(T, Cin, Cout)
                 + [pl.BlockSpec((1, M, Cout), lambda n: (n, 0, 0))],
        out_specs=pl.BlockSpec((1, M, Cout), lambda n: (n, 0, 0)),
        scratch_shapes=[pltpu.VMEM((M, Cout), jnp.float32)],
        compiler_params=pltpu.CompilerParams(dimension_semantics=("parallel",)),
        cost_estimate=pl.CostEstimate(
            flops=2 * N * M * T * Cin * Cout, transcendentals=0,
            bytes_accessed=phases.size * 2 + w_m.size * 2 + N * M * Cout * 8),
    )(phases, w_m, s_m, b_m, identity)
    return out.reshape(N, Hout, Wout, Cout)


# ---------------------------------------------------------------------------
# Deterministic parameter construction (synthetic backbone)
# ---------------------------------------------------------------------------
def _init_conv(key, kh, kw, cin, cout):
    k1, k2, k3 = jax.random.split(key, 3)
    fan_in = kh * kw * cin
    return {
        "w": jax.random.normal(k1, (kh, kw, cin, cout), jnp.float32) / jnp.sqrt(float(fan_in)),
        "s": 1.0 + 0.1 * jax.random.normal(k2, (cout,), jnp.float32),  # folded BN scale
        "b": 0.1 * jax.random.normal(k3, (cout,), jnp.float32),        # folded BN bias
    }


def _init_basic_block(key, cin, cout):
    k1, k2, k3 = jax.random.split(key, 3)
    return {
        "conv1": _init_conv(k1, 3, 3, cin, cout),
        "conv2": _init_conv(k2, 3, 3, cout, cout),
        "down": _init_conv(k3, 1, 1, cin, cout),   # 1x1 projection skip
    }


def _basic_block(x, p, stride):
    y, identity = conv_bn_with_proj(x, p["conv1"], p["down"], stride=stride)
    return conv_bn_add_relu(y, p["conv2"], identity)


class BackboneBasePallas:
    """Pallas re-implementation of BackboneBase.forward semantics."""

    def __init__(self, key, in_channels=4, base_channels=8):
        keys = jax.random.split(key, 5)
        self.stem = _init_conv(keys[0], 3, 3, in_channels, base_channels)
        chans = [base_channels, base_channels * 2, base_channels * 4, base_channels * 8]
        self.strides = [1, 2, 2, 2]                # like ResNet layer1..layer4
        self.layers = []
        cin = base_channels
        for i in range(4):
            self.layers.append(_init_basic_block(keys[i + 1], cin, chans[i]))
            cin = chans[i]
        self.num_channels = chans[-1]

    def __call__(self, x_nchw):
        # layout: input NCHW (PyTorch), internal NHWC, outputs NCHW features.
        x = jnp.transpose(x_nchw, (0, 2, 3, 1)).astype(jnp.float32)
        x = conv_bn(x, self.stem["w"], self.stem["s"], self.stem["b"],
                    stride=1, relu=True)
        feats = []
        for p, s in zip(self.layers, self.strides):
            x = _basic_block(x, p, s)
            feats.append(x)                        # layer1..layer4 == out['0']..out['3']
        # BackboneBase.forward: [out['3'], out['2'], out['1'], out['0']]
        return [jnp.transpose(f, (0, 3, 1, 2)) for f in feats[::-1]]


if __name__ == "__main__":
    key = jax.random.PRNGKey(0)
    kx, kp = jax.random.split(key)
    # small shapes consistent with the module: batch=2, channels=4, spatial=16
    x = jax.random.normal(kx, (2, 4, 16, 16), jnp.float32)   # NCHW, like PyTorch
    model = BackboneBasePallas(kp, in_channels=4, base_channels=8)
    outs = model(x)
    for o in outs:
        jax.block_until_ready(o)
    # sanity: shapes are [layer4, layer3, layer2, layer1] in NCHW
    assert outs[0].shape == (2, 64, 2, 2)
    assert outs[1].shape == (2, 32, 4, 4)
    assert outs[2].shape == (2, 16, 8, 8)
    assert outs[3].shape == (2, 8, 16, 16)
    print("KERNEL_OK")
</pallas_src>

<mosaic_0001>
module attributes {stable_mosaic.version = 11 : i64} {
  func.func @_conv_bn_kernel(%arg0: i32, %arg1: memref<1x1x18x18x4xbf16, #tpu.memory_space<vmem>>, %arg2: memref<9x4x8xbf16, #tpu.memory_space<vmem>>, %arg3: memref<1x8xf32, #tpu.memory_space<vmem>>, %arg4: memref<1x8xf32, #tpu.memory_space<vmem>>, %arg5: memref<1x256x8xf32, #tpu.memory_space<vmem>>, %arg6: memref<256x8xf32, #tpu.memory_space<vmem>>) attributes {dimension_semantics = [#tpu.dimension_semantics<parallel>], iteration_bounds = array<i64: 2>, scalar_prefetch = 0 : i64, scratch_operands = 1 : i64, tpu.core_type = #tpu.core_type<tc>, window_params = [{transform_indices = @transform_0, window_bounds = array<i64: 1, 1, 18, 18, 4>}, {pipeline_mode = #tpu.pipeline_mode<synchronous>, transform_indices = @transform_1, window_bounds = array<i64: 9, 4, 8>}, {pipeline_mode = #tpu.pipeline_mode<synchronous>, transform_indices = @transform_2, window_bounds = array<i64: 1, 8>}, {pipeline_mode = #tpu.pipeline_mode<synchronous>, transform_indices = @transform_3, window_bounds = array<i64: 1, 8>}, {transform_indices = @transform_4, window_bounds = array<i64: 1, 256, 8>}]} {
    %cst = arith.constant 0.000000e+00 : f32
    %0 = vector.broadcast %cst : f32 to vector<256x8xf32>
    %c0 = arith.constant 0 : index
    %c0_0 = arith.constant 0 : index
    %1 = vector.load %arg6[%c0, %c0_0] : memref<256x8xf32, #tpu.memory_space<vmem>>, vector<256x8xf32>
    tpu.vector_store %arg6[%c0, %c0_0], %0 {strides = array<i32>} : memref<256x8xf32, #tpu.memory_space<vmem>>, vector<256x8xf32>,
    %c0_1 = arith.constant 0 : index
    %c0_2 = arith.constant 0 : index
    %c0_3 = arith.constant 0 : index
    %c0_4 = arith.constant 0 : index
    %c0_5 = arith.constant 0 : index
    %2 = vector.load %arg1[%c0_1, %c0_2, %c0_3, %c0_4, %c0_5] : memref<1x1x18x18x4xbf16, #tpu.memory_space<vmem>>, vector<1x1x16x16x4xbf16>
    %3 = vector.shape_cast %2 : vector<1x1x16x16x4xbf16> to vector<16x16x4xbf16>
    %4 = vector.shape_cast %3 : vector<16x16x4xbf16> to vector<256x4xbf16>
    %c0_6 = arith.constant 0 : index
    %c0_7 = arith.constant 0 : index
    %5 = vector.load %arg6[%c0_6, %c0_7] : memref<256x8xf32, #tpu.memory_space<vmem>>, vector<256x8xf32>
    %c0_8 = arith.constant 0 : index
    %c0_9 = arith.constant 0 : index
    %c0_10 = arith.constant 0 : index
    %6 = vector.load %arg2[%c0_8, %c0_9, %c0_10] : memref<9x4x8xbf16, #tpu.memory_space<vmem>>, vector<1x4x8xbf16>
    %7 = vector.shape_cast %6 : vector<1x4x8xbf16> to vector<4x8xbf16>
    %cst_11 = arith.constant dense<0.000000e+00> : vector<256x8xf32>
    %8 = tpu.matmul %4, %7, %cst_11 {dimension_numbers = #tpu.dot_dimension_numbers<[1], [0], [0], [1], [0, 0, 1, 1], [], []>} : vector<256x4xbf16>, vector<4x8xbf16>, vector<256x8xf32> -> vector<256x8xf32>
    %9 = arith.addf %5, %8 : vector<256x8xf32>
    %c0_12 = arith.constant 0 : index
    %c0_13 = arith.constant 0 : index
    %10 = vector.load %arg6[%c0_12, %c0_13] : memref<256x8xf32, #tpu.memory_space<vmem>>, vector<256x8xf32>
    tpu.vector_store %arg6[%c0_12, %c0_13], %9 {strides = array<i32>} : memref<256x8xf32, #tpu.memory_space<vmem>>, vector<256x8xf32>,
    %c0_14 = arith.constant 0 : index
    %c0_15 = arith.constant 0 : index
    %c0_16 = arith.constant 0 : index
    %c1 = arith.constant 1 : index
    %c0_17 = arith.constant 0 : index
    %11 = vector.load %arg1[%c0_14, %c0_15, %c0_16, %c1, %c0_17] : memref<1x1x18x18x4xbf16, #tpu.memory_space<vmem>>, vector<1x1x16x16x4xbf16>
    %12 = vector.shape_cast %11 : vector<1x1x16x16x4xbf16> to vector<16x16x4xbf16>
    %13 = vector.shape_cast %12 : vector<16x16x4xbf16> to vector<256x4xbf16>
    %c0_18 = arith.constant 0 : index
    %c0_19 = arith.constant 0 : index
    %14 = vector.load %arg6[%c0_18, %c0_19] : memref<256x8xf32, #tpu.memory_space<vmem>>, vector<256x8xf32>
    %c1_20 = arith.constant 1 : index
    %c0_21 = arith.constant 0 : index
    %c0_22 = arith.constant 0 : index
    %15 = vector.load %arg2[%c1_20, %c0_21, %c0_22] : memref<9x4x8xbf16, #tpu.memory_space<vmem>>, vector<1x4x8xbf16>
    %16 = vector.shape_cast %15 : vector<1x4x8xbf16> to vector<4x8xbf16>
    %cst_23 = arith.constant dense<0.000000e+00> : vector<256x8xf32>
    %17 = tpu.matmul %13, %16, %cst_23 {dimension_numbers = #tpu.dot_dimension_numbers<[1], [0], [0], [1], [0, 0, 1, 1], [], []>} : vector<256x4xbf16>, vector<4x8xbf16>, vector<256x8xf32> -> vector<256x8xf32>
    %18 = arith.addf %14, %17 : vector<256x8xf32>
    %c0_24 = arith.constant 0 : index
    %c0_25 = arith.constant 0 : index
    %19 = vector.load %arg6[%c0_24, %c0_25] : memref<256x8xf32, #tpu.memory_space<vmem>>, vector<256x8xf32>
    tpu.vector_store %arg6[%c0_24, %c0_25], %18 {strides = array<i32>} : memref<256x8xf32, #tpu.memory_space<vmem>>, vector<256x8xf32>,
    %c0_26 = arith.constant 0 : index
    %c0_27 = arith.constant 0 : index
    %c0_28 = arith.constant 0 : index
    %c2 = arith.constant 2 : index
    %c0_29 = arith.constant 0 : index
    %20 = vector.load %arg1[%c0_26, %c0_27, %c0_28, %c2, %c0_29] : memref<1x1x18x18x4xbf16, #tpu.memory_space<vmem>>, vector<1x1x16x16x4xbf16>
    %21 = vector.shape_cast %20 : vector<1x1x16x16x4xbf16> to vector<16x16x4xbf16>
    %22 = vector.shape_cast %21 : vector<16x16x4xbf16> to vector<256x4xbf16>
    %c0_30 = arith.constant 0 : index
    %c0_31 = arith.constant 0 : index
    %23 = vector.load %arg6[%c0_30, %c0_31] : memref<256x8xf32, #tpu.memory_space<vmem>>, vector<256x8xf32>
    %c2_32 = arith.constant 2 : index
    %c0_33 = arith.constant 0 : index
    %c0_34 = arith.constant 0 : index
    %24 = vector.load %arg2[%c2_32, %c0_33, %c0_34] : memref<9x4x8xbf16, #tpu.memory_space<vmem>>, vector<1x4x8xbf16>
    %25 = vector.shape_cast %24 : vector<1x4x8xbf16> to vector<4x8xbf16>
    %cst_35 = arith.constant dense<0.000000e+00> : vector<256x8xf32>
    %26 = tpu.matmul %22, %25, %cst_35 {dimension_numbers = #tpu.dot_dimension_numbers<[1], [0], [0], [1], [0, 0, 1, 1], [], []>} : vector<256x4xbf16>, vector<4x8xbf16>, vector<256x8xf32> -> vector<256x8xf32>
    %27 = arith.addf %23, %26 : vector<256x8xf32>
    %c0_36 = arith.constant 0 : index
    %c0_37 = arith.constant 0 : index
    %28 = vector.load %arg6[%c0_36, %c0_37] : memref<256x8xf32, #tpu.memory_space<vmem>>, vector<256x8xf32>
    tpu.vector_store %arg6[%c0_36, %c0_37], %27 {strides = array<i32>} : memref<256x8xf32, #tpu.memory_space<vmem>>, vector<256x8xf32>,
    %c0_38 = arith.constant 0 : index
    %c0_39 = arith.constant 0 : index
    %c1_40 = arith.constant 1 : index
    %c0_41 = arith.constant 0 : index
    %c0_42 = arith.constant 0 : index
    %29 = vector.load %arg1[%c0_38, %c0_39, %c1_40, %c0_41, %c0_42] : memref<1x1x18x18x4xbf16, #tpu.memory_space<vmem>>, vector<1x1x16x16x4xbf16>
    %30 = vector.shape_cast %29 : vector<1x1x16x16x4xbf16> to vector<16x16x4xbf16>
    %31 = vector.shape_cast %30 : vector<16x16x4xbf16> to vector<256x4xbf16>
    %c0_43 = arith.constant 0 : index
    %c0_44 = arith.constant 0 : index
    %32 = vector.load %arg6[%c0_43, %c0_44] : memref<256x8xf32, #tpu.memory_space<vmem>>, vector<256x8xf32>
    %c3 = arith.constant 3 : index
    %c0_45 = arith.constant 0 : index
    %c0_46 = arith.constant 0 : index
    %33 = vector.load %arg2[%c3, %c0_45, %c0_46] : memref<9x4x8xbf16, #tpu.memory_space<vmem>>, vector<1x4x8xbf16>
    %34 = vector.shape_cast %33 : vector<1x4x8xbf16> to vector<4x8xbf16>
    %cst_47 = arith.constant dense<0.000000e+00> : vector<256x8xf32>
    %35 = tpu.matmul %31, %34, %cst_47 {dimension_numbers = #tpu.dot_dimension_numbers<[1], [0], [0], [1], [0, 0, 1, 1], [], []>} : vector<256x4xbf16>, vector<4x8xbf16>, vector<256x8xf32> -> vector<256x8xf32>
    %36 = arith.addf %32, %35 : vector<256x8xf32>
    %c0_48 = arith.constant 0 : index
    %c0_49 = arith.constant 0 : index
    %37 = vector.load %arg6[%c0_48, %c0_49] : memref<256x8xf32, #tpu.memory_space<vmem>>, vector<256x8xf32>
    tpu.vector_store %arg6[%c0_48, %c0_49], %36 {strides = array<i32>} : memref<256x8xf32, #tpu.memory_space<vmem>>, vector<256x8xf32>,
    %c0_50 = arith.constant 0 : index
    %c0_51 = arith.constant 0 : index
    %c1_52 = arith.constant 1 : index
    %c1_53 = arith.constant 1 : index
    %c0_54 = arith.constant 0 : index
    %38 = vector.load %arg1[%c0_50, %c0_51, %c1_52, %c1_53, %c0_54] : memref<1x1x18x18x4xbf16, #tpu.memory_space<vmem>>, vector<1x1x16x16x4xbf16>
    %39 = vector.shape_cast %38 : vector<1x1x16x16x4xbf16> to vector<16x16x4xbf16>
    %40 = vector.shape_cast %39 : vector<16x16x4xbf16> to vector<256x4xbf16>
    %c0_55 = arith.constant 0 : index
    %c0_56 = arith.constant 0 : index
    %41 = vector.load %arg6[%c0_55, %c0_56] : memref<256x8xf32, #tpu.memory_space<vmem>>, vector<256x8xf32>
    %c4 = arith.constant 4 : index
    %c0_57 = arith.constant 0 : index
    %c0_58 = arith.constant 0 : index
    %42 = vector.load %arg2[%c4, %c0_57, %c0_58] : memref<9x4x8xbf16, #tpu.memory_space<vmem>>, vector<1x4x8xbf16>
    %43 = vector.shape_cast %42 : vector<1x4x8xbf16> to vector<4x8xbf16>
    %cst_59 = arith.constant dense<0.000000e+00> : vector<256x8xf32>
    %44 = tpu.matmul %40, %43, %cst_59 {dimension_numbers = #tpu.dot_dimension_numbers<[1], [0], [0], [1], [0, 0, 1, 1], [], []>} : vector<256x4xbf16>, vector<4x8xbf16>, vector<256x8xf32> -> vector<256x8xf32>
    %45 = arith.addf %41, %44 : vector<256x8xf32>
    %c0_60 = arith.constant 0 : index
    %c0_61 = arith.constant 0 : index
    %46 = vector.load %arg6[%c0_60, %c0_61] : memref<256x8xf32, #tpu.memory_space<vmem>>, vector<256x8xf32>
    tpu.vector_store %arg6[%c0_60, %c0_61], %45 {strides = array<i32>} : memref<256x8xf32, #tpu.memory_space<vmem>>, vector<256x8xf32>,
    %c0_62 = arith.constant 0 : index
    %c0_63 = arith.constant 0 : index
    %c1_64 = arith.constant 1 : index
    %c2_65 = arith.constant 2 : index
    %c0_66 = arith.constant 0 : index
    %47 = vector.load %arg1[%c0_62, %c0_63, %c1_64, %c2_65, %c0_66] : memref<1x1x18x18x4xbf16, #tpu.memory_space<vmem>>, vector<1x1x16x16x4xbf16>
    %48 = vector.shape_cast %47 : vector<1x1x16x16x4xbf16> to vector<16x16x4xbf16>
    %49 = vector.shape_cast %48 : vector<16x16x4xbf16> to vector<256x4xbf16>
    %c0_67 = arith.constant 0 : index
    %c0_68 = arith.constant 0 : index
    %50 = vector.load %arg6[%c0_67, %c0_68] : memref<256x8xf32, #tpu.memory_space<vmem>>, vector<256x8xf32>
    %c5 = arith.constant 5 : index
    %c0_69 = arith.constant 0 : index
    %c0_70 = arith.constant 0 : index
    %51 = vector.load %arg2[%c5, %c0_69, %c0_70] : memref<9x4x8xbf16, #tpu.memory_space<vmem>>, vector<1x4x8xbf16>
    %52 = vector.shape_cast %51 : vector<1x4x8xbf16> to vector<4x8xbf16>
    %cst_71 = arith.constant dense<0.000000e+00> : vector<256x8xf32>
    %53 = tpu.matmul %49, %52, %cst_71 {dimension_numbers = #tpu.dot_dimension_numbers<[1], [0], [0], [1], [0, 0, 1, 1], [], []>} : vector<256x4xbf16>, vector<4x8xbf16>, vector<256x8xf32> -> vector<256x8xf32>
    %54 = arith.addf %50, %53 : vector<256x8xf32>
    %c0_72 = arith.constant 0 : index
    %c0_73 = arith.constant 0 : index
    %55 = vector.load %arg6[%c0_72, %c0_73] : memref<256x8xf32, #tpu.memory_space<vmem>>, vector<256x8xf32>
    tpu.vector_store %arg6[%c0_72, %c0_73], %54 {strides = array<i32>} : memref<256x8xf32, #tpu.memory_space<vmem>>, vector<256x8xf32>,
    %c0_74 = arith.constant 0 : index
    %c0_75 = arith.constant 0 : index
    %c2_76 = arith.constant 2 : index
    %c0_77 = arith.constant 0 : index
    %c0_78 = arith.constant 0 : index
    %56 = vector.load %arg1[%c0_74, %c0_75, %c2_76, %c0_77, %c0_78] : memref<1x1x18x18x4xbf16, #tpu.memory_space<vmem>>, vector<1x1x16x16x4xbf16>
    %57 = vector.shape_cast %56 : vector<1x1x16x16x4xbf16> to vector<16x16x4xbf16>
    %58 = vector.shape_cast %57 : vector<16x16x4xbf16> to vector<256x4xbf16>
    %c0_79 = arith.constant 0 : index
    %c0_80 = arith.constant 0 : index
    %59 = vector.load %arg6[%c0_79, %c0_80] : memref<256x8xf32, #tpu.memory_space<vmem>>, vector<256x8xf32>
    %c6 = arith.constant 6 : index
    %c0_81 = arith.constant 0 : index
    %c0_82 = arith.constant 0 : index
    %60 = vector.load %arg2[%c6, %c0_81, %c0_82] : memref<9x4x8xbf16, #tpu.memory_space<vmem>>, vector<1x4x8xbf16>
    %61 = vector.shape_cast %60 : vector<1x4x8xbf16> to vector<4x8xbf16>
    %cst_83 = arith.constant dense<0.000000e+00> : vector<256x8xf32>
    %62 = tpu.matmul %58, %61, %cst_83 {dimension_numbers = #tpu.dot_dimension_numbers<[1], [0], [0], [1], [0, 0, 1, 1], [], []>} : vector<256x4xbf16>, vector<4x8xbf16>, vector<256x8xf32> -> vector<256x8xf32>
    %63 = arith.addf %59, %62 : vector<256x8xf32>
    %c0_84 = arith.constant 0 : index
    %c0_85 = arith.constant 0 : index
    %64 = vector.load %arg6[%c0_84, %c0_85] : memref<256x8xf32, #tpu.memory_space<vmem>>, vector<256x8xf32>
    tpu.vector_store %arg6[%c0_84, %c0_85], %63 {strides = array<i32>} : memref<256x8xf32, #tpu.memory_space<vmem>>, vector<256x8xf32>,
    %c0_86 = arith.constant 0 : index
    %c0_87 = arith.constant 0 : index
    %c2_88 = arith.constant 2 : index
    %c1_89 = arith.constant 1 : index
    %c0_90 = arith.constant 0 : index
    %65 = vector.load %arg1[%c0_86, %c0_87, %c2_88, %c1_89, %c0_90] : memref<1x1x18x18x4xbf16, #tpu.memory_space<vmem>>, vector<1x1x16x16x4xbf16>
    %66 = vector.shape_cast %65 : vector<1x1x16x16x4xbf16> to vector<16x16x4xbf16>
    %67 = vector.shape_cast %66 : vector<16x16x4xbf16> to vector<256x4xbf16>
    %c0_91 = arith.constant 0 : index
    %c0_92 = arith.constant 0 : index
    %68 = vector.load %arg6[%c0_91, %c0_92] : memref<256x8xf32, #tpu.memory_space<vmem>>, vector<256x8xf32>
    %c7 = arith.constant 7 : index
    %c0_93 = arith.constant 0 : index
    %c0_94 = arith.constant 0 : index
    %69 = vector.load %arg2[%c7, %c0_93, %c0_94] : memref<9x4x8xbf16, #tpu.memory_space<vmem>>, vector<1x4x8xbf16>
    %70 = vector.shape_cast %69 : vector<1x4x8xbf16> to vector<4x8xbf16>
    %cst_95 = arith.constant dense<0.000000e+00> : vector<256x8xf32>
    %71 = tpu.matmul %67, %70, %cst_95 {dimension_numbers = #tpu.dot_dimension_numbers<[1], [0], [0], [1], [0, 0, 1, 1], [], []>} : vector<256x4xbf16>, vector<4x8xbf16>, vector<256x8xf32> -> vector<256x8xf32>
    %72 = arith.addf %68, %71 : vector<256x8xf32>
    %c0_96 = arith.constant 0 : index
    %c0_97 = arith.constant 0 : index
    %73 = vector.load %arg6[%c0_96, %c0_97] : memref<256x8xf32, #tpu.memory_space<vmem>>, vector<256x8xf32>
    tpu.vector_store %arg6[%c0_96, %c0_97], %72 {strides = array<i32>} : memref<256x8xf32, #tpu.memory_space<vmem>>, vector<256x8xf32>,
    %c0_98 = arith.constant 0 : index
    %c0_99 = arith.constant 0 : index
    %c2_100 = arith.constant 2 : index
    %c2_101 = arith.constant 2 : index
    %c0_102 = arith.constant 0 : index
    %74 = vector.load %arg1[%c0_98, %c0_99, %c2_100, %c2_101, %c0_102] : memref<1x1x18x18x4xbf16, #tpu.memory_space<vmem>>, vector<1x1x16x16x4xbf16>
    %75 = vector.shape_cast %74 : vector<1x1x16x16x4xbf16> to vector<16x16x4xbf16>
    %76 = vector.shape_cast %75 : vector<16x16x4xbf16> to vector<256x4xbf16>
    %c0_103 = arith.constant 0 : index
    %c0_104 = arith.constant 0 : index
    %77 = vector.load %arg6[%c0_103, %c0_104] : memref<256x8xf32, #tpu.memory_space<vmem>>, vector<256x8xf32>
    %c8 = arith.constant 8 : index
    %c0_105 = arith.constant 0 : index
    %c0_106 = arith.constant 0 : index
    %78 = vector.load %arg2[%c8, %c0_105, %c0_106] : memref<9x4x8xbf16, #tpu.memory_space<vmem>>, vector<1x4x8xbf16>
    %79 = vector.shape_cast %78 : vector<1x4x8xbf16> to vector<4x8xbf16>
    %cst_107 = arith.constant dense<0.000000e+00> : vector<256x8xf32>
    %80 = tpu.matmul %76, %79, %cst_107 {dimension_numbers = #tpu.dot_dimension_numbers<[1], [0], [0], [1], [0, 0, 1, 1], [], []>} : vector<256x4xbf16>, vector<4x8xbf16>, vector<256x8xf32> -> vector<256x8xf32>
    %81 = arith.addf %77, %80 : vector<256x8xf32>
    %c0_108 = arith.constant 0 : index
    %c0_109 = arith.constant 0 : index
    %82 = vector.load %arg6[%c0_108, %c0_109] : memref<256x8xf32, #tpu.memory_space<vmem>>, vector<256x8xf32>
    tpu.vector_store %arg6[%c0_108, %c0_109], %81 {strides = array<i32>} : memref<256x8xf32, #tpu.memory_space<vmem>>, vector<256x8xf32>,
    %c0_110 = arith.constant 0 : index
    %c0_111 = arith.constant 0 : index
    %83 = vector.load %arg6[%c0_110, %c0_111] : memref<256x8xf32, #tpu.memory_space<vmem>>, vector<256x8xf32>
    %c0_112 = arith.constant 0 : index
    %c0_113 = arith.constant 0 : index
    %84 = vector.load %arg3[%c0_112, %c0_113] : memref<1x8xf32, #tpu.memory_space<vmem>>, vector<1x8xf32>
    %85 = vector.shape_cast %84 : vector<1x8xf32> to vector<8xf32>
    %86 = vector.shape_cast %85 : vector<8xf32> to vector<1x8xf32>
    %87 = vector.broadcast %86 : vector<1x8xf32> to vector<256x8xf32>
    %88 = arith.mulf %83, %87 : vector<256x8xf32>
    %c0_114 = arith.constant 0 : index
    %c0_115 = arith.constant 0 : index
    %89 = vector.load %arg4[%c0_114, %c0_115] : memref<1x8xf32, #tpu.memory_space<vmem>>, vector<1x8xf32>
    %90 = vector.shape_cast %89 : vector<1x8xf32> to vector<8xf32>
    %91 = vector.shape_cast %90 : vector<8xf32> to vector<1x8xf32>
    %92 = vector.broadcast %91 : vector<1x8xf32> to vector<256x8xf32>
    %93 = arith.addf %88, %92 : vector<256x8xf32>
    %cst_116 = arith.constant 0.000000e+00 : f32
    %94 = vector.broadcast %cst_116 : f32 to vector<256x8xf32>
    %95 = arith.maximumf %93, %94 : vector<256x8xf32>
    %c0_117 = arith.constant 0 : index
    %c0_118 = arith.constant 0 : index
    %c0_119 = arith.constant 0 : index
    %96 = vector.load %arg5[%c0_117, %c0_118, %c0_119] : memref<1x256x8xf32, #tpu.memory_space<vmem>>, vector<1x256x8xf32>
    %97 = vector.shape_cast %96 : vector<1x256x8xf32> to vector<256x8xf32>
    %98 = vector.shape_cast %95 : vector<256x8xf32> to vector<1x256x8xf32>
    tpu.vector_store %arg5[%c0_117, %c0_118, %c0_119], %98 {strides = array<i32>} : memref<1x256x8xf32, #tpu.memory_space<vmem>>, vector<1x256x8xf32>,
    return
  }
  func.func @transform_0(%arg0: i32) -> (i32, i32, i32, i32, i32) {
    %c0_i32 = arith.constant 0 : i32
    %c0_i32_0 = arith.constant 0 : i32
    %c0_i32_1 = arith.constant 0 : i32
    %c0_i32_2 = arith.constant 0 : i32
    %c0_i32_3 = arith.constant 0 : i32
    return %arg0, %c0_i32, %c0_i32_0, %c0_i32_1, %c0_i32_2 : i32, i32, i32, i32, i32
  }
  func.func @transform_1(%arg0: i32) -> (i32, i32, i32) {
    %c0_i32 = arith.constant 0 : i32
    %c0_i32_0 = arith.constant 0 : i32
    %c0_i32_1 = arith.constant 0 : i32
    %c0_i32_2 = arith.constant 0 : i32
    return %c0_i32, %c0_i32_0, %c0_i32_1 : i32, i32, i32
  }
  func.func @transform_2(%arg0: i32) -> (i32, i32) {
    %c0_i32 = arith.constant 0 : i32
    %c0_i32_0 = arith.constant 0 : i32
    %c0_i32_1 = arith.constant 0 : i32
    return %c0_i32, %c0_i32_0 : i32, i32
  }
  func.func @transform_3(%arg0: i32) -> (i32, i32) {
    %c0_i32 = arith.constant 0 : i32
    %c0_i32_0 = arith.constant 0 : i32
    %c0_i32_1 = arith.constant 0 : i32
    return %c0_i32, %c0_i32_0 : i32, i32
  }
  func.func @transform_4(%arg0: i32) -> (i32, i32, i32) {
    %c0_i32 = arith.constant 0 : i32
    %c0_i32_0 = arith.constant 0 : i32
    %c0_i32_1 = arith.constant 0 : i32
    return %arg0, %c0_i32, %c0_i32_0 : i32, i32, i32
  }
}

</mosaic_0001>

<llo_original>
// kernel: tpu_custom_call.1
$region0: #{tpu_custom_call.1}
  #allocation0 [shape = 'u32[]', space=smem, size = 0x4, offset = 0x4, fixed_abs, tag = 'smem constant byte address 0x4 - core index']
  #allocation1 [shape = 'u32[144,128]{1,0:T(1,128)}', space=vmem, size = 0x12000, scoped, tag = 'internal scratch']
  #allocation2 [shape = 'f32[256,8]{1,0:T(8,128)}', space=vmem, size = 0x20000, scoped, tag = 'scratch operand']
  %s0 = inlined_call_operand.vmem [shape: bf16[2,1,18,18,4], index: 0, kind: input, shape index: {}]
  %s1 = inlined_call_operand.vmem [shape: bf16[9,4,8], index: 1, kind: input, shape index: {}]
  %s2 = inlined_call_operand.vmem [shape: f32[1,8], index: 2, kind: input, shape index: {}]
  %s3 = inlined_call_operand.vmem [shape: f32[1,8], index: 3, kind: input, shape index: {}]
  %s4 = inlined_call_operand.vmem [shape: f32[2,256,8], index: 4, kind: output, shape index: {}]
  %s5 = sld [smem:[#allocation0]]
  $region49: #{tpu_custom_call.1} parent=0
    _
  %s7 = ssub.s32 1, %s5
  %s8 = scalar_select 0, %s7, %s5
  loop: start=0, step=1, limit=4
  $region2: #{tpu_custom_call.1} parent=0 // loop_pre_header
    _
  $region3: #{tpu_custom_call.1} parent=0 // loop_header
    %s10 = sphi 0, %s14
    %p11 = scmp.ge.s32.totalorder %s10, 4
    %s20 = sphi 0, %s22
    %s23 = sphi 0, %s20
    %s24 = sphi 0, %s23
    %s40 = sphi 0, %s24
    %s44 = sphi 0, %s44
    %s46 = sphi 0, %s44
    %s47 = sphi 0, %s46
    %s61 = sphi 0, %s47
    %s65 = sphi 0, %s65
    %s67 = sphi 0, %s65
    %s68 = sphi 0, %s67
    %s82 = sphi 0, %s68
    %s86 = sphi 0, %s86
    %s88 = sphi 0, %s86
    %s89 = sphi 0, %s88
    %s103 = sphi 0, %s89
    %s109 = sphi 0, %s111
    %s112 = sphi 0, %s109
    %s113 = sphi 0, %s112
    %s129 = sphi 0, %s113
  $region4: #{tpu_custom_call.1} parent=0 // loop_header_branch
    %13 = sbr.rel (%p11) target = $region8
  $region5: #{tpu_custom_call.1} parent=0 // loop_body
    %s15 = ssub.s32 %s10, 1
    %s16 = ssub.s32 %s10, 2
    %s17 = sadd.s32 %s10, 1
    %s18 = ssub.s32 %s10, %s17
    %p19 = scmp.eq.s32.totalorder %s18, 0
    %s21 = sadd.s32 %s20, 1
    %s22 = scalar_select %p19, %s20, %s21
    %p25 = pneg %p19
    %p26 = scmp.eq.s32.totalorder %s10, 1
    %p27 = por %p25, %p26
    %p28 = scmp.ne.s32.totalorder %s20, %s23
    %p29 = scmp.eq.s32.totalorder %s10, 0
    %p30 = por %p28, %p29
    %p31 = scmp.ne.s32.totalorder %s20, %s23
    %p32 = scmp.eq.s32.totalorder %s15, 1
    %p33 = por %p31, %p32
    %p34 = scmp.ne.s32.totalorder %s23, %s24
    %p35 = scmp.eq.s32.totalorder %s15, 0
    %p36 = por %p34, %p35
    %p37 = scmp.ne.s32.totalorder %s23, %s24
    %p38 = scmp.eq.s32.totalorder %s16, 1
    %p39 = por %p37, %p38
    %p41 = scmp.ne.s32.totalorder %s24, %s40
    %p42 = scmp.eq.s32.totalorder %s16, 0
    %p43 = por %p41, %p42
    %s45 = sadd.s32 %s44, 1
    %p48 = scmp.eq.s32.totalorder %s10, 1
    %p49 = scmp.ne.s32.totalorder %s44, %s46
    %p50 = scmp.eq.s32.totalorder %s10, 0
    %p51 = por %p49, %p50
    %p52 = scmp.ne.s32.totalorder %s44, %s46
    %p53 = scmp.eq.s32.totalorder %s15, 1
    %p54 = por %p52, %p53
    %p55 = scmp.ne.s32.totalorder %s46, %s47
    %p56 = scmp.eq.s32.totalorder %s15, 0
    %p57 = por %p55, %p56
    %p58 = scmp.ne.s32.totalorder %s46, %s47
    %p59 = scmp.eq.s32.totalorder %s16, 1
    %p60 = por %p58, %p59
    %p62 = scmp.ne.s32.totalorder %s47, %s61
    %p63 = scmp.eq.s32.totalorder %s16, 0
    %p64 = por %p62, %p63
    %s66 = sadd.s32 %s65, 1
    %p69 = scmp.eq.s32.totalorder %s10, 1
    %p70 = scmp.ne.s32.totalorder %s65, %s67
    %p71 = scmp.eq.s32.totalorder %s10, 0
    %p72 = por %p70, %p71
    %p73 = scmp.ne.s32.totalorder %s65, %s67
    %p74 = scmp.eq.s32.totalorder %s15, 1
    %p75 = por %p73, %p74
    %p76 = scmp.ne.s32.totalorder %s67, %s68
    %p77 = scmp.eq.s32.totalorder %s15, 0
    %p78 = por %p76, %p77
    %p79 = scmp.ne.s32.totalorder %s67, %s68
    %p80 = scmp.eq.s32.totalorder %s16, 1
    %p81 = por %p79, %p80
    %p83 = scmp.ne.s32.totalorder %s68, %s82
    %p84 = scmp.eq.s32.totalorder %s16, 0
    %p85 = por %p83, %p84
    %s87 = sadd.s32 %s86, 1
    %p90 = scmp.eq.s32.totalorder %s10, 1
    %p91 = scmp.ne.s32.totalorder %s86, %s88
    %p92 = scmp.eq.s32.totalorder %s10, 0
    %p93 = por %p91, %p92
    %p94 = scmp.ne.s32.totalorder %s86, %s88
    %p95 = scmp.eq.s32.totalorder %s15, 1
    %p96 = por %p94, %p95
    %p97 = scmp.ne.s32.totalorder %s88, %s89
    %p98 = scmp.eq.s32.totalorder %s15, 0
    %p99 = por %p97, %p98
    %p100 = scmp.ne.s32.totalorder %s88, %s89
    %p101 = scmp.eq.s32.totalorder %s16, 1
    %p102 = por %p100, %p101
    %p104 = scmp.ne.s32.totalorder %s89, %s103
    %p105 = scmp.eq.s32.totalorder %s16, 0
    %p106 = por %p104, %p105
    %s107 = ssub.s32 %s10, %s17
    %p108 = scmp.eq.s32.totalorder %s107, 0
    %s110 = sadd.s32 %s109, 1
    %s111 = scalar_select %p108, %s109, %s110
    %p114 = pneg %p108
    %p115 = scmp.eq.s32.totalorder %s10, 1
    %p116 = por %p114, %p115
    %p117 = scmp.ne.s32.totalorder %s109, %s112
    %p118 = scmp.eq.s32.totalorder %s10, 0
    %p119 = por %p117, %p118
    %p120 = scmp.ne.s32.totalorder %s109, %s112
    %p121 = scmp.eq.s32.totalorder %s15, 1
    %p122 = por %p120, %p121
    %p123 = scmp.ne.s32.totalorder %s112, %s113
    %p124 = scmp.eq.s32.totalorder %s15, 0
    %p125 = por %p123, %p124
    %p126 = scmp.ne.s32.totalorder %s112, %s113
    %p127 = scmp.eq.s32.totalorder %s16, 1
    %p128 = por %p126, %p127
    %p130 = scmp.ne.s32.totalorder %s113, %s129
    %p131 = scmp.eq.s32.totalorder %s16, 0
    %p132 = por %p130, %p131
    %p133 = scmp.le.s32.totalorder 1, %s10
    %p134 = scmp.lt.s32.totalorder %s10, 3
    %p135 = pnand %p133, %p134
    %p136 = pneg %p135
    // Predicated region
    $region9: #{tpu_custom_call.1} parent=5 // pred_check
      _
    $region10: #{tpu_custom_call.1} parent=5 // pred_check_branch
      %138 = sbr.rel (%p135) target = $region12
    $region11: #{tpu_custom_call.1} parent=5 // pred_region
      %s139 = ssub.s32 %s10, 1
      // Predicated region
      $region13: #{tpu_custom_call.1} parent=11 // pred_check
        %p140 = pneg %p57
      $region14: #{tpu_custom_call.1} parent=11 // pred_check_branch
        %142 = sbr.rel (%p140) target = $region16
      $region15: #{tpu_custom_call.1} parent=11 // pred_region
        _
      $region16: #{tpu_custom_call.1} parent=11 // pred_fallthru
        _
      // Predicated region
      $region17: #{tpu_custom_call.1} parent=11 // pred_check
        %p143 = pneg %p78
      $region18: #{tpu_custom_call.1} parent=11 // pred_check_branch
        %145 = sbr.rel (%p143) target = $region20
      $region19: #{tpu_custom_call.1} parent=11 // pred_region
        _
      $region20: #{tpu_custom_call.1} parent=11 // pred_fallthru
        _
      // Predicated region
      $region21: #{tpu_custom_call.1} parent=11 // pred_check
        %p146 = pneg %p99
      $region22: #{tpu_custom_call.1} parent=11 // pred_check_branch
        %148 = sbr.rel (%p146) target = $region24
      $region23: #{tpu_custom_call.1} parent=11 // pred_region
        _
      $region24: #{tpu_custom_call.1} parent=11 // pred_fallthru
        _
    $region12: #{tpu_custom_call.1} parent=5 // pred_fallthru
      _
    %p149 = scmp.lt.s32.totalorder %s10, 2
    // Predicated region
    $region25: #{tpu_custom_call.1} parent=5 // pred_check
      %p150 = pneg %p149
    $region26: #{tpu_custom_call.1} parent=5 // pred_check_branch
      %152 = sbr.rel (%p150) target = $region28
    $region27: #{tpu_custom_call.1} parent=5 // pred_region
      // Predicated region
      $region29: #{tpu_custom_call.1} parent=27 // pred_check
        %p153 = pneg %p30
      $region30: #{tpu_custom_call.1} parent=27 // pred_check_branch
        %155 = sbr.rel (%p153) target = $region32
      $region31: #{tpu_custom_call.1} parent=27 // pred_region
        %p156 = scmp.lt.s32.totalorder %s10, 1
        %s157 = scalar_select %p156, %s10, 1
        %s158 = smul.addr %s157, 54
        %s159 = smul.addr %s158, 4
        %s160 = scalar_lea.vmem %s0, %s159
      $region32: #{tpu_custom_call.1} parent=27 // pred_fallthru
        _
    $region28: #{tpu_custom_call.1} parent=5 // pred_fallthru
      _
    %p161 = scmp.le.s32.totalorder 1, %s10
    %p162 = scmp.lt.s32.totalorder %s10, 3
    %p163 = pnand %p161, %p162
    %p164 = pneg %p163
    // Predicated region
    $region33: #{tpu_custom_call.1} parent=5 // pred_check
      _
    $region34: #{tpu_custom_call.1} parent=5 // pred_check_branch
      %166 = sbr.rel (%p163) target = $region36
    $region35: #{tpu_custom_call.1} parent=5 // pred_region
      %s167 = ssub.s32 %s10, 1
      %p168 = scmp.lt.s32.totalorder %s15, 1
      %s169 = scalar_select %p168, %s15, 1
      %s170 = smul.addr %s169, 54
      %s171 = smul.addr %s170, 4
      %s172 = scalar_lea.vmem %s0, %s171
      %p173 = pneg %p36
      %p174 = pneg %p33
      %p175 = pneg %p57
      %p176 = pneg %p54
      %p177 = pneg %p78
      %p178 = pneg %p75
      %p179 = pneg %p99
      %p180 = pneg %p96
      %p181 = pneg %p125
      %p182 = pneg %p122
      %p183 = scmp.lt.s32.totalorder %s15, 1
      %s184 = scalar_select %p183, %s15, 1
      %s185 = smul.addr %s184, 32
      %s186 = smul.addr %s185, 8
      %s187 = scalar_lea.vmem %s4, %s186
      %p188 = scmp.lt.s32.totalorder %s15, 1
      %s189 = scalar_select %p188, %s15, 1
      %s190 = smul.addr %s189, 54
      %s191 = smul.addr %s190, 4
      %s192 = scalar_lea.vmem %s0, %s191
      %p193 = scmp.lt.s32.totalorder %s15, 1
      %s194 = scalar_select %p193, %s15, 1
      %s195 = smul.addr %s194, 32
      %s196 = smul.addr %s195, 8
      %s197 = scalar_lea.vmem %s4, %s196
      %vm199 = vcmask 64512
      %200 = vst.msk [vmem:[#allocation2] sm:$0xff] %vm199, 0.0
      %201 = vst.msk [vmem:[#allocation2 + $0x8] sm:$0xff] %vm199, 0.0
      %202 = vst.msk [vmem:[#allocation2 + $0x10] sm:$0xff] %vm199, 0.0
      %203 = vst.msk [vmem:[#allocation2 + $0x18] sm:$0xff] %vm199, 0.0
      %204 = vst.msk [vmem:[#allocation2 + $0x20] sm:$0xff] %vm199, 0.0
      %205 = vst.msk [vmem:[#allocation2 + $0x28] sm:$0xff] %vm199, 0.0
      %206 = vst.msk [vmem:[#allocation2 + $0x30] sm:$0xff] %vm199, 0.0
      %207 = vst.msk [vmem:[#allocation2 + $0x38] sm:$0xff] %vm199, 0.0
      %208 = vst.msk [vmem:[#allocation2 + $0x40] sm:$0xff] %vm199, 0.0
      %209 = vst.msk [vmem:[#allocation2 + $0x48] sm:$0xff] %vm199, 0.0
      %210 = vst.msk [vmem:[#allocation2 + $0x50] sm:$0xff] %vm199, 0.0
      %211 = vst.msk [vmem:[#allocation2 + $0x58] sm:$0xff] %vm199, 0.0
      %212 = vst.msk [vmem:[#allocation2 + $0x60] sm:$0xff] %vm199, 0.0
      %213 = vst.msk [vmem:[#allocation2 + $0x68] sm:$0xff] %vm199, 0.0
      %214 = vst.msk [vmem:[#allocation2 + $0x70] sm:$0xff] %vm199, 0.0
      %215 = vst.msk [vmem:[#allocation2 + $0x78] sm:$0xff] %vm199, 0.0
      %216 = vst.msk [vmem:[#allocation2 + $0x80] sm:$0xff] %vm199, 0.0
      %217 = vst.msk [vmem:[#allocation2 + $0x88] sm:$0xff] %vm199, 0.0
      %218 = vst.msk [vmem:[#allocation2 + $0x90] sm:$0xff] %vm199, 0.0
      %219 = vst.msk [vmem:[#allocation2 + $0x98] sm:$0xff] %vm199, 0.0
      %220 = vst.msk [vmem:[#allocation2 + $0xa0] sm:$0xff] %vm199, 0.0
      %221 = vst.msk [vmem:[#allocation2 + $0xa8] sm:$0xff] %vm199, 0.0
      %222 = vst.msk [vmem:[#allocation2 + $0xb0] sm:$0xff] %vm199, 0.0
      %223 = vst.msk [vmem:[#allocation2 + $0xb8] sm:$0xff] %vm199, 0.0
      %224 = vst.msk [vmem:[#allocation2 + $0xc0] sm:$0xff] %vm199, 0.0
      %225 = vst.msk [vmem:[#allocation2 + $0xc8] sm:$0xff] %vm199, 0.0
      %226 = vst.msk [vmem:[#allocation2 + $0xd0] sm:$0xff] %vm199, 0.0
      %227 = vst.msk [vmem:[#allocation2 + $0xd8] sm:$0xff] %vm199, 0.0
      %228 = vst.msk [vmem:[#allocation2 + $0xe0] sm:$0xff] %vm199, 0.0
      %229 = vst.msk [vmem:[#allocation2 + $0xe8] sm:$0xff] %vm199, 0.0
      %230 = vst.msk [vmem:[#allocation2 + $0xf0] sm:$0xff] %vm199, 0.0
      %231 = vst.msk [vmem:[#allocation2 + $0xf8] sm:$0xff] %vm199, 0.0
      %v232 = vld [vmem:[%s192] sm:$0xf]
      %v233 = vld [vmem:[%s192 + $0x4] sm:$0xf]
      %v234 = vld [vmem:[%s192 + $0xc] sm:$0xf]
      %v235 = vld [vmem:[%s192 + $0x10] sm:$0xf]
      %v236 = vld [vmem:[%s192 + $0x18] sm:$0xf]
      %v237 = vld [vmem:[%s192 + $0x1c] sm:$0xf]
      %v238 = vld [vmem:[%s192 + $0x24] sm:$0xf]
      %v239 = vld [vmem:[%s192 + $0x28] sm:$0xf]
      %v240 = vld [vmem:[%s192 + $0x30] sm:$0xf]
      %v241 = vld [vmem:[%s192 + $0x34] sm:$0xf]
      %v242 = vld [vmem:[%s192 + $0x3c] sm:$0xf]
      %v243 = vld [vmem:[%s192 + $0x40] sm:$0xf]
      %v244 = vld [vmem:[%s192 + $0x48] sm:$0xf]
      %v245 = vld [vmem:[%s192 + $0x4c] sm:$0xf]
      %v246 = vld [vmem:[%s192 + $0x54] sm:$0xf]
      %v247 = vld [vmem:[%s192 + $0x58] sm:$0xf]
      %v248 = vld [vmem:[%s192 + $0x60] sm:$0xf]
      %v249 = vld [vmem:[%s192 + $0x64] sm:$0xf]
      %v250 = vld [vmem:[%s192 + $0x6c] sm:$0xf]
      %v251 = vld [vmem:[%s192 + $0x70] sm:$0xf]
      %v252 = vld [vmem:[%s192 + $0x78] sm:$0xf]
      %v253 = vld [vmem:[%s192 + $0x7c] sm:$0xf]
      %v254 = vld [vmem:[%s192 + $0x84] sm:$0xf]
      %v255 = vld [vmem:[%s192 + $0x88] sm:$0xf]
      %v256 = vld [vmem:[%s192 + $0x90] sm:$0xf]
      %v257 = vld [vmem:[%s192 + $0x94] sm:$0xf]
      %v258 = vld [vmem:[%s192 + $0x9c] sm:$0xf]
      %v259 = vld [vmem:[%s192 + $0xa0] sm:$0xf]
      %v260 = vld [vmem:[%s192 + $0xa8] sm:$0xf]
      %v261 = vld [vmem:[%s192 + $0xac] sm:$0xf]
      %v262 = vld [vmem:[%s192 + $0xb4] sm:$0xf]
      %v263 = vld [vmem:[%s192 + $0xb8] sm:$0xf]
      %v264 = vld [vmem:[#allocation2] sm:$0xff]
      %v265 = vld [vmem:[#allocation2 + $0x8] sm:$0xff]
      %v266 = vld [vmem:[#allocation2 + $0x10] sm:$0xff]
      %v267 = vld [vmem:[#allocation2 + $0x18] sm:$0xff]
      %v268 = vld [vmem:[#allocation2 + $0x20] sm:$0xff]
      %v269 = vld [vmem:[#allocation2 + $0x28] sm:$0xff]
      %v270 = vld [vmem:[#allocation2 + $0x30] sm:$0xff]
      %v271 = vld [vmem:[#allocation2 + $0x38] sm:$0xff]
      %v272 = vld [vmem:[#allocation2 + $0x40] sm:$0xff]
      %v273 = vld [vmem:[#allocation2 + $0x48] sm:$0xff]
      %v274 = vld [vmem:[#allocation2 + $0x50] sm:$0xff]
      %v275 = vld [vmem:[#allocation2 + $0x58] sm:$0xff]
      %v276 = vld [vmem:[#allocation2 + $0x60] sm:$0xff]
      %v277 = vld [vmem:[#allocation2 + $0x68] sm:$0xff]
      %v278 = vld [vmem:[#allocation2 + $0x70] sm:$0xff]
      %v279 = vld [vmem:[#allocation2 + $0x78] sm:$0xff]
      %v280 = vld [vmem:[#allocation2 + $0x80] sm:$0xff]
      %v281 = vld [vmem:[#allocation2 + $0x88] sm:$0xff]
      %v282 = vld [vmem:[#allocation2 + $0x90] sm:$0xff]
      %v283 = vld [vmem:[#allocation2 + $0x98] sm:$0xff]
      %v284 = vld [vmem:[#allocation2 + $0xa0] sm:$0xff]
      %v285 = vld [vmem:[#allocation2 + $0xa8] sm:$0xff]
      %v286 = vld [vmem:[#allocation2 + $0xb0] sm:$0xff]
      %v287 = vld [vmem:[#allocation2 + $0xb8] sm:$0xff]
      %v288 = vld [vmem:[#allocation2 + $0xc0] sm:$0xff]
      %v289 = vld [vmem:[#allocation2 + $0xc8] sm:$0xff]
      %v290 = vld [vmem:[#allocation2 + $0xd0] sm:$0xff]
      %v291 = vld [vmem:[#allocation2 + $0xd8] sm:$0xff]
      %v292 = vld [vmem:[#allocation2 + $0xe0] sm:$0xff]
      %v293 = vld [vmem:[#allocation2 + $0xe8] sm:$0xff]
      %v294 = vld [vmem:[#allocation2 + $0xf0] sm:$0xff]
      %v295 = vld [vmem:[#allocation2 + $0xf8] sm:$0xff]
      %v296 = vld [vmem:[%s1] sm:$0x3]
      %v329 = vunpack.c.l.b16 %v232
      %v330 = vunpack.c.l.b16 %v233
      %v331 = vunpack.c.l.b16 %v234
      %v332 = vunpack.c.l.b16 %v235
      %v333 = vunpack.c.l.b16 %v236
      %v334 = vunpack.c.l.b16 %v237
      %v335 = vunpack.c.l.b16 %v238
      %v336 = vunpack.c.l.b16 %v239
      %v337 = vunpack.c.l.b16 %v240
      %v338 = vunpack.c.l.b16 %v241
      %v339 = vunpack.c.l.b16 %v242
      %v340 = vunpack.c.l.b16 %v243
      %v341 = vunpack.c.l.b16 %v244
      %v342 = vunpack.c.l.b16 %v245
      %v343 = vunpack.c.l.b16 %v246
      %v344 = vunpack.c.l.b16 %v247
      %v345 = vunpack.c.l.b16 %v248
      %v346 = vunpack.c.l.b16 %v249
      %v347 = vunpack.c.l.b16 %v250
      %v348 = vunpack.c.l.b16 %v251
      %v349 = vunpack.c.l.b16 %v252
      %v350 = vunpack.c.l.b16 %v253
      %v351 = vunpack.c.l.b16 %v254
      %v352 = vunpack.c.l.b16 %v255
      %v353 = vunpack.c.l.b16 %v256
      %v354 = vunpack.c.l.b16 %v257
      %v355 = vunpack.c.l.b16 %v258
      %v356 = vunpack.c.l.b16 %v259
      %v357 = vunpack.c.l.b16 %v260
      %v358 = vunpack.c.l.b16 %v261
      %v359 = vunpack.c.l.b16 %v262
      %v360 = vunpack.c.l.b16 %v263
      %v361 = vpack.c.b16 %v330, %v329
      %v362 = vpack.c.b16 %v332, %v331
      %v363 = vpack.c.b16 %v334, %v333
      %v364 = vpack.c.b16 %v336, %v335
      %v365 = vpack.c.b16 %v338, %v337
      %v366 = vpack.c.b16 %v340, %v339
      %v367 = vpack.c.b16 %v342, %v341
      %v368 = vpack.c.b16 %v344, %v343
      %v369 = vpack.c.b16 %v346, %v345
      %v370 = vpack.c.b16 %v348, %v347
      %v371 = vpack.c.b16 %v350, %v349
      %v372 = vpack.c.b16 %v352, %v351
      %v373 = vpack.c.b16 %v354, %v353
      %v374 = vpack.c.b16 %v356, %v355
      %v375 = vpack.c.b16 %v358, %v357
      %v376 = vpack.c.b16 %v360, %v359
      %vm377 = vcmask 31744
      %v379 = vsel %vm377, %v361, 0
      %v382 = vsel %vm377, %v362, 0
      %v385 = vsel %vm377, %v363, 0
      %v388 = vsel %vm377, %v364, 0
      %v391 = vsel %vm377, %v365, 0
      %v394 = vsel %vm377, %v366, 0
      %v397 = vsel %vm377, %v367, 0
      %v400 = vsel %vm377, %v368, 0
      %v403 = vsel %vm377, %v369, 0
      %v406 = vsel %vm377, %v370, 0
      %v409 = vsel %vm377, %v371, 0
      %v412 = vsel %vm377, %v372, 0
      %v415 = vsel %vm377, %v373, 0
      %v418 = vsel %vm377, %v374, 0
      %v421 = vsel %vm377, %v375, 0
      %v424 = vsel %vm377, %v376, 0
      %vm426 = vcmask 1041408
      %v428 = vsel %vm426, %v296, 0
      %430 = vmatprep.subr.bf16.mxu0 0
      %431 = vmatpush1.bf16.msra.mxu0 0
      %432 = vmatprep.subr.bf16.mxu0 0
      %433 = vmatpush1.bf16.msra.mxu0 0
      %434 = vmatprep.subr.bf16.mxu0 0
      %435 = vmatpush1.bf16.msra.mxu0 0
      %436 = vmatprep.subr.bf16.mxu0 0
      %437 = vmatpush1.bf16.msra.mxu0 0
      %438 = vmatprep.subr.bf16.mxu0 0
      %439 = vmatpush1.bf16.msra.mxu0 0
      %440 = vmatprep.subr.bf16.mxu0 0
      %441 = vmatpush1.bf16.msra.mxu0 0
      %442 = vmatprep.subr.bf16.mxu0 0
      %443 = vmatpush1.bf16.msra.mxu0 0
      %444 = vmatprep.subr.bf16.mxu0 0
      %445 = vmatpush1.bf16.msra.mxu0 %v428
      %446 = vmatprep.subr.bf16.mxu0 0
      %447 = vmatpush2.bf16.msra.mxu0 0
      %448 = vmatprep.subr.bf16.mxu0 0
      %449 = vmatpush2.bf16.msra.mxu0 0
      %450 = vmatprep.subr.bf16.mxu0 0
      %451 = vmatpush2.bf16.msra.mxu0 0
      %452 = vmatprep.subr.bf16.mxu0 0
      %453 = vmatpush2.bf16.msra.mxu0 0
      %454 = vmatprep.subr.bf16.mxu0 0
      %455 = vmatpush2.bf16.msra.mxu0 0
      %456 = vmatprep.subr.bf16.mxu0 0
      %457 = vmatpush2.bf16.msra.mxu0 0
      %458 = vmatprep.subr.bf16.mxu0 0
      %459 = vmatpush2.bf16.msra.mxu0 0
      %460 = vmatprep.subr.bf16.mxu0 0
      %461 = vmatpush2.bf16.msra.mxu0 0
      %462 = vmatprep.mubr.bf16.mxu0 0
      %463 = vmatmul.mubr.bf16.gmra.mxu0 %v379
      %v464 = vpop.f32.mrf.mxu0
      %v465 = vadd.f32 0.0, %v464
      %v466 = vpop.f32.mrf.mxu0
      %v467 = vpop.f32.mrf.mxu0
      %v468 = vadd.f32 0.0, %v467
      %v469 = vpop.f32.mrf.mxu0
      %470 = vmatprep.mubr.bf16.mxu0 0
      %471 = vmatmul.mubr.bf16.gmra.mxu0 %v382
      %v472 = vpop.f32.mrf.mxu0
      %v473 = vadd.f32 0.0, %v472
      %v474 = vpop.f32.mrf.mxu0
      %v475 = vpop.f32.mrf.mxu0
      %v476 = vadd.f32 0.0, %v475
      %v477 = vpop.f32.mrf.mxu0
      %478 = vmatprep.mubr.bf16.mxu0 0
      %479 = vmatmul.mubr.bf16.gmra.mxu0 %v385
      %v480 = vpop.f32.mrf.mxu0
      %v481 = vadd.f32 0.0, %v480
      %v482 = vpop.f32.mrf.mxu0
      %v483 = vpop.f32.mrf.mxu0
      %v484 = vadd.f32 0.0, %v483
      %v485 = vpop.f32.mrf.mxu0
      %486 = vmatprep.mubr.bf16.mxu0 0
      %487 = vmatmul.mubr.bf16.gmra.mxu0 %v388
      %v488 = vpop.f32.mrf.mxu0
      %v489 = vadd.f32 0.0, %v488
      %v490 = vpop.f32.mrf.mxu0
      %v491 = vpop.f32.mrf.mxu0
      %v492 = vadd.f32 0.0, %v491
      %v493 = vpop.f32.mrf.mxu0
      %494 = vmatprep.mubr.bf16.mxu0 0
      %495 = vmatmul.mubr.bf16.gmra.mxu0 %v391
      %v496 = vpop.f32.mrf.mxu0
      %v497 = vadd.f32 0.0, %v496
      %v498 = vpop.f32.mrf.mxu0
      %v499 = vpop.f32.mrf.mxu0
      %v500 = vadd.f32 0.0, %v499
      %v501 = vpop.f32.mrf.mxu0
      %502 = vmatprep.mubr.bf16.mxu0 0
      %503 = vmatmul.mubr.bf16.gmra.mxu0 %v394
      %v504 = vpop.f32.mrf.mxu0
      %v505 = vadd.f32 0.0, %v504
      %v506 = vpop.f32.mrf.mxu0
      %v507 = vpop.f32.mrf.mxu0
      %v508 = vadd.f32 0.0, %v507
      %v509 = vpop.f32.mrf.mxu0
      %510 = vmatprep.mubr.bf16.mxu0 0
      %511 = vmatmul.mubr.bf16.gmra.mxu0 %v397
      %v512 = vpop.f32.mrf.mxu0
      %v513 = vadd.f32 0.0, %v512
      %v514 = vpop.f32.mrf.mxu0
      %v515 = vpop.f32.mrf.mxu0
      %v516 = vadd.f32 0.0, %v515
      %v517 = vpop.f32.mrf.mxu0
      %518 = vmatprep.mubr.bf16.mxu0 0
      %519 = vmatmul.mubr.bf16.gmra.mxu0 %v400
      %v520 = vpop.f32.mrf.mxu0
      %v521 = vadd.f32 0.0, %v520
      %v522 = vpop.f32.mrf.mxu0
      %v523 = vpop.f32.mrf.mxu0
      %v524 = vadd.f32 0.0, %v523
      %v525 = vpop.f32.mrf.mxu0
      %526 = vmatprep.mubr.bf16.mxu0 0
      %527 = vmatmul.mubr.bf16.gmra.mxu0 %v403
      %v528 = vpop.f32.mrf.mxu0
      %v529 = vadd.f32 0.0, %v528
      %v530 = vpop.f32.mrf.mxu0
      %v531 = vpop.f32.mrf.mxu0
      %v532 = vadd.f32 0.0, %v531
      %v533 = vpop.f32.mrf.mxu0
      %534 = vmatprep.mubr.bf16.mxu0 0
      %535 = vmatmul.mubr.bf16.gmra.mxu0 %v406
      %v536 = vpop.f32.mrf.mxu0
      %v537 = vadd.f32 0.0, %v536
      %v538 = vpop.f32.mrf.mxu0
      %v539 = vpop.f32.mrf.mxu0
      %v540 = vadd.f32 0.0, %v539
      %v541 = vpop.f32.mrf.mxu0
      %542 = vmatprep.mubr.bf16.mxu0 0
      %543 = vmatmul.mubr.bf16.gmra.mxu0 %v409
      %v544 = vpop.f32.mrf.mxu0
      %v545 = vadd.f32 0.0, %v544
      %v546 = vpop.f32.mrf.mxu0
      %v547 = vpop.f32.mrf.mxu0
      %v548 = vadd.f32 0.0, %v547
      %v549 = vpop.f32.mrf.mxu0
      %550 = vmatprep.mubr.bf16.mxu0 0
      %551 = vmatmul.mubr.bf16.gmra.mxu0 %v412
      %v552 = vpop.f32.mrf.mxu0
      %v553 = vadd.f32 0.0, %v552
      %v554 = vpop.f32.mrf.mxu0
      %v555 = vpop.f32.mrf.mxu0
      %v556 = vadd.f32 0.0, %v555
      %v557 = vpop.f32.mrf.mxu0
      %558 = vmatprep.mubr.bf16.mxu0 0
      %559 = vmatmul.mubr.bf16.gmra.mxu0 %v415
      %v560 = vpop.f32.mrf.mxu0
      %v561 = vadd.f32 0.0, %v560
      %v562 = vpop.f32.mrf.mxu0
      %v563 = vpop.f32.mrf.mxu0
      %v564 = vadd.f32 0.0, %v563
      %v565 = vpop.f32.mrf.mxu0
      %566 = vmatprep.mubr.bf16.mxu0 0
      %567 = vmatmul.mubr.bf16.gmra.mxu0 %v418
      %v568 = vpop.f32.mrf.mxu0
      %v569 = vadd.f32 0.0, %v568
      %v570 = vpop.f32.mrf.mxu0
      %v571 = vpop.f32.mrf.mxu0
      %v572 = vadd.f32 0.0, %v571
      %v573 = vpop.f32.mrf.mxu0
      %574 = vmatprep.mubr.bf16.mxu0 0
      %575 = vmatmul.mubr.bf16.gmra.mxu0 %v421
      %v576 = vpop.f32.mrf.mxu0
      %v577 = vadd.f32 0.0, %v576
      %v578 = vpop.f32.mrf.mxu0
      %v579 = vpop.f32.mrf.mxu0
      %v580 = vadd.f32 0.0, %v579
      %v581 = vpop.f32.mrf.mxu0
      %582 = vmatprep.mubr.bf16.mxu0 0
      %583 = vmatmul.mubr.bf16.gmra.mxu0 %v424
      %v584 = vpop.f32.mrf.mxu0
      %v585 = vadd.f32 0.0, %v584
      %v586 = vpop.f32.mrf.mxu0
      %v587 = vpop.f32.mrf.mxu0
      %v588 = vadd.f32 0.0, %v587
      %v589 = vpop.f32.mrf.mxu0
      %590 = vdwg.mxu0
      %v591 = vadd.f32 %v264, %v465
      %v592 = vadd.f32 %v265, %v468
      %v593 = vadd.f32 %v266, %v473
      %v594 = vadd.f32 %v267, %v476
      %v595 = vadd.f32 %v268, %v481
      %v596 = vadd.f32 %v269, %v484
      %v597 = vadd.f32 %v270, %v489
      %v598 = vadd.f32 %v271, %v492
      %v599 = vadd.f32 %v272, %v497
      %v600 = vadd.f32 %v273, %v500
      %v601 = vadd.f32 %v274, %v505
      %v602 = vadd.f32 %v275, %v508
      %v603 = vadd.f32 %v276, %v513
      %v604 = vadd.f32 %v277, %v516
      %v605 = vadd.f32 %v278, %v521
      %v606 = vadd.f32 %v279, %v524
      %v607 = vadd.f32 %v280, %v529
      %v608 = vadd.f32 %v281, %v532
      %v609 = vadd.f32 %v282, %v537
      %v610 = vadd.f32 %v283, %v540
      %v611 = vadd.f32 %v284, %v545
      %v612 = vadd.f32 %v285, %v548
      %v613 = vadd.f32 %v286, %v553
      %v614 = vadd.f32 %v287, %v556
      %v615 = vadd.f32 %v288, %v561
      %v616 = vadd.f32 %v289, %v564
      %v617 = vadd.f32 %v290, %v569
      %v618 = vadd.f32 %v291, %v572
      %v619 = vadd.f32 %v292, %v577
      %v620 = vadd.f32 %v293, %v580
      %v621 = vadd.f32 %v294, %v585
      %v622 = vadd.f32 %v295, %v588
      %623 = vst.msk [vmem:[#allocation2] sm:$0xff] %vm199, %v591
      %624 = vst.msk [vmem:[#allocation2 + $0x8] sm:$0xff] %vm199, %v592
      %625 = vst.msk [vmem:[#allocation2 + $0x10] sm:$0xff] %vm199, %v593
      %626 = vst.msk [vmem:[#allocation2 + $0x18] sm:$0xff] %vm199, %v594
      %627 = vst.msk [vmem:[#allocation2 + $0x20] sm:$0xff] %vm199, %v595
      %628 = vst.msk [vmem:[#allocation2 + $0x28] sm:$0xff] %vm199, %v596
      %629 = vst.msk [vmem:[#allocation2 + $0x30] sm:$0xff] %vm199, %v597
      %630 = vst.msk [vmem:[#allocation2 + $0x38] sm:$0xff] %vm199, %v598
      %631 = vst.msk [vmem:[#allocation2 + $0x40] sm:$0xff] %vm199, %v599
      %632 = vst.msk [vmem:[#allocation2 + $0x48] sm:$0xff] %vm199, %v600
      %633 = vst.msk [vmem:[#allocation2 + $0x50] sm:$0xff] %vm199, %v601
      %634 = vst.msk [vmem:[#allocation2 + $0x58] sm:$0xff] %vm199, %v602
      %635 = vst.msk [vmem:[#allocation2 + $0x60] sm:$0xff] %vm199, %v603
      %636 = vst.msk [vmem:[#allocation2 + $0x68] sm:$0xff] %vm199, %v604
      %637 = vst.msk [vmem:[#allocation2 + $0x70] sm:$0xff] %vm199, %v605
      %638 = vst.msk [vmem:[#allocation2 + $0x78] sm:$0xff] %vm199, %v606
      %639 = vst.msk [vmem:[#allocation2 + $0x80] sm:$0xff] %vm199, %v607
      %640 = vst.msk [vmem:[#allocation2 + $0x88] sm:$0xff] %vm199, %v608
      %641 = vst.msk [vmem:[#allocation2 + $0x90] sm:$0xff] %vm199, %v609
      %642 = vst.msk [vmem:[#allocation2 + $0x98] sm:$0xff] %vm199, %v610
      %643 = vst.msk [vmem:[#allocation2 + $0xa0] sm:$0xff] %vm199, %v611
      %644 = vst.msk [vmem:[#allocation2 + $0xa8] sm:$0xff] %vm199, %v612
      %645 = vst.msk [vmem:[#allocation2 + $0xb0] sm:$0xff] %vm199, %v613
      %646 = vst.msk [vmem:[#allocation2 + $0xb8] sm:$0xff] %vm199, %v614
      %647 = vst.msk [vmem:[#allocation2 + $0xc0] sm:$0xff] %vm199, %v615
      %648 = vst.msk [vmem:[#allocation2 + $0xc8] sm:$0xff] %vm199, %v616
      %649 = vst.msk [vmem:[#allocation2 + $0xd0] sm:$0xff] %vm199, %v617
      %650 = vst.msk [vmem:[#allocation2 + $0xd8] sm:$0xff] %vm199, %v618
      %651 = vst.msk [vmem:[#allocation2 + $0xe0] sm:$0xff] %vm199, %v619
      %652 = vst.msk [vmem:[#allocation2 + $0xe8] sm:$0xff] %vm199, %v620
      %653 = vst.msk [vmem:[#allocation2 + $0xf0] sm:$0xff] %vm199, %v621
      %654 = vst.msk [vmem:[#allocation2 + $0xf8] sm:$0xff] %vm199, %v622
      %v655 = vld [vmem:[%s192] sm:$0xf]
      %v656 = vld [vmem:[%s192 + $0x4] sm:$0xf]
      %v657 = vld [vmem:[%s192 + $0x8] sm:$0x1]
      %v658 = vld [vmem:[%s192 + $0xc] sm:$0xf]
      %v659 = vld [vmem:[%s192 + $0x10] sm:$0xf]
      %v660 = vld [vmem:[%s192 + $0x14] sm:$0x1]
      %v661 = vld [vmem:[%s192 + $0x18] sm:$0xf]
      %v662 = vld [vmem:[%s192 + $0x1c] sm:$0xf]
      %v663 = vld [vmem:[%s192 + $0x20] sm:$0x1]
      %v664 = vld [vmem:[%s192 + $0x24] sm:$0xf]
      %v665 = vld [vmem:[%s192 + $0x28] sm:$0xf]
      %v666 = vld [vmem:[%s192 + $0x2c] sm:$0x1]
      %v667 = vld [vmem:[%s192 + $0x30] sm:$0xf]
      %v668 = vld [vmem:[%s192 + $0x34] sm:$0xf]
      %v669 = vld [vmem:[%s192 + $0x38] sm:$0x1]
      %v670 = vld [vmem:[%s192 + $0x3c] sm:$0xf]
      %v671 = vld [vmem:[%s192 + $0x40] sm:$0xf]
      %v672 = vld [vmem:[%s192 + $0x44] sm:$0x1]
      %v673 = vld [vmem:[%s192 + $0x48] sm:$0xf]
      %v674 = vld [vmem:[%s192 + $0x4c] sm:$0xf]
      %v675 = vld [vmem:[%s192 + $0x50] sm:$0x1]
      %v676 = vld [vmem:[%s192 + $0x54] sm:$0xf]
      %v677 = vld [vmem:[%s192 + $0x58] sm:$0xf]
      %v678 = vld [vmem:[%s192 + $0x5c] sm:$0x1]
      %v679 = vld [vmem:[%s192 + $0x60] sm:$0xf]
      %v680 = vld [vmem:[%s192 + $0x64] sm:$0xf]
      %v681 = vld [vmem:[%s192 + $0x68] sm:$0x1]
      %v682 = vld [vmem:[%s192 + $0x6c] sm:$0xf]
      %v683 = vld [vmem:[%s192 + $0x70] sm:$0xf]
      %v684 = vld [vmem:[%s192 + $0x74] sm:$0x1]
      %v685 = vld [vmem:[%s192 + $0x78] sm:$0xf]
      %v686 = vld [vmem:[%s192 + $0x7c] sm:$0xf]
      %v687 = vld [vmem:[%s192 + $0x80] sm:$0x1]
      %v688 = vld [vmem:[%s192 + $0x84] sm:$0xf]
      %v689 = vld [vmem:[%s192 + $0x88] sm:$0xf]
      %v690 = vld [vmem:[%s192 + $0x8c] sm:$0x1]
      %v691 = vld [vmem:[%s192 + $0x90] sm:$0xf]
      %v692 = vld [vmem:[%s192 + $0x94] sm:$0xf]
      %v693 = vld [vmem:[%s192 + $0x98] sm:$0x1]
      %v694 = vld [vmem:[%s192 + $0x9c] sm:$0xf]
      %v695 = vld [vmem:[%s192 + $0xa0] sm:$0xf]
      %v696 = vld [vmem:[%s192 + $0xa4] sm:$0x1]
      %v697 = vld [vmem:[%s192 + $0xa8] sm:$0xf]
      %v698 = vld [vmem:[%s192 + $0xac] sm:$0xf]
      %v699 = vld [vmem:[%s192 + $0xb0] sm:$0x1]
      %v700 = vld [vmem:[%s192 + $0xb4] sm:$0xf]
      %v701 = vld [vmem:[%s192 + $0xb8] sm:$0xf]
      %v702 = vld [vmem:[%s192 + $0xbc] sm:$0x1]
      %vm703 = vsmask.f32 3328
      %vm704 = vsmask.f32 7440
      %vm705 = vmor %vm703, %vm704
      %v707 = vshrl.u32 %v655, 16
      %v709 = vrot.slane %v707, 4
      %v710 = vshll.u32 %v655, 16
      %v712 = vrot.slane %v710, 5
      %v713 = vor.u32 %v709, %v712
      %v714 = vrot.slane %v713, 4
      %v716 = vshll.u32 %v656, 16
      %v718 = vrot.slane %v716, 5
      %v719 = vsel %vm705, %v714, %v718
      %v720 = vshrl.u32 %v656, 16
      %v722 = vrot.slane %v720, 4
      %v723 = vor.u32 %v722, %v718
      %v724 = vrot.slane %v723, 4
      %v726 = vshll.u32 %v657, 16
      %v728 = vrot.slane %v726, 5
      %v729 = vsel %vm705, %v724, %v728
      %v731 = vshrl.u32 %v658, 16
      %v733 = vrot.slane %v731, 4
      %v734 = vshll.u32 %v658, 16
      %v736 = vrot.slane %v734, 5
      %v737 = vor.u32 %v733, %v736
      %v738 = vrot.slane %v737, 4
      %v740 = vshll.u32 %v659, 16
      %v742 = vrot.slane %v740, 5
      %v743 = vsel %vm705, %v738, %v742
      %v744 = vshrl.u32 %v659, 16
      %v746 = vrot.slane %v744, 4
      %v747 = vor.u32 %v746, %v742
      %v748 = vrot.slane %v747, 4
      %v750 = vshll.u32 %v660, 16
      %v752 = vrot.slane %v750, 5
      %v753 = vsel %vm705, %v748, %v752
      %v755 = vshrl.u32 %v661, 16
      %v757 = vrot.slane %v755, 4
      %v758 = vshll.u32 %v661, 16
      %v760 = vrot.slane %v758, 5
      %v761 = vor.u32 %v757, %v760
      %v762 = vrot.slane %v761, 4
      %v764 = vshll.u32 %v662, 16
      %v766 = vrot.slane %v764, 5
      %v767 = vsel %vm705, %v762, %v766
      %v768 = vshrl.u32 %v662, 16
      %v770 = vrot.slane %v768, 4
      %v771 = vor.u32 %v770, %v766
      %v772 = vrot.slane %v771, 4
      %v774 = vshll.u32 %v663, 16
      %v776 = vrot.slane %v774, 5
      %v777 = vsel %vm705, %v772, %v776
      %v779 = vshrl.u32 %v664, 16
      %v781 = vrot.slane %v779, 4
      %v782 = vshll.u32 %v664, 16
      %v784 = vrot.slane %v782, 5
      %v785 = vor.u32 %v781, %v784
      %v786 = vrot.slane %v785, 4
      %v788 = vshll.u32 %v665, 16
      %v790 = vrot.slane %v788, 5
      %v791 = vsel %vm705, %v786, %v790
      %v792 = vshrl.u32 %v665, 16
      %v794 = vrot.slane %v792, 4
      %v795 = vor.u32 %v794, %v790
      %v796 = vrot.slane %v795, 4
      %v798 = vshll.u32 %v666, 16
      %v800 = vrot.slane %v798, 5
      %v801 = vsel %vm705, %v796, %v800
      %v803 = vshrl.u32 %v667, 16
      %v805 = vrot.slane %v803, 4
      %v806 = vshll.u32 %v667, 16
      %v808 = vrot.slane %v806, 5
      %v809 = vor.u32 %v805, %v808
      %v810 = vrot.slane %v809, 4
      %v812 = vshll.u32 %v668, 16
      %v814 = vrot.slane %v812, 5
      %v815 = vsel %vm705, %v810, %v814
      %v816 = vshrl.u32 %v668, 16
      %v818 = vrot.slane %v816, 4
      %v819 = vor.u32 %v818, %v814
      %v820 = vrot.slane %v819, 4
      %v822 = vshll.u32 %v669, 16
      %v824 = vrot.slane %v822, 5
      %v825 = vsel %vm705, %v820, %v824
      %v827 = vshrl.u32 %v670, 16
      %v829 = vrot.slane %v827, 4
      %v830 = vshll.u32 %v670, 16
      %v832 = vrot.slane %v830, 5
      %v833 = vor.u32 %v829, %v832
      %v834 = vrot.slane %v833, 4
      %v836 = vshll.u32 %v671, 16
      %v838 = vrot.slane %v836, 5
      %v839 = vsel %vm705, %v834, %v838
      %v840 = vshrl.u32 %v671, 16
      %v842 = vrot.slane %v840, 4
      %v843 = vor.u32 %v842, %v838
      %v844 = vrot.slane %v843, 4
      %v846 = vshll.u32 %v672, 16
      %v848 = vrot.slane %v846, 5
      %v849 = vsel %vm705, %v844, %v848
      %v851 = vshrl.u32 %v673, 16
      %v853 = vrot.slane %v851, 4
      %v854 = vshll.u32 %v673, 16
      %v856 = vrot.slane %v854, 5
      %v857 = vor.u32 %v853, %v856
      %v858 = vrot.slane %v857, 4
      %v860 = vshll.u32 %v674, 16
      %v862 = vrot.slane %v860, 5
      %v863 = vsel %vm705, %v858, %v862
      %v864 = vshrl.u32 %v674, 16
      %v866 = vrot.slane %v864, 4
      %v867 = vor.u32 %v866, %v862
      %v868 = vrot.slane %v867, 4
      %v870 = vshll.u32 %v675, 16
      %v872 = vrot.slane %v870, 5
      %v873 = vsel %vm705, %v868, %v872
      %v875 = vshrl.u32 %v676, 16
      %v877 = vrot.slane %v875, 4
      %v878 = vshll.u32 %v676, 16
      %v880 = vrot.slane %v878, 5
      %v881 = vor.u32 %v877, %v880
      %v882 = vrot.slane %v881, 4
      %v884 = vshll.u32 %v677, 16
      %v886 = vrot.slane %v884, 5
      %v887 = vsel %vm705, %v882, %v886
      %v888 = vshrl.u32 %v677, 16
      %v890 = vrot.slane %v888, 4
      %v891 = vor.u32 %v890, %v886
      %v892 = vrot.slane %v891, 4
      %v894 = vshll.u32 %v678, 16
      %v896 = vrot.slane %v894, 5
      %v897 = vsel %vm705, %v892, %v896
      %v899 = vshrl.u32 %v679, 16
      %v901 = vrot.slane %v899, 4
      %v902 = vshll.u32 %v679, 16
      %v904 = vrot.slane %v902, 5
      %v905 = vor.u32 %v901, %v904
      %v906 = vrot.slane %v905, 4
      %v908 = vshll.u32 %v680, 16
      %v910 = vrot.slane %v908, 5
      %v911 = vsel %vm705, %v906, %v910
      %v912 = vshrl.u32 %v680, 16
      %v914 = vrot.slane %v912, 4
      %v915 = vor.u32 %v914, %v910
      %v916 = vrot.slane %v915, 4
      %v918 = vshll.u32 %v681, 16
      %v920 = vrot.slane %v918, 5
      %v921 = vsel %vm705, %v916, %v920
      %v923 = vshrl.u32 %v682, 16
      %v925 = vrot.slane %v923, 4
      %v926 = vshll.u32 %v682, 16
      %v928 = vrot.slane %v926, 5
      %v929 = vor.u32 %v925, %v928
      %v930 = vrot.slane %v929, 4
      %v932 = vshll.u32 %v683, 16
      %v934 = vrot.slane %v932, 5
      %v935 = vsel %vm705, %v930, %v934
      %v936 = vshrl.u32 %v683, 16
      %v938 = vrot.slane %v936, 4
      %v939 = vor.u32 %v938, %v934
      %v940 = vrot.slane %v939, 4
      %v942 = vshll.u32 %v684, 16
      %v944 = vrot.slane %v942, 5
      %v945 = vsel %vm705, %v940, %v944
      %v947 = vshrl.u32 %v685, 16
      %v949 = vrot.slane %v947, 4
      %v950 = vshll.u32 %v685, 16
      %v952 = vrot.slane %v950, 5
      %v953 = vor.u32 %v949, %v952
      %v954 = vrot.slane %v953, 4
      %v956 = vshll.u32 %v686, 16
      %v958 = vrot.slane %v956, 5
      %v959 = vsel %vm705, %v954, %v958
      %v960 = vshrl.u32 %v686, 16
      %v962 = vrot.slane %v960, 4
      %v963 = vor.u32 %v962, %v958
      %v964 = vrot.slane %v963, 4
      %v966 = vshll.u32 %v687, 16
      %v968 = vrot.slane %v966, 5
      %v969 = vsel %vm705, %v964, %v968
      %v971 = vshrl.u32 %v688, 16
      %v973 = vrot.slane %v971, 4
      %v974 = vshll.u32 %v688, 16
      %v976 = vrot.slane %v974, 5
      %v977 = vor.u32 %v973, %v976
      %v978 = vrot.slane %v977, 4
      %v980 = vshll.u32 %v689, 16
      %v982 = vrot.slane %v980, 5
      %v983 = vsel %vm705, %v978, %v982
      %v984 = vshrl.u32 %v689, 16
      %v986 = vrot.slane %v984, 4
      %v987 = vor.u32 %v986, %v982
      %v988 = vrot.slane %v987, 4
      %v990 = vshll.u32 %v690, 16
      %v992 = vrot.slane %v990, 5
      %v993 = vsel %vm705, %v988, %v992
      %v995 = vshrl.u32 %v691, 16
      %v997 = vrot.slane %v995, 4
      %v998 = vshll.u32 %v691, 16
      %v1000 = vrot.slane %v998, 5
      %v1001 = vor.u32 %v997, %v1000
      %v1002 = vrot.slane %v1001, 4
      %v1004 = vshll.u32 %v692, 16
      %v1006 = vrot.slane %v1004, 5
      %v1007 = vsel %vm705, %v1002, %v1006
      %v1008 = vshrl.u32 %v692, 16
      %v1010 = vrot.slane %v1008, 4
      %v1011 = vor.u32 %v1010, %v1006
      %v1012 = vrot.slane %v1011, 4
      %v1014 = vshll.u32 %v693, 16
      %v1016 = vrot.slane %v1014, 5
      %v1017 = vsel %vm705, %v1012, %v1016
      %v1019 = vshrl.u32 %v694, 16
      %v1021 = vrot.slane %v1019, 4
      %v1022 = vshll.u32 %v694, 16
      %v1024 = vrot.slane %v1022, 5
      %v1025 = vor.u32 %v1021, %v1024
      %v1026 = vrot.slane %v1025, 4
      %v1028 = vshll.u32 %v695, 16
      %v1030 = vrot.slane %v1028, 5
      %v1031 = vsel %vm705, %v1026, %v1030
      %v1032 = vshrl.u32 %v695, 16
      %v1034 = vrot.slane %v1032, 4
      %v1035 = vor.u32 %v1034, %v1030
      %v1036 = vrot.slane %v1035, 4
      %v1038 = vshll.u32 %v696, 16
      %v1040 = vrot.slane %v1038, 5
      %v1041 = vsel %vm705, %v1036, %v1040
      %v1043 = vshrl.u32 %v697, 16
      %v1045 = vrot.slane %v1043, 4
      %v1046 = vshll.u32 %v697, 16
      %v1048 = vrot.slane %v1046, 5
      %v1049 = vor.u32 %v1045, %v1048
      %v1050 = vrot.slane %v1049, 4
      %v1052 = vshll.u32 %v698, 16
      %v1054 = vrot.slane %v1052, 5
      %v1055 = vsel %vm705, %v1050, %v1054
      %v1056 = vshrl.u32 %v698, 16
      %v1058 = vrot.slane %v1056, 4
      %v1059 = vor.u32 %v1058, %v1054
      %v1060 = vrot.slane %v1059, 4
      %v1062 = vshll.u32 %v699, 16
      %v1064 = vrot.slane %v1062, 5
      %v1065 = vsel %vm705, %v1060, %v1064
      %v1067 = vshrl.u32 %v700, 16
      %v1069 = vrot.slane %v1067, 4
      %v1070 = vshll.u32 %v700, 16
      %v1072 = vrot.slane %v1070, 5
      %v1073 = vor.u32 %v1069, %v1072
      %v1074 = vrot.slane %v1073, 4
      %v1076 = vshll.u32 %v701, 16
      %v1078 = vrot.slane %v1076, 5
      %v1079 = vsel %vm705, %v1074, %v1078
      %v1080 = vshrl.u32 %v701, 16
      %v1082 = vrot.slane %v1080, 4
      %v1083 = vor.u32 %v1082, %v1078
      %v1084 = vrot.slane %v1083, 4
      %v1086 = vshll.u32 %v702, 16
      %v1088 = vrot.slane %v1086, 5
      %v1089 = vsel %vm705, %v1084, %v1088
      %v1090 = vld [vmem:[#allocation2] sm:$0xff]
      %v1091 = vld [vmem:[#allocation2 + $0x8] sm:$0xff]
      %v1092 = vld [vmem:[#allocation2 + $0x10] sm:$0xff]
      %v1093 = vld [vmem:[#allocation2 + $0x18] sm:$0xff]
      %v1094 = vld [vmem:[#allocation2 + $0x20] sm:$0xff]
      %v1095 = vld [vmem:[#allocation2 + $0x28] sm:$0xff]
      %v1096 = vld [vmem:[#allocation2 + $0x30] sm:$0xff]
      %v1097 = vld [vmem:[#allocation2 + $0x38] sm:$0xff]
      %v1098 = vld [vmem:[#allocation2 + $0x40] sm:$0xff]
      %v1099 = vld [vmem:[#allocation2 + $0x48] sm:$0xff]
      %v1100 = vld [vmem:[#allocation2 + $0x50] sm:$0xff]
      %v1101 = vld [vmem:[#allocation2 + $0x58] sm:$0xff]
      %v1102 = vld [vmem:[#allocation2 + $0x60] sm:$0xff]
      %v1103 = vld [vmem:[#allocation2 + $0x68] sm:$0xff]
      %v1104 = vld [vmem:[#allocation2 + $0x70] sm:$0xff]
      %v1105 = vld [vmem:[#allocation2 + $0x78] sm:$0xff]
      %v1106 = vld [vmem:[#allocation2 + $0x80] sm:$0xff]
      %v1107 = vld [vmem:[#allocation2 + $0x88] sm:$0xff]
      %v1108 = vld [vmem:[#allocation2 + $0x90] sm:$0xff]
      %v1109 = vld [vmem:[#allocation2 + $0x98] sm:$0xff]
      %v1110 = vld [vmem:[#allocation2 + $0xa0] sm:$0xff]
      %v1111 = vld [vmem:[#allocation2 + $0xa8] sm:$0xff]
      %v1112 = vld [vmem:[#allocation2 + $0xb0] sm:$0xff]
      %v1113 = vld [vmem:[#allocation2 + $0xb8] sm:$0xff]
      %v1114 = vld [vmem:[#allocation2 + $0xc0] sm:$0xff]
      %v1115 = vld [vmem:[#allocation2 + $0xc8] sm:$0xff]
      %v1116 = vld [vmem:[#allocation2 + $0xd0] sm:$0xff]
      %v1117 = vld [vmem:[#allocation2 + $0xd8] sm:$0xff]
      %v1118 = vld [vmem:[#allocation2 + $0xe0] sm:$0xff]
      %v1119 = vld [vmem:[#allocation2 + $0xe8] sm:$0xff]
      %v1120 = vld [vmem:[#allocation2 + $0xf0] sm:$0xff]
      %v1121 = vld [vmem:[#allocation2 + $0xf8] sm:$0xff]
      %s1122 = scalar_lea.vmem %s1, 2
      %v1123 = vld [vmem:[%s1122] sm:$0x3]
      %v1124 = vunpack.c.l.b16 %v719
      %v1125 = vunpack.c.l.b16 %v729
      %v1126 = vunpack.c.l.b16 %v743
      %v1127 = vunpack.c.l.b16 %v753
      %v1128 = vunpack.c.l.b16 %v767
      %v1129 = vunpack.c.l.b16 %v777
      %v1130 = vunpack.c.l.b16 %v791
      %v1131 = vunpack.c.l.b16 %v801
      %v1132 = vunpack.c.l.b16 %v815
      %v1133 = vunpack.c.l.b16 %v825
      %v1134 = vunpack.c.l.b16 %v839
      %v1135 = vunpack.c.l.b16 %v849
      %v1136 = vunpack.c.l.b16 %v863
      %v1137 = vunpack.c.l.b16 %v873
      %v1138 = vunpack.c.l.b16 %v887
      %v1139 = vunpack.c.l.b16 %v897
      %v1140 = vunpack.c.l.b16 %v911
      %v1141 = vunpack.c.l.b16 %v921
      %v1142 = vunpack.c.l.b16 %v935
      %v1143 = vunpack.c.l.b16 %v945
      %v1144 = vunpack.c.l.b16 %v959
      %v1145 = vunpack.c.l.b16 %v969
      %v1146 = vunpack.c.l.b16 %v983
      %v1147 = vunpack.c.l.b16 %v993
      %v1148 = vunpack.c.l.b16 %v1007
      %v1149 = vunpack.c.l.b16 %v1017
      %v1150 = vunpack.c.l.b16 %v1031
      %v1151 = vunpack.c.l.b16 %v1041
      %v1152 = vunpack.c.l.b16 %v1055
      %v1153 = vunpack.c.l.b16 %v1065
      %v1154 = vunpack.c.l.b16 %v1079
      %v1155 = vunpack.c.l.b16 %v1089
      %v1156 = vpack.c.b16 %v1125, %v1124
      %v1157 = vpack.c.b16 %v1127, %v1126
      %v1158 = vpack.c.b16 %v1129, %v1128
      %v1159 = vpack.c.b16 %v1131, %v1130
      %v1160 = vpack.c.b16 %v1133, %v1132
      %v1161 = vpack.c.b16 %v1135, %v1134
      %v1162 = vpack.c.b16 %v1137, %v1136
      %v1163 = vpack.c.b16 %v1139, %v1138
      %v1164 = vpack.c.b16 %v1141, %v1140
      %v1165 = vpack.c.b16 %v1143, %v1142
      %v1166 = vpack.c.b16 %v1145, %v1144
      %v1167 = vpack.c.b16 %v1147, %v1146
      %v1168 = vpack.c.b16 %v1149, %v1148
      %v1169 = vpack.c.b16 %v1151, %v1150
      %v1170 = vpack.c.b16 %v1153, %v1152
      %v1171 = vpack.c.b16 %v1155, %v1154
      %v1173 = vsel %vm377, %v1156, 0
      %v1176 = vsel %vm377, %v1157, 0
      %v1179 = vsel %vm377, %v1158, 0
      %v1182 = vsel %vm377, %v1159, 0
      %v1185 = vsel %vm377, %v1160, 0
      %v1188 = vsel %vm377, %v1161, 0
      %v1191 = vsel %vm377, %v1162, 0
      %v1194 = vsel %vm377, %v1163, 0
      %v1197 = vsel %vm377, %v1164, 0
      %v1200 = vsel %vm377, %v1165, 0
      %v1203 = vsel %vm377, %v1166, 0
      %v1206 = vsel %vm377, %v1167, 0
      %v1209 = vsel %vm377, %v1168, 0
      %v1212 = vsel %vm377, %v1169, 0
      %v1215 = vsel %vm377, %v1170, 0
      %v1218 = vsel %vm377, %v1171, 0
      %v1221 = vsel %vm426, %v1123, 0
      %1223 = vmatprep.subr.bf16.mxu0 0
      %1224 = vmatpush1.bf16.msra.mxu0 0
      %1225 = vmatprep.subr.bf16.mxu0 0
      %1226 = vmatpush1.bf16.msra.mxu0 0
      %1227 = vmatprep.subr.bf16.mxu0 0
      %1228 = vmatpush1.bf16.msra.mxu0 0
      %1229 = vmatprep.subr.bf16.mxu0 0
      %1230 = vmatpush1.bf16.msra.mxu0 0
      %1231 = vmatprep.subr.bf16.mxu0 0
      %1232 = vmatpush1.bf16.msra.mxu0 0
      %1233 = vmatprep.subr.bf16.mxu0 0
      %1234 = vmatpush1.bf16.msra.mxu0 0
      %1235 = vmatprep.subr.bf16.mxu0 0
      %1236 = vmatpush1.bf16.msra.mxu0 0
      %1237 = vmatprep.subr.bf16.mxu0 0
      %1238 = vmatpush1.bf16.msra.mxu0 %v1221
      %1239 = vmatprep.subr.bf16.mxu0 0
      %1240 = vmatpush2.bf16.msra.mxu0 0
      %1241 = vmatprep.subr.bf16.mxu0 0
      %1242 = vmatpush2.bf16.msra.mxu0 0
      %1243 = vmatprep.subr.bf16.mxu0 0
      %1244 = vmatpush2.bf16.msra.mxu0 0
      %1245 = vmatprep.subr.bf16.mxu0 0
      %1246 = vmatpush2.bf16.msra.mxu0 0
      %1247 = vmatprep.subr.bf16.mxu0 0
      %1248 = vmatpush2.bf16.msra.mxu0 0
      %1249 = vmatprep.subr.bf16.mxu0 0
      %1250 = vmatpush2.bf16.msra.mxu0 0
      %1251 = vmatprep.subr.bf16.mxu0 0
      %1252 = vmatpush2.bf16.msra.mxu0 0
      %1253 = vmatprep.subr.bf16.mxu0 0
      %1254 = vmatpush2.bf16.msra.mxu0 0
      %1255 = vmatprep.mubr.bf16.mxu0 0
      %1256 = vmatmul.mubr.bf16.gmra.mxu0 %v1173
      %v1257 = vpop.f32.mrf.mxu0
      %v1258 = vadd.f32 0.0, %v1257
      %v1259 = vpop.f32.mrf.mxu0
      %v1260 = vpop.f32.mrf.mxu0
      %v1261 = vadd.f32 0.0, %v1260
      %v1262 = vpop.f32.mrf.mxu0
      %1263 = vmatprep.mubr.bf16.mxu0 0
      %1264 = vmatmul.mubr.bf16.gmra.mxu0 %v1176
      %v1265 = vpop.f32.mrf.mxu0
      %v1266 = vadd.f32 0.0, %v1265
      %v1267 = vpop.f32.mrf.mxu0
      %v1268 = vpop.f32.mrf.mxu0
      %v1269 = vadd.f32 0.0, %v1268
      %v1270 = vpop.f32.mrf.mxu0
      %1271 = vmatprep.mubr.bf16.mxu0 0
      %1272 = vmatmul.mubr.bf16.gmra.mxu0 %v1179
      %v1273 = vpop.f32.mrf.mxu0
      %v1274 = vadd.f32 0.0, %v1273
      %v1275 = vpop.f32.mrf.mxu0
      %v1276 = vpop.f32.mrf.mxu0
      %v1277 = vadd.f32 0.0, %v1276
      %v1278 = vpop.f32.mrf.mxu0
      %1279 = vmatprep.mubr.bf16.mxu0 0
      %1280 = vmatmul.mubr.bf16.gmra.mxu0 %v1182
      %v1281 = vpop.f32.mrf.mxu0
      %v1282 = vadd.f32 0.0, %v1281
      %v1283 = vpop.f32.mrf.mxu0
      %v1284 = vpop.f32.mrf.mxu0
      %v1285 = vadd.f32 0.0, %v1284
      %v1286 = vpop.f32.mrf.mxu0
      %1287 = vmatprep.mubr.bf16.mxu0 0
      %1288 = vmatmul.mubr.bf16.gmra.mxu0 %v1185
      %v1289 = vpop.f32.mrf.mxu0
      %v1290 = vadd.f32 0.0, %v1289
      %v1291 = vpop.f32.mrf.mxu0
      %v1292 = vpop.f32.mrf.mxu0
      %v1293 = vadd.f32 0.0, %v1292
      %v1294 = vpop.f32.mrf.mxu0
      %1295 = vmatprep.mubr.bf16.mxu0 0
      %1296 = vmatmul.mubr.bf16.gmra.mxu0 %v1188
      %v1297 = vpop.f32.mrf.mxu0
      %v1298 = vadd.f32 0.0, %v1297
      %v1299 = vpop.f32.mrf.mxu0
      %v1300 = vpop.f32.mrf.mxu0
      %v1301 = vadd.f32 0.0, %v1300
      %v1302 = vpop.f32.mrf.mxu0
      %1303 = vmatprep.mubr.bf16.mxu0 0
      %1304 = vmatmul.mubr.bf16.gmra.mxu0 %v1191
      %v1305 = vpop.f32.mrf.mxu0
      %v1306 = vadd.f32 0.0, %v1305
      %v1307 = vpop.f32.mrf.mxu0
      %v1308 = vpop.f32.mrf.mxu0
      %v1309 = vadd.f32 0.0, %v1308
      %v1310 = vpop.f32.mrf.mxu0
      %1311 = vmatprep.mubr.bf16.mxu0 0
      %1312 = vmatmul.mubr.bf16.gmra.mxu0 %v1194
      %v1313 = vpop.f32.mrf.mxu0
      %v1314 = vadd.f32 0.0, %v1313
      %v1315 = vpop.f32.mrf.mxu0
      %v1316 = vpop.f32.mrf.mxu0
      %v1317 = vadd.f32 0.0, %v1316
      %v1318 = vpop.f32.mrf.mxu0
      %1319 = vmatprep.mubr.bf16.mxu0 0
      %1320 = vmatmul.mubr.bf16.gmra.mxu0 %v1197
      %v1321 = vpop.f32.mrf.mxu0
      %v1322 = vadd.f32 0.0, %v1321
      %v1323 = vpop.f32.mrf.mxu0
      %v1324 = vpop.f32.mrf.mxu0
      %v1325 = vadd.f32 0.0, %v1324
      %v1326 = vpop.f32.mrf.mxu0
      %1327 = vmatprep.mubr.bf16.mxu0 0
      %1328 = vmatmul.mubr.bf16.gmra.mxu0 %v1200
      %v1329 = vpop.f32.mrf.mxu0
      %v1330 = vadd.f32 0.0, %v1329
      %v1331 = vpop.f32.mrf.mxu0
      %v1332 = vpop.f32.mrf.mxu0
      %v1333 = vadd.f32 0.0, %v1332
      %v1334 = vpop.f32.mrf.mxu0
      %1335 = vmatprep.mubr.bf16.mxu0 0
      %1336 = vmatmul.mubr.bf16.gmra.mxu0 %v1203
      %v1337 = vpop.f32.mrf.mxu0
      %v1338 = vadd.f32 0.0, %v1337
      %v1339 = vpop.f32.mrf.mxu0
      %v1340 = vpop.f32.mrf.mxu0
      %v1341 = vadd.f32 0.0, %v1340
      %v1342 = vpop.f32.mrf.mxu0
      %1343 = vmatprep.mubr.bf16.mxu0 0
      %1344 = vmatmul.mubr.bf16.gmra.mxu0 %v1206
      %v1345 = vpop.f32.mrf.mxu0
      %v1346 = vadd.f32 0.0, %v1345
      %v1347 = vpop.f32.mrf.mxu0
      %v1348 = vpop.f32.mrf.mxu0
      %v1349 = vadd.f32 0.0, %v1348
      %v1350 = vpop.f32.mrf.mxu0
      %1351 = vmatprep.mubr.bf16.mxu0 0
      %1352 = vmatmul.mubr.bf16.gmra.mxu0 %v1209
      %v1353 = vpop.f32.mrf.mxu0
      %v1354 = vadd.f32 0.0, %v1353
      %v1355 = vpop.f32.mrf.mxu0
      %v1356 = vpop.f32.mrf.mxu0
      %v1357 = vadd.f32 0.0, %v1356
      %v1358 = vpop.f32.mrf.mxu0
      %1359 = vmatprep.mubr.bf16.mxu0 0
      %1360 = vmatmul.mubr.bf16.gmra.mxu0 %v1212
      %v1361 = vpop.f32.mrf.mxu0
      %v1362 = vadd.f32 0.0, %v1361
      %v1363 = vpop.f32.mrf.mxu0
      %v1364 = vpop.f32.mrf.mxu0
      %v1365 = vadd.f32 0.0, %v1364
      %v1366 = vpop.f32.mrf.mxu0
      %1367 = vmatprep.mubr.bf16.mxu0 0
      %1368 = vmatmul.mubr.bf16.gmra.mxu0 %v1215
      %v1369 = vpop.f32.mrf.mxu0
      %v1370 = vadd.f32 0.0, %v1369
      %v1371 = vpop.f32.mrf.mxu0
      %v1372 = vpop.f32.mrf.mxu0
      %v1373 = vadd.f32 0.0, %v1372
      %v1374 = vpop.f32.mrf.mxu0
      %1375 = vmatprep.mubr.bf16.mxu0 0
      %1376 = vmatmul.mubr.bf16.gmra.mxu0 %v1218
      %v1377 = vpop.f32.mrf.mxu0
      %v1378 = vadd.f32 0.0, %v1377
      %v1379 = vpop.f32.mrf.mxu0
      %v1380 = vpop.f32.mrf.mxu0
      %v1381 = vadd.f32 0.0, %v1380
      %v1382 = vpop.f32.mrf.mxu0
      %1383 = vdwg.mxu0
      %v1384 = vadd.f32 %v1090, %v1258
      %v1385 = vadd.f32 %v1091, %v1261
      %v1386 = vadd.f32 %v1092, %v1266
      %v1387 = vadd.f32 %v1093, %v1269
      %v1388 = vadd.f32 %v1094, %v1274
      %v1389 = vadd.f32 %v1095, %v1277
      %v1390 = vadd.f32 %v1096, %v1282
      %v1391 = vadd.f32 %v1097, %v1285
      %v1392 = vadd.f32 %v1098, %v1290
      %v1393 = vadd.f32 %v1099, %v1293
      %v1394 = vadd.f32 %v1100, %v1298
      %v1395 = vadd.f32 %v1101, %v1301
      %v1396 = vadd.f32 %v1102, %v1306
      %v1397 = vadd.f32 %v1103, %v1309
      %v1398 = vadd.f32 %v1104, %v1314
      %v1399 = vadd.f32 %v1105, %v1317
      %v1400 = vadd.f32 %v1106, %v1322
      %v1401 = vadd.f32 %v1107, %v1325
      %v1402 = vadd.f32 %v1108, %v1330
      %v1403 = vadd.f32 %v1109, %v1333
      %v1404 = vadd.f32 %v1110, %v1338
      %v1405 = vadd.f32 %v1111, %v1341
      %v1406 = vadd.f32 %v1112, %v1346
      %v1407 = vadd.f32 %v1113, %v1349
      %v1408 = vadd.f32 %v1114, %v1354
      %v1409 = vadd.f32 %v1115, %v1357
      %v1410 = vadd.f32 %v1116, %v1362
      %v1411 = vadd.f32 %v1117, %v1365
      %v1412 = vadd.f32 %v1118, %v1370
      %v1413 = vadd.f32 %v1119, %v1373
      %v1414 = vadd.f32 %v1120, %v1378
      %v1415 = vadd.f32 %v1121, %v1381
      %1416 = vst.msk [vmem:[#allocation2] sm:$0xff] %vm199, %v1384
      %1417 = vst.msk [vmem:[#allocation2 + $0x8] sm:$0xff] %vm199, %v1385
      %1418 = vst.msk [vmem:[#allocation2 + $0x10] sm:$0xff] %vm199, %v1386
      %1419 = vst.msk [vmem:[#allocation2 + $0x18] sm:$0xff] %vm199, %v1387
      %1420 = vst.msk [vmem:[#allocation2 + $0x20] sm:$0xff] %vm199, %v1388
      %1421 = vst.msk [vmem:[#allocation2 + $0x28] sm:$0xff] %vm199, %v1389
      %1422 = vst.msk [vmem:[#allocation2 + $0x30] sm:$0xff] %vm199, %v1390
      %1423 = vst.msk [vmem:[#allocation2 + $0x38] sm:$0xff] %vm199, %v1391
      %1424 = vst.msk [vmem:[#allocation2 + $0x40] sm:$0xff] %vm199, %v1392
      %1425 = vst.msk [vmem:[#allocation2 + $0x48] sm:$0xff] %vm199, %v1393
      %1426 = vst.msk [vmem:[#allocation2 + $0x50] sm:$0xff] %vm199, %v1394
      %1427 = vst.msk [vmem:[#allocation2 + $0x58] sm:$0xff] %vm199, %v1395
      %1428 = vst.msk [vmem:[#allocation2 + $0x60] sm:$0xff] %vm199, %v1396
      %1429 = vst.msk [vmem:[#allocation2 + $0x68] sm:$0xff] %vm199, %v1397
      %1430 = vst.msk [vmem:[#allocation2 + $0x70] sm:$0xff] %vm199, %v1398
      %1431 = vst.msk [vmem:[#allocation2 + $0x78] sm:$0xff] %vm199, %v1399
      %1432 = vst.msk [vmem:[#allocation2 + $0x80] sm:$0xff] %vm199, %v1400
      %1433 = vst.msk [vmem:[#allocation2 + $0x88] sm:$0xff] %vm199, %v1401
      %1434 = vst.msk [vmem:[#allocation2 + $0x90] sm:$0xff] %vm199, %v1402
      %1435 = vst.msk [vmem:[#allocation2 + $0x98] sm:$0xff] %vm199, %v1403
      %1436 = vst.msk [vmem:[#allocation2 + $0xa0] sm:$0xff] %vm199, %v1404
      %1437 = vst.msk [vmem:[#allocation2 + $0xa8] sm:$0xff] %vm199, %v1405
      %1438 = vst.msk [vmem:[#allocation2 + $0xb0] sm:$0xff] %vm199, %v1406
      %1439 = vst.msk [vmem:[#allocation2 + $0xb8] sm:$0xff] %vm199, %v1407
      %1440 = vst.msk [vmem:[#allocation2 + $0xc0] sm:$0xff] %vm199, %v1408
      %1441 = vst.msk [vmem:[#allocation2 + $0xc8] sm:$0xff] %vm199, %v1409
      %1442 = vst.msk [vmem:[#allocation2 + $0xd0] sm:$0xff] %vm199, %v1410
      %1443 = vst.msk [vmem:[#allocation2 + $0xd8] sm:$0xff] %vm199, %v1411
      %1444 = vst.msk [vmem:[#allocation2 + $0xe0] sm:$0xff] %vm199, %v1412
      %1445 = vst.msk [vmem:[#allocation2 + $0xe8] sm:$0xff] %vm199, %v1413
      %1446 = vst.msk [vmem:[#allocation2 + $0xf0] sm:$0xff] %vm199, %v1414
      %1447 = vst.msk [vmem:[#allocation2 + $0xf8] sm:$0xff] %vm199, %v1415
      %v1448 = vld [vmem:[%s192] sm:$0xe]
      %v1449 = vld [vmem:[%s192 + $0x4] sm:$0xf]
      %v1450 = vld [vmem:[%s192 + $0x8] sm:$0x1]
      %v1451 = vld [vmem:[%s192 + $0xc] sm:$0xe]
      %v1452 = vld [vmem:[%s192 + $0x10] sm:$0xf]
      %v1453 = vld [vmem:[%s192 + $0x14] sm:$0x1]
      %v1454 = vld [vmem:[%s192 + $0x18] sm:$0xe]
      %v1455 = vld [vmem:[%s192 + $0x1c] sm:$0xf]
      %v1456 = vld [vmem:[%s192 + $0x20] sm:$0x1]
      %v1457 = vld [vmem:[%s192 + $0x24] sm:$0xe]
      %v1458 = vld [vmem:[%s192 + $0x28] sm:$0xf]
      %v1459 = vld [vmem:[%s192 + $0x2c] sm:$0x1]
      %v1460 = vld [vmem:[%s192 + $0x30] sm:$0xe]
      %v1461 = vld [vmem:[%s192 + $0x34] sm:$0xf]
      %v1462 = vld [vmem:[%s192 + $0x38] sm:$0x1]
      %v1463 = vld [vmem:[%s192 + $0x3c] sm:$0xe]
      %v1464 = vld [vmem:[%s192 + $0x40] sm:$0xf]
      %v1465 = vld [vmem:[%s192 + $0x44] sm:$0x1]
      %v1466 = vld [vmem:[%s192 + $0x48] sm:$0xe]
      %v1467 = vld [vmem:[%s192 + $0x4c] sm:$0xf]
      %v1468 = vld [vmem:[%s192 + $0x50] sm:$0x1]
      %v1469 = vld [vmem:[%s192 + $0x54] sm:$0xe]
      %v1470 = vld [vmem:[%s192 + $0x58] sm:$0xf]
      %v1471 = vld [vmem:[%s192 + $0x5c] sm:$0x1]
      %v1472 = vld [vmem:[%s192 + $0x60] sm:$0xe]
      %v1473 = vld [vmem:[%s192 + $0x64] sm:$0xf]
      %v1474 = vld [vmem:[%s192 + $0x68] sm:$0x1]
      %v1475 = vld [vmem:[%s192 + $0x6c] sm:$0xe]
      %v1476 = vld [vmem:[%s192 + $0x70] sm:$0xf]
      %v1477 = vld [vmem:[%s192 + $0x74] sm:$0x1]
      %v1478 = vld [vmem:[%s192 + $0x78] sm:$0xe]
      %v1479 = vld [vmem:[%s192 + $0x7c] sm:$0xf]
      %v1480 = vld [vmem:[%s192 + $0x80] sm:$0x1]
      %v1481 = vld [vmem:[%s192 + $0x84] sm:$0xe]
      %v1482 = vld [vmem:[%s192 + $0x88] sm:$0xf]
      %v1483 = vld [vmem:[%s192 + $0x8c] sm:$0x1]
      %v1484 = vld [vmem:[%s192 + $0x90] sm:$0xe]
      %v1485 = vld [vmem:[%s192 + $0x94] sm:$0xf]
      %v1486 = vld [vmem:[%s192 + $0x98] sm:$0x1]
      %v1487 = vld [vmem:[%s192 + $0x9c] sm:$0xe]
      %v1488 = vld [vmem:[%s192 + $0xa0] sm:$0xf]
      %v1489 = vld [vmem:[%s192 + $0xa4] sm:$0x1]
      %v1490 = vld [vmem:[%s192 + $0xa8] sm:$0xe]
      %v1491 = vld [vmem:[%s192 + $0xac] sm:$0xf]
      %v1492 = vld [vmem:[%s192 + $0xb0] sm:$0x1]
      %v1493 = vld [vmem:[%s192 + $0xb4] sm:$0xe]
      %v1494 = vld [vmem:[%s192 + $0xb8] sm:$0xf]
      %v1495 = vld [vmem:[%s192 + $0xbc] sm:$0x1]
      %vm1544 = vcmask 1042432
      %vm1545 = vcmask 1046532
      %vm1546 = vmor %vm1544, %vm1545
      %v1547 = vrot.slane %v1448, 5
      %v1548 = vrot.slane %v1547, 4
      %v1549 = vrot.slane %v1449, 5
      %v1550 = vsel %vm1546, %v1548, %v1549
      %v1551 = vrot.slane %v1549, 4
      %v1552 = vrot.slane %v1450, 5
      %v1553 = vsel %vm1546, %v1551, %v1552
      %v1554 = vrot.slane %v1451, 5
      %v1555 = vrot.slane %v1554, 4
      %v1556 = vrot.slane %v1452, 5
      %v1557 = vsel %vm1546, %v1555, %v1556
      %v1558 = vrot.slane %v1556, 4
      %v1559 = vrot.slane %v1453, 5
      %v1560 = vsel %vm1546, %v1558, %v1559
      %v1561 = vrot.slane %v1454, 5
      %v1562 = vrot.slane %v1561, 4
      %v1563 = vrot.slane %v1455, 5
      %v1564 = vsel %vm1546, %v1562, %v1563
      %v1565 = vrot.slane %v1563, 4
      %v1566 = vrot.slane %v1456, 5
      %v1567 = vsel %vm1546, %v1565, %v1566
      %v1568 = vrot.slane %v1457, 5
      %v1569 = vrot.slane %v1568, 4
      %v1570 = vrot.slane %v1458, 5
      %v1571 = vsel %vm1546, %v1569, %v1570
      %v1572 = vrot.slane %v1570, 4
      %v1573 = vrot.slane %v1459, 5
      %v1574 = vsel %vm1546, %v1572, %v1573
      %v1575 = vrot.slane %v1460, 5
      %v1576 = vrot.slane %v1575, 4
      %v1577 = vrot.slane %v1461, 5
      %v1578 = vsel %vm1546, %v1576, %v1577
      %v1579 = vrot.slane %v1577, 4
      %v1580 = vrot.slane %v1462, 5
      %v1581 = vsel %vm1546, %v1579, %v1580
      %v1582 = vrot.slane %v1463, 5
      %v1583 = vrot.slane %v1582, 4
      %v1584 = vrot.slane %v1464, 5
      %v1585 = vsel %vm1546, %v1583, %v1584
      %v1586 = vrot.slane %v1584, 4
      %v1587 = vrot.slane %v1465, 5
      %v1588 = vsel %vm1546, %v1586, %v1587
      %v1589 = vrot.slane %v1466, 5
      %v1590 = vrot.slane %v1589, 4
      %v1591 = vrot.slane %v1467, 5
      %v1592 = vsel %vm1546, %v1590, %v1591
      %v1593 = vrot.slane %v1591, 4
      %v1594 = vrot.slane %v1468, 5
      %v1595 = vsel %vm1546, %v1593, %v1594
      %v1596 = vrot.slane %v1469, 5
      %v1597 = vrot.slane %v1596, 4
      %v1598 = vrot.slane %v1470, 5
      %v1599 = vsel %vm1546, %v1597, %v1598
      %v1600 = vrot.slane %v1598, 4
      %v1601 = vrot.slane %v1471, 5
      %v1602 = vsel %vm1546, %v1600, %v1601
      %v1603 = vrot.slane %v1472, 5
      %v1604 = vrot.slane %v1603, 4
      %v1605 = vrot.slane %v1473, 5
      %v1606 = vsel %vm1546, %v1604, %v1605
      %v1607 = vrot.slane %v1605, 4
      %v1608 = vrot.slane %v1474, 5
      %v1609 = vsel %vm1546, %v1607, %v1608
      %v1610 = vrot.slane %v1475, 5
      %v1611 = vrot.slane %v1610, 4
      %v1612 = vrot.slane %v1476, 5
      %v1613 = vsel %vm1546, %v1611, %v1612
      %v1614 = vrot.slane %v1612, 4
      %v1615 = vrot.slane %v1477, 5
      %v1616 = vsel %vm1546, %v1614, %v1615
      %v1617 = vrot.slane %v1478, 5
      %v1618 = vrot.slane %v1617, 4
      %v1619 = vrot.slane %v1479, 5
      %v1620 = vsel %vm1546, %v1618, %v1619
      %v1621 = vrot.slane %v1619, 4
      %v1622 = vrot.slane %v1480, 5
      %v1623 = vsel %vm1546, %v1621, %v1622
      %v1624 = vrot.slane %v1481, 5
      %v1625 = vrot.slane %v1624, 4
      %v1626 = vrot.slane %v1482, 5
      %v1627 = vsel %vm1546, %v1625, %v1626
      %v1628 = vrot.slane %v1626, 4
      %v1629 = vrot.slane %v1483, 5
      %v1630 = vsel %vm1546, %v1628, %v1629
      %v1631 = vrot.slane %v1484, 5
      %v1632 = vrot.slane %v1631, 4
      %v1633 = vrot.slane %v1485, 5
      %v1634 = vsel %vm1546, %v1632, %v1633
      %v1635 = vrot.slane %v1633, 4
      %v1636 = vrot.slane %v1486, 5
      %v1637 = vsel %vm1546, %v1635, %v1636
      %v1638 = vrot.slane %v1487, 5
      %v1639 = vrot.slane %v1638, 4
      %v1640 = vrot.slane %v1488, 5
      %v1641 = vsel %vm1546, %v1639, %v1640
      %v1642 = vrot.slane %v1640, 4
      %v1643 = vrot.slane %v1489, 5
      %v1644 = vsel %vm1546, %v1642, %v1643
      %v1645 = vrot.slane %v1490, 5
      %v1646 = vrot.slane %v1645, 4
      %v1647 = vrot.slane %v1491, 5
      %v1648 = vsel %vm1546, %v1646, %v1647
      %v1649 = vrot.slane %v1647, 4
      %v1650 = vrot.slane %v1492, 5
      %v1651 = vsel %vm1546, %v1649, %v1650
      %v1652 = vrot.slane %v1493, 5
      %v1653 = vrot.slane %v1652, 4
      %v1654 = vrot.slane %v1494, 5
      %v1655 = vsel %vm1546, %v1653, %v1654
      %v1656 = vrot.slane %v1654, 4
      %v1657 = vrot.slane %v1495, 5
      %v1658 = vsel %vm1546, %v1656, %v1657
      %v1659 = vld [vmem:[#allocation2] sm:$0xff]
      %v1660 = vld [vmem:[#allocation2 + $0x8] sm:$0xff]
      %v1661 = vld [vmem:[#allocation2 + $0x10] sm:$0xff]
      %v1662 = vld [vmem:[#allocation2 + $0x18] sm:$0xff]
      %v1663 = vld [vmem:[#allocation2 + $0x20] sm:$0xff]
      %v1664 = vld [vmem:[#allocation2 + $0x28] sm:$0xff]
      %v1665 = vld [vmem:[#allocation2 + $0x30] sm:$0xff]
      %v1666 = vld [vmem:[#allocation2 + $0x38] sm:$0xff]
      %v1667 = vld [vmem:[#allocation2 + $0x40] sm:$0xff]
      %v1668 = vld [vmem:[#allocation2 + $0x48] sm:$0xff]
      %v1669 = vld [vmem:[#allocation2 + $0x50] sm:$0xff]
      %v1670 = vld [vmem:[#allocation2 + $0x58] sm:$0xff]
      %v1671 = vld [vmem:[#allocation2 + $0x60] sm:$0xff]
      %v1672 = vld [vmem:[#allocation2 + $0x68] sm:$0xff]
      %v1673 = vld [vmem:[#allocation2 + $0x70] sm:$0xff]
      %v1674 = vld [vmem:[#allocation2 + $0x78] sm:$0xff]
      %v1675 = vld [vmem:[#allocation2 + $0x80] sm:$0xff]
      %v1676 = vld [vmem:[#allocation2 + $0x88] sm:$0xff]
      %v1677 = vld [vmem:[#allocation2 + $0x90] sm:$0xff]
      %v1678 = vld [vmem:[#allocation2 + $0x98] sm:$0xff]
      %v1679 = vld [vmem:[#allocation2 + $0xa0] sm:$0xff]
      %v1680 = vld [vmem:[#allocation2 + $0xa8] sm:$0xff]
      %v1681 = vld [vmem:[#allocation2 + $0xb0] sm:$0xff]
      %v1682 = vld [vmem:[#allocation2 + $0xb8] sm:$0xff]
      %v1683 = vld [vmem:[#allocation2 + $0xc0] sm:$0xff]
      %v1684 = vld [vmem:[#allocation2 + $0xc8] sm:$0xff]
      %v1685 = vld [vmem:[#allocation2 + $0xd0] sm:$0xff]
      %v1686 = vld [vmem:[#allocation2 + $0xd8] sm:$0xff]
      %v1687 = vld [vmem:[#allocation2 + $0xe0] sm:$0xff]
      %v1688 = vld [vmem:[#allocation2 + $0xe8] sm:$0xff]
      %v1689 = vld [vmem:[#allocation2 + $0xf0] sm:$0xff]
      %v1690 = vld [vmem:[#allocation2 + $0xf8] sm:$0xff]
      %s1691 = scalar_lea.vmem %s1, 4
      %v1692 = vld [vmem:[%s1691] sm:$0x3]
      %v1693 = vunpack.c.l.b16 %v1550
      %v1694 = vunpack.c.l.b16 %v1553
      %v1695 = vunpack.c.l.b16 %v1557
      %v1696 = vunpack.c.l.b16 %v1560
      %v1697 = vunpack.c.l.b16 %v1564
      %v1698 = vunpack.c.l.b16 %v1567
      %v1699 = vunpack.c.l.b16 %v1571
      %v1700 = vunpack.c.l.b16 %v1574
      %v1701 = vunpack.c.l.b16 %v1578
      %v1702 = vunpack.c.l.b16 %v1581
      %v1703 = vunpack.c.l.b16 %v1585
      %v1704 = vunpack.c.l.b16 %v1588
      %v1705 = vunpack.c.l.b16 %v1592
      %v1706 = vunpack.c.l.b16 %v1595
      %v1707 = vunpack.c.l.b16 %v1599
      %v1708 = vunpack.c.l.b16 %v1602
      %v1709 = vunpack.c.l.b16 %v1606
      %v1710 = vunpack.c.l.b16 %v1609
      %v1711 = vunpack.c.l.b16 %v1613
      %v1712 = vunpack.c.l.b16 %v1616
      %v1713 = vunpack.c.l.b16 %v1620
      %v1714 = vunpack.c.l.b16 %v1623
      %v1715 = vunpack.c.l.b16 %v1627
      %v1716 = vunpack.c.l.b16 %v1630
      %v1717 = vunpack.c.l.b16 %v1634
      %v1718 = vunpack.c.l.b16 %v1637
      %v1719 = vunpack.c.l.b16 %v1641
      %v1720 = vunpack.c.l.b16 %v1644
      %v1721 = vunpack.c.l.b16 %v1648
      %v1722 = vunpack.c.l.b16 %v1651
      %v1723 = vunpack.c.l.b16 %v1655
      %v1724 = vunpack.c.l.b16 %v1658
      %v1725 = vpack.c.b16 %v1694, %v1693
      %v1726 = vpack.c.b16 %v1696, %v1695
      %v1727 = vpack.c.b16 %v1698, %v1697
      %v1728 = vpack.c.b16 %v1700, %v1699
      %v1729 = vpack.c.b16 %v1702, %v1701
      %v1730 = vpack.c.b16 %v1704, %v1703
      %v1731 = vpack.c.b16 %v1706, %v1705
      %v1732 = vpack.c.b16 %v1708, %v1707
      %v1733 = vpack.c.b16 %v1710, %v1709
      %v1734 = vpack.c.b16 %v1712, %v1711
      %v1735 = vpack.c.b16 %v1714, %v1713
      %v1736 = vpack.c.b16 %v1716, %v1715
      %v1737 = vpack.c.b16 %v1718, %v1717
      %v1738 = vpack.c.b16 %v1720, %v1719
      %v1739 = vpack.c.b16 %v1722, %v1721
      %v1740 = vpack.c.b16 %v1724, %v1723
      %v1742 = vsel %vm377, %v1725, 0
      %v1745 = vsel %vm377, %v1726, 0
      %v1748 = vsel %vm377, %v1727, 0
      %v1751 = vsel %vm377, %v1728, 0
      %v1754 = vsel %vm377, %v1729, 0
      %v1757 = vsel %vm377, %v1730, 0
      %v1760 = vsel %vm377, %v1731, 0
      %v1763 = vsel %vm377, %v1732, 0
      %v1766 = vsel %vm377, %v1733, 0
      %v1769 = vsel %vm377, %v1734, 0
      %v1772 = vsel %vm377, %v1735, 0
      %v1775 = vsel %vm377, %v1736, 0
      %v1778 = vsel %vm377, %v1737, 0
      %v1781 = vsel %vm377, %v1738, 0
      %v1784 = vsel %vm377, %v1739, 0
      %v1787 = vsel %vm377, %v1740, 0
      %v1790 = vsel %vm426, %v1692, 0
      %1792 = vmatprep.subr.bf16.mxu0 0
      %1793 = vmatpush1.bf16.msra.mxu0 0
      %1794 = vmatprep.subr.bf16.mxu0 0
      %1795 = vmatpush1.bf16.msra.mxu0 0
      %1796 = vmatprep.subr.bf16.mxu0 0
      %1797 = vmatpush1.bf16.msra.mxu0 0
      %1798 = vmatprep.subr.bf16.mxu0 0
      %1799 = vmatpush1.bf16.msra.mxu0 0
      %1800 = vmatprep.subr.bf16.mxu0 0
      %1801 = vmatpush1.bf16.msra.mxu0 0
      %1802 = vmatprep.subr.bf16.mxu0 0
      %1803 = vmatpush1.bf16.msra.mxu0 0
      %1804 = vmatprep.subr.bf16.mxu0 0
      %1805 = vmatpush1.bf16.msra.mxu0 0
      %1806 = vmatprep.subr.bf16.mxu0 0
      %1807 = vmatpush1.bf16.msra.mxu0 %v1790
      %1808 = vmatprep.subr.bf16.mxu0 0
      %1809 = vmatpush2.bf16.msra.mxu0 0
      %1810 = vmatprep.subr.bf16.mxu0 0
      %1811 = vmatpush2.bf16.msra.mxu0 0
      %1812 = vmatprep.subr.bf16.mxu0 0
      %1813 = vmatpush2.bf16.msra.mxu0 0
      %1814 = vmatprep.subr.bf16.mxu0 0
      %1815 = vmatpush2.bf16.msra.mxu0 0
      %1816 = vmatprep.subr.bf16.mxu0 0
      %1817 = vmatpush2.bf16.msra.mxu0 0
      %1818 = vmatprep.subr.bf16.mxu0 0
      %1819 = vmatpush2.bf16.msra.mxu0 0
      %1820 = vmatprep.subr.bf16.mxu0 0
      %1821 = vmatpush2.bf16.msra.mxu0 0
      %1822 = vmatprep.subr.bf16.mxu0 0
      %1823 = vmatpush2.bf16.msra.mxu0 0
      %1824 = vmatprep.mubr.bf16.mxu0 0
      %1825 = vmatmul.mubr.bf16.gmra.mxu0 %v1742
      %v1826 = vpop.f32.mrf.mxu0
      %v1827 = vadd.f32 0.0, %v1826
      %v1828 = vpop.f32.mrf.mxu0
      %v1829 = vpop.f32.mrf.mxu0
      %v1830 = vadd.f32 0.0, %v1829
      %v1831 = vpop.f32.mrf.mxu0
      %1832 = vmatprep.mubr.bf16.mxu0 0
      %1833 = vmatmul.mubr.bf16.gmra.mxu0 %v1745
      %v1834 = vpop.f32.mrf.mxu0
      %v1835 = vadd.f32 0.0, %v1834
      %v1836 = vpop.f32.mrf.mxu0
      %v1837 = vpop.f32.mrf.mxu0
      %v1838 = vadd.f32 0.0, %v1837
      %v1839 = vpop.f32.mrf.mxu0
      %1840 = vmatprep.mubr.bf16.mxu0 0
      %1841 = vmatmul.mubr.bf16.gmra.mxu0 %v1748
      %v1842 = vpop.f32.mrf.mxu0
      %v1843 = vadd.f32 0.0, %v1842
      %v1844 = vpop.f32.mrf.mxu0
      %v1845 = vpop.f32.mrf.mxu0
      %v1846 = vadd.f32 0.0, %v1845
      %v1847 = vpop.f32.mrf.mxu0
      %1848 = vmatprep.mubr.bf16.mxu0 0
      %1849 = vmatmul.mubr.bf16.gmra.mxu0 %v1751
      %v1850 = vpop.f32.mrf.mxu0
      %v1851 = vadd.f32 0.0, %v1850
      %v1852 = vpop.f32.mrf.mxu0
      %v1853 = vpop.f32.mrf.mxu0
      %v1854 = vadd.f32 0.0, %v1853
      %v1855 = vpop.f32.mrf.mxu0
      %1856 = vmatprep.mubr.bf16.mxu0 0
      %1857 = vmatmul.mubr.bf16.gmra.mxu0 %v1754
      %v1858 = vpop.f32.mrf.mxu0
      %v1859 = vadd.f32 0.0, %v1858
      %v1860 = vpop.f32.mrf.mxu0
      %v1861 = vpop.f32.mrf.mxu0
      %v1862 = vadd.f32 0.0, %v1861
      %v1863 = vpop.f32.mrf.mxu0
      %1864 = vmatprep.mubr.bf16.mxu0 0
      %1865 = vmatmul.mubr.bf16.gmra.mxu0 %v1757
      %v1866 = vpop.f32.mrf.mxu0
      %v1867 = vadd.f32 0.0, %v1866
      %v1868 = vpop.f32.mrf.mxu0
      %v1869 = vpop.f32.mrf.mxu0
      %v1870 = vadd.f32 0.0, %v1869
      %v1871 = vpop.f32.mrf.mxu0
      %1872 = vmatprep.mubr.bf16.mxu0 0
      %1873 = vmatmul.mubr.bf16.gmra.mxu0 %v1760
      %v1874 = vpop.f32.mrf.mxu0
      %v1875 = vadd.f32 0.0, %v1874
      %v1876 = vpop.f32.mrf.mxu0
      %v1877 = vpop.f32.mrf.mxu0
      %v1878 = vadd.f32 0.0, %v1877
      %v1879 = vpop.f32.mrf.mxu0
      %1880 = vmatprep.mubr.bf16.mxu0 0
      %1881 = vmatmul.mubr.bf16.gmra.mxu0 %v1763
      %v1882 = vpop.f32.mrf.mxu0
      %v1883 = vadd.f32 0.0, %v1882
      %v1884 = vpop.f32.mrf.mxu0
      %v1885 = vpop.f32.mrf.mxu0
      %v1886 = vadd.f32 0.0, %v1885
      %v1887 = vpop.f32.mrf.mxu0
      %1888 = vmatprep.mubr.bf16.mxu0 0
      %1889 = vmatmul.mubr.bf16.gmra.mxu0 %v1766
      %v1890 = vpop.f32.mrf.mxu0
      %v1891 = vadd.f32 0.0, %v1890
      %v1892 = vpop.f32.mrf.mxu0
      %v1893 = vpop.f32.mrf.mxu0
      %v1894 = vadd.f32 0.0, %v1893
      %v1895 = vpop.f32.mrf.mxu0
      %1896 = vmatprep.mubr.bf16.mxu0 0
      %1897 = vmatmul.mubr.bf16.gmra.mxu0 %v1769
      %v1898 = vpop.f32.mrf.mxu0
      %v1899 = vadd.f32 0.0, %v1898
      %v1900 = vpop.f32.mrf.mxu0
      %v1901 = vpop.f32.mrf.mxu0
      %v1902 = vadd.f32 0.0, %v1901
      %v1903 = vpop.f32.mrf.mxu0
      %1904 = vmatprep.mubr.bf16.mxu0 0
      %1905 = vmatmul.mubr.bf16.gmra.mxu0 %v1772
      %v1906 = vpop.f32.mrf.mxu0
      %v1907 = vadd.f32 0.0, %v1906
      %v1908 = vpop.f32.mrf.mxu0
      %v1909 = vpop.f32.mrf.mxu0
      %v1910 = vadd.f32 0.0, %v1909
      %v1911 = vpop.f32.mrf.mxu0
      %1912 = vmatprep.mubr.bf16.mxu0 0
      %1913 = vmatmul.mubr.bf16.gmra.mxu0 %v1775
      %v1914 = vpop.f32.mrf.mxu0
      %v1915 = vadd.f32 0.0, %v1914
      %v1916 = vpop.f32.mrf.mxu0
      %v1917 = vpop.f32.mrf.mxu0
      %v1918 = vadd.f32 0.0, %v1917
      %v1919 = vpop.f32.mrf.mxu0
      %1920 = vmatprep.mubr.bf16.mxu0 0
      %1921 = vmatmul.mubr.bf16.gmra.mxu0 %v1778
      %v1922 = vpop.f32.mrf.mxu0
      %v1923 = vadd.f32 0.0, %v1922
      %v1924 = vpop.f32.mrf.mxu0
      %v1925 = vpop.f32.mrf.mxu0
      %v1926 = vadd.f32 0.0, %v1925
      %v1927 = vpop.f32.mrf.mxu0
      %1928 = vmatprep.mubr.bf16.mxu0 0
      %1929 = vmatmul.mubr.bf16.gmra.mxu0 %v1781
      %v1930 = vpop.f32.mrf.mxu0
      %v1931 = vadd.f32 0.0, %v1930
      %v1932 = vpop.f32.mrf.mxu0
      %v1933 = vpop.f32.mrf.mxu0
      %v1934 = vadd.f32 0.0, %v1933
      %v1935 = vpop.f32.mrf.mxu0
      %1936 = vmatprep.mubr.bf16.mxu0 0
      %1937 = vmatmul.mubr.bf16.gmra.mxu0 %v1784
      %v1938 = vpop.f32.mrf.mxu0
      %v1939 = vadd.f32 0.0, %v1938
      %v1940 = vpop.f32.mrf.mxu0
      %v1941 = vpop.f32.mrf.mxu0
      %v1942 = vadd.f32 0.0, %v1941
      %v1943 = vpop.f32.mrf.mxu0
      %1944 = vmatprep.mubr.bf16.mxu0 0
      %1945 = vmatmul.mubr.bf16.gmra.mxu0 %v1787
      %v1946 = vpop.f32.mrf.mxu0
      %v1947 = vadd.f32 0.0, %v1946
      %v1948 = vpop.f32.mrf.mxu0
      %v1949 = vpop.f32.mrf.mxu0
      %v1950 = vadd.f32 0.0, %v1949
      %v1951 = vpop.f32.mrf.mxu0
      %1952 = vdwg.mxu0
      %v1953 = vadd.f32 %v1659, %v1827
      %v1954 = vadd.f32 %v1660, %v1830
      %v1955 = vadd.f32 %v1661, %v1835
      %v1956 = vadd.f32 %v1662, %v1838
      %v1957 = vadd.f32 %v1663, %v1843
      %v1958 = vadd.f32 %v1664, %v1846
      %v1959 = vadd.f32 %v1665, %v1851
      %v1960 = vadd.f32 %v1666, %v1854
      %v1961 = vadd.f32 %v1667, %v1859
      %v1962 = vadd.f32 %v1668, %v1862
      %v1963 = vadd.f32 %v1669, %v1867
      %v1964 = vadd.f32 %v1670, %v1870
      %v1965 = vadd.f32 %v1671, %v1875
      %v1966 = vadd.f32 %v1672, %v1878
      %v1967 = vadd.f32 %v1673, %v1883
      %v1968 = vadd.f32 %v1674, %v1886
      %v1969 = vadd.f32 %v1675, %v1891
      %v1970 = vadd.f32 %v1676, %v1894
      %v1971 = vadd.f32 %v1677, %v1899
      %v1972 = vadd.f32 %v1678, %v1902
      %v1973 = vadd.f32 %v1679, %v1907
      %v1974 = vadd.f32 %v1680, %v1910
      %v1975 = vadd.f32 %v1681, %v1915
      %v1976 = vadd.f32 %v1682, %v1918
      %v1977 = vadd.f32 %v1683, %v1923
      %v1978 = vadd.f32 %v1684, %v1926
      %v1979 = vadd.f32 %v1685, %v1931
      %v1980 = vadd.f32 %v1686, %v1934
      %v1981 = vadd.f32 %v1687, %v1939
      %v1982 = vadd.f32 %v1688, %v1942
      %v1983 = vadd.f32 %v1689, %v1947
      %v1984 = vadd.f32 %v1690, %v1950
      %1985 = vst.msk [vmem:[#allocation2] sm:$0xff] %vm199, %v1953
      %1986 = vst.msk [vmem:[#allocation2 + $0x8] sm:$0xff] %vm199, %v1954
      %1987 = vst.msk [vmem:[#allocation2 + $0x10] sm:$0xff] %vm199, %v1955
      %1988 = vst.msk [vmem:[#allocation2 + $0x18] sm:$0xff] %vm199, %v1956
      %1989 = vst.msk [vmem:[#allocation2 + $0x20] sm:$0xff] %vm199, %v1957
      %1990 = vst.msk [vmem:[#allocation2 + $0x28] sm:$0xff] %vm199, %v1958
      %1991 = vst.msk [vmem:[#allocation2 + $0x30] sm:$0xff] %vm199, %v1959
      %1992 = vst.msk [vmem:[#allocation2 + $0x38] sm:$0xff] %vm199, %v1960
      %1993 = vst.msk [vmem:[#allocation2 + $0x40] sm:$0xff] %vm199, %v1961
      %1994 = vst.msk [vmem:[#allocation2 + $0x48] sm:$0xff] %vm199, %v1962
      %1995 = vst.msk [vmem:[#allocation2 + $0x50] sm:$0xff] %vm199, %v1963
      %1996 = vst.msk [vmem:[#allocation2 + $0x58] sm:$0xff] %vm199, %v1964
      %1997 = vst.msk [vmem:[#allocation2 + $0x60] sm:$0xff] %vm199, %v1965
      %1998 = vst.msk [vmem:[#allocation2 + $0x68] sm:$0xff] %vm199, %v1966
      %1999 = vst.msk [vmem:[#allocation2 + $0x70] sm:$0xff] %vm199, %v1967
      %2000 = vst.msk [vmem:[#allocation2 + $0x78] sm:$0xff] %vm199, %v1968
      %2001 = vst.msk [vmem:[#allocation2 + $0x80] sm:$0xff] %vm199, %v1969
      %2002 = vst.msk [vmem:[#allocation2 + $0x88] sm:$0xff] %vm199, %v1970
      %2003 = vst.msk [vmem:[#allocation2 + $0x90] sm:$0xff] %vm199, %v1971
      %2004 = vst.msk [vmem:[#allocation2 + $0x98] sm:$0xff] %vm199, %v1972
      %2005 = vst.msk [vmem:[#allocation2 + $0xa0] sm:$0xff] %vm199, %v1973
      %2006 = vst.msk [vmem:[#allocation2 + $0xa8] sm:$0xff] %vm199, %v1974
      %2007 = vst.msk [vmem:[#allocation2 + $0xb0] sm:$0xff] %vm199, %v1975
      %2008 = vst.msk [vmem:[#allocation2 + $0xb8] sm:$0xff] %vm199, %v1976
      %2009 = vst.msk [vmem:[#allocation2 + $0xc0] sm:$0xff] %vm199, %v1977
      %2010 = vst.msk [vmem:[#allocation2 + $0xc8] sm:$0xff] %vm199, %v1978
      %2011 = vst.msk [vmem:[#allocation2 + $0xd0] sm:$0xff] %vm199, %v1979
      %2012 = vst.msk [vmem:[#allocation2 + $0xd8] sm:$0xff] %vm199, %v1980
      %2013 = vst.msk [vmem:[#allocation2 + $0xe0] sm:$0xff] %vm199, %v1981
      %2014 = vst.msk [vmem:[#allocation2 + $0xe8] sm:$0xff] %vm199, %v1982
      %2015 = vst.msk [vmem:[#allocation2 + $0xf0] sm:$0xff] %vm199, %v1983
      %2016 = vst.msk [vmem:[#allocation2 + $0xf8] sm:$0xff] %vm199, %v1984
      %s2017 = scalar_lea.vmem %s192, 12
      %v2018 = vld [vmem:[%s2017] sm:$0xf]
      %v2019 = vld [vmem:[%s2017 + $0x4] sm:$0xf]
      %v2020 = vld [vmem:[%s2017 + $0xc] sm:$0xf]
      %v2021 = vld [vmem:[%s2017 + $0x10] sm:$0xf]
      %v2022 = vld [vmem:[%s2017 + $0x18] sm:$0xf]
      %v2023 = vld [vmem:[%s2017 + $0x1c] sm:$0xf]
      %v2024 = vld [vmem:[%s2017 + $0x24] sm:$0xf]
      %v2025 = vld [vmem:[%s2017 + $0x28] sm:$0xf]
      %v2026 = vld [vmem:[%s2017 + $0x30] sm:$0xf]
      %v2027 = vld [vmem:[%s2017 + $0x34] sm:$0xf]
      %v2028 = vld [vmem:[%s2017 + $0x3c] sm:$0xf]
      %v2029 = vld [vmem:[%s2017 + $0x40] sm:$0xf]
      %v2030 = vld [vmem:[%s2017 + $0x48] sm:$0xf]
      %v2031 = vld [vmem:[%s2017 + $0x4c] sm:$0xf]
      %v2032 = vld [vmem:[%s2017 + $0x54] sm:$0xf]
      %v2033 = vld [vmem:[%s2017 + $0x58] sm:$0xf]
      %v2034 = vld [vmem:[%s2017 + $0x60] sm:$0xf]
      %v2035 = vld [vmem:[%s2017 + $0x64] sm:$0xf]
      %v2036 = vld [vmem:[%s2017 + $0x6c] sm:$0xf]
      %v2037 = vld [vmem:[%s2017 + $0x70] sm:$0xf]
      %v2038 = vld [vmem:[%s2017 + $0x78] sm:$0xf]
      %v2039 = vld [vmem:[%s2017 + $0x7c] sm:$0xf]
      %v2040 = vld [vmem:[%s2017 + $0x84] sm:$0xf]
      %v2041 = vld [vmem:[%s2017 + $0x88] sm:$0xf]
      %v2042 = vld [vmem:[%s2017 + $0x90] sm:$0xf]
      %v2043 = vld [vmem:[%s2017 + $0x94] sm:$0xf]
      %v2044 = vld [vmem:[%s2017 + $0x9c] sm:$0xf]
      %v2045 = vld [vmem:[%s2017 + $0xa0] sm:$0xf]
      %v2046 = vld [vmem:[%s2017 + $0xa8] sm:$0xf]
      %v2047 = vld [vmem:[%s2017 + $0xac] sm:$0xf]
      %v2048 = vld [vmem:[%s2017 + $0xb4] sm:$0xf]
      %v2049 = vld [vmem:[%s2017 + $0xb8] sm:$0xf]
      %v2050 = vld [vmem:[#allocation2] sm:$0xff]
      %v2051 = vld [vmem:[#allocation2 + $0x8] sm:$0xff]
      %v2052 = vld [vmem:[#allocation2 + $0x10] sm:$0xff]
      %v2053 = vld [vmem:[#allocation2 + $0x18] sm:$0xff]
      %v2054 = vld [vmem:[#allocation2 + $0x20] sm:$0xff]
      %v2055 = vld [vmem:[#allocation2 + $0x28] sm:$0xff]
      %v2056 = vld [vmem:[#allocation2 + $0x30] sm:$0xff]
      %v2057 = vld [vmem:[#allocation2 + $0x38] sm:$0xff]
      %v2058 = vld [vmem:[#allocation2 + $0x40] sm:$0xff]
      %v2059 = vld [vmem:[#allocation2 + $0x48] sm:$0xff]
      %v2060 = vld [vmem:[#allocation2 + $0x50] sm:$0xff]
      %v2061 = vld [vmem:[#allocation2 + $0x58] sm:$0xff]
      %v2062 = vld [vmem:[#allocation2 + $0x60] sm:$0xff]
      %v2063 = vld [vmem:[#allocation2 + $0x68] sm:$0xff]
      %v2064 = vld [vmem:[#allocation2 + $0x70] sm:$0xff]
      %v2065 = vld [vmem:[#allocation2 + $0x78] sm:$0xff]
      %v2066 = vld [vmem:[#allocation2 + $0x80] sm:$0xff]
      %v2067 = vld [vmem:[#allocation2 + $0x88] sm:$0xff]
      %v2068 = vld [vmem:[#allocation2 + $0x90] sm:$0xff]
      %v2069 = vld [vmem:[#allocation2 + $0x98] sm:$0xff]
      %v2070 = vld [vmem:[#allocation2 + $0xa0] sm:$0xff]
      %v2071 = vld [vmem:[#allocation2 + $0xa8] sm:$0xff]
      %v2072 = vld [vmem:[#allocation2 + $0xb0] sm:$0xff]
      %v2073 = vld [vmem:[#allocation2 + $0xb8] sm:$0xff]
      %v2074 = vld [vmem:[#allocation2 + $0xc0] sm:$0xff]
      %v2075 = vld [vmem:[#allocation2 + $0xc8] sm:$0xff]
      %v2076 = vld [vmem:[#allocation2 + $0xd0] sm:$0xff]
      %v2077 = vld [vmem:[#allocation2 + $0xd8] sm:$0xff]
      %v2078 = vld [vmem:[#allocation2 + $0xe0] sm:$0xff]
      %v2079 = vld [vmem:[#allocation2 + $0xe8] sm:$0xff]
      %v2080 = vld [vmem:[#allocation2 + $0xf0] sm:$0xff]
      %v2081 = vld [vmem:[#allocation2 + $0xf8] sm:$0xff]
      %s2082 = scalar_lea.vmem %s1, 6
      %v2083 = vld [vmem:[%s2082] sm:$0x3]
      %v2116 = vunpack.c.l.b16 %v2018
      %v2117 = vunpack.c.l.b16 %v2019
      %v2118 = vunpack.c.l.b16 %v2020
      %v2119 = vunpack.c.l.b16 %v2021
      %v2120 = vunpack.c.l.b16 %v2022
      %v2121 = vunpack.c.l.b16 %v2023
      %v2122 = vunpack.c.l.b16 %v2024
      %v2123 = vunpack.c.l.b16 %v2025
      %v2124 = vunpack.c.l.b16 %v2026
      %v2125 = vunpack.c.l.b16 %v2027
      %v2126 = vunpack.c.l.b16 %v2028
      %v2127 = vunpack.c.l.b16 %v2029
      %v2128 = vunpack.c.l.b16 %v2030
      %v2129 = vunpack.c.l.b16 %v2031
      %v2130 = vunpack.c.l.b16 %v2032
      %v2131 = vunpack.c.l.b16 %v2033
      %v2132 = vunpack.c.l.b16 %v2034
      %v2133 = vunpack.c.l.b16 %v2035
      %v2134 = vunpack.c.l.b16 %v2036
      %v2135 = vunpack.c.l.b16 %v2037
      %v2136 = vunpack.c.l.b16 %v2038
      %v2137 = vunpack.c.l.b16 %v2039
      %v2138 = vunpack.c.l.b16 %v2040
      %v2139 = vunpack.c.l.b16 %v2041
      %v2140 = vunpack.c.l.b16 %v2042
      %v2141 = vunpack.c.l.b16 %v2043
      %v2142 = vunpack.c.l.b16 %v2044
      %v2143 = vunpack.c.l.b16 %v2045
      %v2144 = vunpack.c.l.b16 %v2046
      %v2145 = vunpack.c.l.b16 %v2047
      %v2146 = vunpack.c.l.b16 %v2048
      %v2147 = vunpack.c.l.b16 %v2049
      %v2148 = vpack.c.b16 %v2117, %v2116
      %v2149 = vpack.c.b16 %v2119, %v2118
      %v2150 = vpack.c.b16 %v2121, %v2120
      %v2151 = vpack.c.b16 %v2123, %v2122
      %v2152 = vpack.c.b16 %v2125, %v2124
      %v2153 = vpack.c.b16 %v2127, %v2126
      %v2154 = vpack.c.b16 %v2129, %v2128
      %v2155 = vpack.c.b16 %v2131, %v2130
      %v2156 = vpack.c.b16 %v2133, %v2132
      %v2157 = vpack.c.b16 %v2135, %v2134
      %v2158 = vpack.c.b16 %v2137, %v2136
      %v2159 = vpack.c.b16 %v2139, %v2138
      %v2160 = vpack.c.b16 %v2141, %v2140
      %v2161 = vpack.c.b16 %v2143, %v2142
      %v2162 = vpack.c.b16 %v2145, %v2144
      %v2163 = vpack.c.b16 %v2147, %v2146
      %v2165 = vsel %vm377, %v2148, 0
      %v2168 = vsel %vm377, %v2149, 0
      %v2171 = vsel %vm377, %v2150, 0
      %v2174 = vsel %vm377, %v2151, 0
      %v2177 = vsel %vm377, %v2152, 0
      %v2180 = vsel %vm377, %v2153, 0
      %v2183 = vsel %vm377, %v2154, 0
      %v2186 = vsel %vm377, %v2155, 0
      %v2189 = vsel %vm377, %v2156, 0
      %v2192 = vsel %vm377, %v2157, 0
      %v2195 = vsel %vm377, %v2158, 0
      %v2198 = vsel %vm377, %v2159, 0
      %v2201 = vsel %vm377, %v2160, 0
      %v2204 = vsel %vm377, %v2161, 0
      %v2207 = vsel %vm377, %v2162, 0
      %v2210 = vsel %vm377, %v2163, 0
      %v2213 = vsel %vm426, %v2083, 0
      %2215 = vmatprep.subr.bf16.mxu0 0
      %2216 = vmatpush1.bf16.msra.mxu0 0
      %2217 = vmatprep.subr.bf16.mxu0 0
      %2218 = vmatpush1.bf16.msra.mxu0 0
      %2219 = vmatprep.subr.bf16.mxu0 0
      %2220 = vmatpush1.bf16.msra.mxu0 0
      %2221 = vmatprep.subr.bf16.mxu0 0
      %2222 = vmatpush1.bf16.msra.mxu0 0
      %2223 = vmatprep.subr.bf16.mxu0 0
      %2224 = vmatpush1.bf16.msra.mxu0 0
      %2225 = vmatprep.subr.bf16.mxu0 0
      %2226 = vmatpush1.bf16.msra.mxu0 0
      %2227 = vmatprep.subr.bf16.mxu0 0
      %2228 = vmatpush1.bf16.msra.mxu0 0
      %2229 = vmatprep.subr.bf16.mxu0 0
      %2230 = vmatpush1.bf16.msra.mxu0 %v2213
      %2231 = vmatprep.subr.bf16.mxu0 0
      %2232 = vmatpush2.bf16.msra.mxu0 0
      %2233 = vmatprep.subr.bf16.mxu0 0
      %2234 = vmatpush2.bf16.msra.mxu0 0
      %2235 = vmatprep.subr.bf16.mxu0 0
      %2236 = vmatpush2.bf16.msra.mxu0 0
      %2237 = vmatprep.subr.bf16.mxu0 0
      %2238 = vmatpush2.bf16.msra.mxu0 0
      %2239 = vmatprep.subr.bf16.mxu0 0
      %2240 = vmatpush2.bf16.msra.mxu0 0
      %2241 = vmatprep.subr.bf16.mxu0 0
      %2242 = vmatpush2.bf16.msra.mxu0 0
      %2243 = vmatprep.subr.bf16.mxu0 0
      %2244 = vmatpush2.bf16.msra.mxu0 0
      %2245 = vmatprep.subr.bf16.mxu0 0
      %2246 = vmatpush2.bf16.msra.mxu0 0
      %2247 = vmatprep.mubr.bf16.mxu0 0
      %2248 = vmatmul.mubr.bf16.gmra.mxu0 %v2165
      %v2249 = vpop.f32.mrf.mxu0
      %v2250 = vadd.f32 0.0, %v2249
      %v2251 = vpop.f32.mrf.mxu0
      %v2252 = vpop.f32.mrf.mxu0
      %v2253 = vadd.f32 0.0, %v2252
      %v2254 = vpop.f32.mrf.mxu0
      %2255 = vmatprep.mubr.bf16.mxu0 0
      %2256 = vmatmul.mubr.bf16.gmra.mxu0 %v2168
      %v2257 = vpop.f32.mrf.mxu0
      %v2258 = vadd.f32 0.0, %v2257
      %v2259 = vpop.f32.mrf.mxu0
      %v2260 = vpop.f32.mrf.mxu0
      %v2261 = vadd.f32 0.0, %v2260
      %v2262 = vpop.f32.mrf.mxu0
      %2263 = vmatprep.mubr.bf16.mxu0 0
      %2264 = vmatmul.mubr.bf16.gmra.mxu0 %v2171
      %v2265 = vpop.f32.mrf.mxu0
      %v2266 = vadd.f32 0.0, %v2265
      %v2267 = vpop.f32.mrf.mxu0
      %v2268 = vpop.f32.mrf.mxu0
      %v2269 = vadd.f32 0.0, %v2268
      %v2270 = vpop.f32.mrf.mxu0
      %2271 = vmatprep.mubr.bf16.mxu0 0
      %2272 = vmatmul.mubr.bf16.gmra.mxu0 %v2174
      %v2273 = vpop.f32.mrf.mxu0
      %v2274 = vadd.f32 0.0, %v2273
      %v2275 = vpop.f32.mrf.mxu0
      %v2276 = vpop.f32.mrf.mxu0
      %v2277 = vadd.f32 0.0, %v2276
      %v2278 = vpop.f32.mrf.mxu0
      %2279 = vmatprep.mubr.bf16.mxu0 0
      %2280 = vmatmul.mubr.bf16.gmra.mxu0 %v2177
      %v2281 = vpop.f32.mrf.mxu0
      %v2282 = vadd.f32 0.0, %v2281
      %v2283 = vpop.f32.mrf.mxu0
      %v2284 = vpop.f32.mrf.mxu0
      %v2285 = vadd.f32 0.0, %v2284
      %v2286 = vpop.f32.mrf.mxu0
      %2287 = vmatprep.mubr.bf16.mxu0 0
      %2288 = vmatmul.mubr.bf16.gmra.mxu0 %v2180
      %v2289 = vpop.f32.mrf.mxu0
      %v2290 = vadd.f32 0.0, %v2289
      %v2291 = vpop.f32.mrf.mxu0
      %v2292 = vpop.f32.mrf.mxu0
      %v2293 = vadd.f32 0.0, %v2292
      %v2294 = vpop.f32.mrf.mxu0
      %2295 = vmatprep.mubr.bf16.mxu0 0
      %2296 = vmatmul.mubr.bf16.gmra.mxu0 %v2183
      %v2297 = vpop.f32.mrf.mxu0
      %v2298 = vadd.f32 0.0, %v2297
      %v2299 = vpop.f32.mrf.mxu0
      %v2300 = vpop.f32.mrf.mxu0
      %v2301 = vadd.f32 0.0, %v2300
      %v2302 = vpop.f32.mrf.mxu0
      %2303 = vmatprep.mubr.bf16.mxu0 0
      %2304 = vmatmul.mubr.bf16.gmra.mxu0 %v2186
      %v2305 = vpop.f32.mrf.mxu0
      %v2306 = vadd.f32 0.0, %v2305
      %v2307 = vpop.f32.mrf.mxu0
      %v2308 = vpop.f32.mrf.mxu0
      %v2309 = vadd.f32 0.0, %v2308
      %v2310 = vpop.f32.mrf.mxu0
      %2311 = vmatprep.mubr.bf16.mxu0 0
      %2312 = vmatmul.mubr.bf16.gmra.mxu0 %v2189
      %v2313 = vpop.f32.mrf.mxu0
      %v2314 = vadd.f32 0.0, %v2313
      %v2315 = vpop.f32.mrf.mxu0
      %v2316 = vpop.f32.mrf.mxu0
      %v2317 = vadd.f32 0.0, %v2316
      %v2318 = vpop.f32.mrf.mxu0
      %2319 = vmatprep.mubr.bf16.mxu0 0
      %2320 = vmatmul.mubr.bf16.gmra.mxu0 %v2192
      %v2321 = vpop.f32.mrf.mxu0
      %v2322 = vadd.f32 0.0, %v2321
      %v2323 = vpop.f32.mrf.mxu0
      %v2324 = vpop.f32.mrf.mxu0
      %v2325 = vadd.f32 0.0, %v2324
      %v2326 = vpop.f32.mrf.mxu0
      %2327 = vmatprep.mubr.bf16.mxu0 0
      %2328 = vmatmul.mubr.bf16.gmra.mxu0 %v2195
      %v2329 = vpop.f32.mrf.mxu0
      %v2330 = vadd.f32 0.0, %v2329
      %v2331 = vpop.f32.mrf.mxu0
      %v2332 = vpop.f32.mrf.mxu0
      %v2333 = vadd.f32 0.0, %v2332
      %v2334 = vpop.f32.mrf.mxu0
      %2335 = vmatprep.mubr.bf16.mxu0 0
      %2336 = vmatmul.mubr.bf16.gmra.mxu0 %v2198
      %v2337 = vpop.f32.mrf.mxu0
      %v2338 = vadd.f32 0.0, %v2337
      %v2339 = vpop.f32.mrf.mxu0
      %v2340 = vpop.f32.mrf.mxu0
      %v2341 = vadd.f32 0.0, %v2340
      %v2342 = vpop.f32.mrf.mxu0
      %2343 = vmatprep.mubr.bf16.mxu0 0
      %2344 = vmatmul.mubr.bf16.gmra.mxu0 %v2201
      %v2345 = vpop.f32.mrf.mxu0
      %v2346 = vadd.f32 0.0, %v2345
      %v2347 = vpop.f32.mrf.mxu0
      %v2348 = vpop.f32.mrf.mxu0
      %v2349 = vadd.f32 0.0, %v2348
      %v2350 = vpop.f32.mrf.mxu0
      %2351 = vmatprep.mubr.bf16.mxu0 0
      %2352 = vmatmul.mubr.bf16.gmra.mxu0 %v2204
      %v2353 = vpop.f32.mrf.mxu0
      %v2354 = vadd.f32 0.0, %v2353
      %v2355 = vpop.f32.mrf.mxu0
      %v2356 = vpop.f32.mrf.mxu0
      %v2357 = vadd.f32 0.0, %v2356
      %v2358 = vpop.f32.mrf.mxu0
      %2359 = vmatprep.mubr.bf16.mxu0 0
      %2360 = vmatmul.mubr.bf16.gmra.mxu0 %v2207
      %v2361 = vpop.f32.mrf.mxu0
      %v2362 = vadd.f32 0.0, %v2361
      %v2363 = vpop.f32.mrf.mxu0
      %v2364 = vpop.f32.mrf.mxu0
      %v2365 = vadd.f32 0.0, %v2364
      %v2366 = vpop.f32.mrf.mxu0
      %2367 = vmatprep.mubr.bf16.mxu0 0
      %2368 = vmatmul.mubr.bf16.gmra.mxu0 %v2210
      %v2369 = vpop.f32.mrf.mxu0
      %v2370 = vadd.f32 0.0, %v2369
      %v2371 = vpop.f32.mrf.mxu0
      %v2372 = vpop.f32.mrf.mxu0
      %v2373 = vadd.f32 0.0, %v2372
      %v2374 = vpop.f32.mrf.mxu0
      %2375 = vdwg.mxu0
      %v2376 = vadd.f32 %v2050, %v2250
      %v2377 = vadd.f32 %v2051, %v2253
      %v2378 = vadd.f32 %v2052, %v2258
      %v2379 = vadd.f32 %v2053, %v2261
      %v2380 = vadd.f32 %v2054, %v2266
      %v2381 = vadd.f32 %v2055, %v2269
      %v2382 = vadd.f32 %v2056, %v2274
      %v2383 = vadd.f32 %v2057, %v2277
      %v2384 = vadd.f32 %v2058, %v2282
      %v2385 = vadd.f32 %v2059, %v2285
      %v2386 = vadd.f32 %v2060, %v2290
      %v2387 = vadd.f32 %v2061, %v2293
      %v2388 = vadd.f32 %v2062, %v2298
      %v2389 = vadd.f32 %v2063, %v2301
      %v2390 = vadd.f32 %v2064, %v2306
      %v2391 = vadd.f32 %v2065, %v2309
      %v2392 = vadd.f32 %v2066, %v2314
      %v2393 = vadd.f32 %v2067, %v2317
      %v2394 = vadd.f32 %v2068, %v2322
      %v2395 = vadd.f32 %v2069, %v2325
      %v2396 = vadd.f32 %v2070, %v2330
      %v2397 = vadd.f32 %v2071, %v2333
      %v2398 = vadd.f32 %v2072, %v2338
      %v2399 = vadd.f32 %v2073, %v2341
      %v2400 = vadd.f32 %v2074, %v2346
      %v2401 = vadd.f32 %v2075, %v2349
      %v2402 = vadd.f32 %v2076, %v2354
      %v2403 = vadd.f32 %v2077, %v2357
      %v2404 = vadd.f32 %v2078, %v2362
      %v2405 = vadd.f32 %v2079, %v2365
      %v2406 = vadd.f32 %v2080, %v2370
      %v2407 = vadd.f32 %v2081, %v2373
      %2408 = vst.msk [vmem:[#allocation2] sm:$0xff] %vm199, %v2376
      %2409 = vst.msk [vmem:[#allocation2 + $0x8] sm:$0xff] %vm199, %v2377
      %2410 = vst.msk [vmem:[#allocation2 + $0x10] sm:$0xff] %vm199, %v2378
      %2411 = vst.msk [vmem:[#allocation2 + $0x18] sm:$0xff] %vm199, %v2379
      %2412 = vst.msk [vmem:[#allocation2 + $0x20] sm:$0xff] %vm199, %v2380
      %2413 = vst.msk [vmem:[#allocation2 + $0x28] sm:$0xff] %vm199, %v2381
      %2414 = vst.msk [vmem:[#allocation2 + $0x30] sm:$0xff] %vm199, %v2382
      %2415 = vst.msk [vmem:[#allocation2 + $0x38] sm:$0xff] %vm199, %v2383
      %2416 = vst.msk [vmem:[#allocation2 + $0x40] sm:$0xff] %vm199, %v2384
      %2417 = vst.msk [vmem:[#allocation2 + $0x48] sm:$0xff] %vm199, %v2385
      %2418 = vst.msk [vmem:[#allocation2 + $0x50] sm:$0xff] %vm199, %v2386
      %2419 = vst.msk [vmem:[#allocation2 + $0x58] sm:$0xff] %vm199, %v2387
      %2420 = vst.msk [vmem:[#allocation2 + $0x60] sm:$0xff] %vm199, %v2388
      %2421 = vst.msk [vmem:[#allocation2 + $0x68] sm:$0xff] %vm199, %v2389
      %2422 = vst.msk [vmem:[#allocation2 + $0x70] sm:$0xff] %vm199, %v2390
      %2423 = vst.msk [vmem:[#allocation2 + $0x78] sm:$0xff] %vm199, %v2391
      %2424 = vst.msk [vmem:[#allocation2 + $0x80] sm:$0xff] %vm199, %v2392
      %2425 = vst.msk [vmem:[#allocation2 + $0x88] sm:$0xff] %vm199, %v2393
      %2426 = vst.msk [vmem:[#allocation2 + $0x90] sm:$0xff] %vm199, %v2394
      %2427 = vst.msk [vmem:[#allocation2 + $0x98] sm:$0xff] %vm199, %v2395
      %2428 = vst.msk [vmem:[#allocation2 + $0xa0] sm:$0xff] %vm199, %v2396
      %2429 = vst.msk [vmem:[#allocation2 + $0xa8] sm:$0xff] %vm199, %v2397
      %2430 = vst.msk [vmem:[#allocation2 + $0xb0] sm:$0xff] %vm199, %v2398
      %2431 = vst.msk [vmem:[#allocation2 + $0xb8] sm:$0xff] %vm199, %v2399
      %2432 = vst.msk [vmem:[#allocation2 + $0xc0] sm:$0xff] %vm199, %v2400
      %2433 = vst.msk [vmem:[#allocation2 + $0xc8] sm:$0xff] %vm199, %v2401
      %2434 = vst.msk [vmem:[#allocation2 + $0xd0] sm:$0xff] %vm199, %v2402
      %2435 = vst.msk [vmem:[#allocation2 + $0xd8] sm:$0xff] %vm199, %v2403
      %2436 = vst.msk [vmem:[#allocation2 + $0xe0] sm:$0xff] %vm199, %v2404
      %2437 = vst.msk [vmem:[#allocation2 + $0xe8] sm:$0xff] %vm199, %v2405
      %2438 = vst.msk [vmem:[#allocation2 + $0xf0] sm:$0xff] %vm199, %v2406
      %2439 = vst.msk [vmem:[#allocation2 + $0xf8] sm:$0xff] %vm199, %v2407
      %v2440 = vld [vmem:[%s2017] sm:$0xf]
      %v2441 = vld [vmem:[%s2017 + $0x4] sm:$0xf]
      %v2442 = vld [vmem:[%s2017 + $0x8] sm:$0x1]
      %v2443 = vld [vmem:[%s2017 + $0xc] sm:$0xf]
      %v2444 = vld [vmem:[%s2017 + $0x10] sm:$0xf]
      %v2445 = vld [vmem:[%s2017 + $0x14] sm:$0x1]
      %v2446 = vld [vmem:[%s2017 + $0x18] sm:$0xf]
      %v2447 = vld [vmem:[%s2017 + $0x1c] sm:$0xf]
      %v2448 = vld [vmem:[%s2017 + $0x20] sm:$0x1]
      %v2449 = vld [vmem:[%s2017 + $0x24] sm:$0xf]
      %v2450 = vld [vmem:[%s2017 + $0x28] sm:$0xf]
      %v2451 = vld [vmem:[%s2017 + $0x2c] sm:$0x1]
      %v2452 = vld [vmem:[%s2017 + $0x30] sm:$0xf]
      %v2453 = vld [vmem:[%s2017 + $0x34] sm:$0xf]
      %v2454 = vld [vmem:[%s2017 + $0x38] sm:$0x1]
      %v2455 = vld [vmem:[%s2017 + $0x3c] sm:$0xf]
      %v2456 = vld [vmem:[%s2017 + $0x40] sm:$0xf]
      %v2457 = vld [vmem:[%s2017 + $0x44] sm:$0x1]
      %v2458 = vld [vmem:[%s2017 + $0x48] sm:$0xf]
      %v2459 = vld [vmem:[%s2017 + $0x4c] sm:$0xf]
      %v2460 = vld [vmem:[%s2017 + $0x50] sm:$0x1]
      %v2461 = vld [vmem:[%s2017 + $0x54] sm:$0xf]
      %v2462 = vld [vmem:[%s2017 + $0x58] sm:$0xf]
      %v2463 = vld [vmem:[%s2017 + $0x5c] sm:$0x1]
      %v2464 = vld [vmem:[%s2017 + $0x60] sm:$0xf]
      %v2465 = vld [vmem:[%s2017 + $0x64] sm:$0xf]
      %v2466 = vld [vmem:[%s2017 + $0x68] sm:$0x1]
      %v2467 = vld [vmem:[%s2017 + $0x6c] sm:$0xf]
      %v2468 = vld [vmem:[%s2017 + $0x70] sm:$0xf]
      %v2469 = vld [vmem:[%s2017 + $0x74] sm:$0x1]
      %v2470 = vld [vmem:[%s2017 + $0x78] sm:$0xf]
      %v2471 = vld [vmem:[%s2017 + $0x7c] sm:$0xf]
      %v2472 = vld [vmem:[%s2017 + $0x80] sm:$0x1]
      %v2473 = vld [vmem:[%s2017 + $0x84] sm:$0xf]
      %v2474 = vld [vmem:[%s2017 + $0x88] sm:$0xf]
      %v2475 = vld [vmem:[%s2017 + $0x8c] sm:$0x1]
      %v2476 = vld [vmem:[%s2017 + $0x90] sm:$0xf]
      %v2477 = vld [vmem:[%s2017 + $0x94] sm:$0xf]
      %v2478 = vld [vmem:[%s2017 + $0x98] sm:$0x1]
      %v2479 = vld [vmem:[%s2017 + $0x9c] sm:$0xf]
      %v2480 = vld [vmem:[%s2017 + $0xa0] sm:$0xf]
      %v2481 = vld [vmem:[%s2017 + $0xa4] sm:$0x1]
      %v2482 = vld [vmem:[%s2017 + $0xa8] sm:$0xf]
      %v2483 = vld [vmem:[%s2017 + $0xac] sm:$0xf]
      %v2484 = vld [vmem:[%s2017 + $0xb0] sm:$0x1]
      %v2485 = vld [vmem:[%s2017 + $0xb4] sm:$0xf]
      %v2486 = vld [vmem:[%s2017 + $0xb8] sm:$0xf]
      %v2487 = vld [vmem:[%s2017 + $0xbc] sm:$0x1]
      %v2489 = vshrl.u32 %v2440, 16
      %v2491 = vrot.slane %v2489, 4
      %v2492 = vshll.u32 %v2440, 16
      %v2494 = vrot.slane %v2492, 5
      %v2495 = vor.u32 %v2491, %v2494
      %v2496 = vrot.slane %v2495, 4
      %v2498 = vshll.u32 %v2441, 16
      %v2500 = vrot.slane %v2498, 5
      %v2501 = vsel %vm705, %v2496, %v2500
      %v2502 = vshrl.u32 %v2441, 16
      %v2504 = vrot.slane %v2502, 4
      %v2505 = vor.u32 %v2504, %v2500
      %v2506 = vrot.slane %v2505, 4
      %v2508 = vshll.u32 %v2442, 16
      %v2510 = vrot.slane %v2508, 5
      %v2511 = vsel %vm705, %v2506, %v2510
      %v2513 = vshrl.u32 %v2443, 16
      %v2515 = vrot.slane %v2513, 4
      %v2516 = vshll.u32 %v2443, 16
      %v2518 = vrot.slane %v2516, 5
      %v2519 = vor.u32 %v2515, %v2518
      %v2520 = vrot.slane %v2519, 4
      %v2522 = vshll.u32 %v2444, 16
      %v2524 = vrot.slane %v2522, 5
      %v2525 = vsel %vm705, %v2520, %v2524
      %v2526 = vshrl.u32 %v2444, 16
      %v2528 = vrot.slane %v2526, 4
      %v2529 = vor.u32 %v2528, %v2524
      %v2530 = vrot.slane %v2529, 4
      %v2532 = vshll.u32 %v2445, 16
      %v2534 = vrot.slane %v2532, 5
      %v2535 = vsel %vm705, %v2530, %v2534
      %v2537 = vshrl.u32 %v2446, 16
      %v2539 = vrot.slane %v2537, 4
      %v2540 = vshll.u32 %v2446, 16
      %v2542 = vrot.slane %v2540, 5
      %v2543 = vor.u32 %v2539, %v2542
      %v2544 = vrot.slane %v2543, 4
      %v2546 = vshll.u32 %v2447, 16
      %v2548 = vrot.slane %v2546, 5
      %v2549 = vsel %vm705, %v2544, %v2548
      %v2550 = vshrl.u32 %v2447, 16
      %v2552 = vrot.slane %v2550, 4
      %v2553 = vor.u32 %v2552, %v2548
      %v2554 = vrot.slane %v2553, 4
      %v2556 = vshll.u32 %v2448, 16
      %v2558 = vrot.slane %v2556, 5
      %v2559 = vsel %vm705, %v2554, %v2558
      %v2561 = vshrl.u32 %v2449, 16
      %v2563 = vrot.slane %v2561, 4
      %v2564 = vshll.u32 %v2449, 16
      %v2566 = vrot.slane %v2564, 5
      %v2567 = vor.u32 %v2563, %v2566
      %v2568 = vrot.slane %v2567, 4
      %v2570 = vshll.u32 %v2450, 16
      %v2572 = vrot.slane %v2570, 5
      %v2573 = vsel %vm705, %v2568, %v2572
      %v2574 = vshrl.u32 %v2450, 16
      %v2576 = vrot.slane %v2574, 4
      %v2577 = vor.u32 %v2576, %v2572
      %v2578 = vrot.slane %v2577, 4
      %v2580 = vshll.u32 %v2451, 16
      %v2582 = vrot.slane %v2580, 5
      %v2583 = vsel %vm705, %v2578, %v2582
      %v2585 = vshrl.u32 %v2452, 16
      %v2587 = vrot.slane %v2585, 4
      %v2588 = vshll.u32 %v2452, 16
      %v2590 = vrot.slane %v2588, 5
      %v2591 = vor.u32 %v2587, %v2590
      %v2592 = vrot.slane %v2591, 4
      %v2594 = vshll.u32 %v2453, 16
      %v2596 = vrot.slane %v2594, 5
      %v2597 = vsel %vm705, %v2592, %v2596
      %v2598 = vshrl.u32 %v2453, 16
      %v2600 = vrot.slane %v2598, 4
      %v2601 = vor.u32 %v2600, %v2596
      %v2602 = vrot.slane %v2601, 4
      %v2604 = vshll.u32 %v2454, 16
      %v2606 = vrot.slane %v2604, 5
      %v2607 = vsel %vm705, %v2602, %v2606
      %v2609 = vshrl.u32 %v2455, 16
      %v2611 = vrot.slane %v2609, 4
      %v2612 = vshll.u32 %v2455, 16
      %v2614 = vrot.slane %v2612, 5
      %v2615 = vor.u32 %v2611, %v2614
      %v2616 = vrot.slane %v2615, 4
      %v2618 = vshll.u32 %v2456, 16
      %v2620 = vrot.slane %v2618, 5
      %v2621 = vsel %vm705, %v2616, %v2620
      %v2622 = vshrl.u32 %v2456, 16
      %v2624 = vrot.slane %v2622, 4
      %v2625 = vor.u32 %v2624, %v2620
      %v2626 = vrot.slane %v2625, 4
      %v2628 = vshll.u32 %v2457, 16
      %v2630 = vrot.slane %v2628, 5
      %v2631 = vsel %vm705, %v2626, %v2630
      %v2633 = vshrl.u32 %v2458, 16
      %v2635 = vrot.slane %v2633, 4
      %v2636 = vshll.u32 %v2458, 16
      %v2638 = vrot.slane %v2636, 5
      %v2639 = vor.u32 %v2635, %v2638
      %v2640 = vrot.slane %v2639, 4
      %v2642 = vshll.u32 %v2459, 16
      %v2644 = vrot.slane %v2642, 5
      %v2645 = vsel %vm705, %v2640, %v2644
      %v2646 = vshrl.u32 %v2459, 16
      %v2648 = vrot.slane %v2646, 4
      %v2649 = vor.u32 %v2648, %v2644
      %v2650 = vrot.slane %v2649, 4
      %v2652 = vshll.u32 %v2460, 16
      %v2654 = vrot.slane %v2652, 5
      %v2655 = vsel %vm705, %v2650, %v2654
      %v2657 = vshrl.u32 %v2461, 16
      %v2659 = vrot.slane %v2657, 4
      %v2660 = vshll.u32 %v2461, 16
      %v2662 = vrot.slane %v2660, 5
      %v2663 = vor.u32 %v2659, %v2662
      %v2664 = vrot.slane %v2663, 4
      %v2666 = vshll.u32 %v2462, 16
      %v2668 = vrot.slane %v2666, 5
      %v2669 = vsel %vm705, %v2664, %v2668
      %v2670 = vshrl.u32 %v2462, 16
      %v2672 = vrot.slane %v2670, 4
      %v2673 = vor.u32 %v2672, %v2668
      %v2674 = vrot.slane %v2673, 4
      %v2676 = vshll.u32 %v2463, 16
      %v2678 = vrot.slane %v2676, 5
      %v2679 = vsel %vm705, %v2674, %v2678
      %v2681 = vshrl.u32 %v2464, 16
      %v2683 = vrot.slane %v2681, 4
      %v2684 = vshll.u32 %v2464, 16
      %v2686 = vrot.slane %v2684, 5
      %v2687 = vor.u32 %v2683, %v2686
      %v2688 = vrot.slane %v2687, 4
      %v2690 = vshll.u32 %v2465, 16
      %v2692 = vrot.slane %v2690, 5
      %v2693 = vsel %vm705, %v2688, %v2692
      %v2694 = vshrl.u32 %v2465, 16
      %v2696 = vrot.slane %v2694, 4
      %v2697 = vor.u32 %v2696, %v2692
      %v2698 = vrot.slane %v2697, 4
      %v2700 = vshll.u32 %v2466, 16
      %v2702 = vrot.slane %v2700, 5
      %v2703 = vsel %vm705, %v2698, %v2702
      %v2705 = vshrl.u32 %v2467, 16
      %v2707 = vrot.slane %v2705, 4
      %v2708 = vshll.u32 %v2467, 16
      %v2710 = vrot.slane %v2708, 5
      %v2711 = vor.u32 %v2707, %v2710
      %v2712 = vrot.slane %v2711, 4
      %v2714 = vshll.u32 %v2468, 16
      %v2716 = vrot.slane %v2714, 5
      %v2717 = vsel %vm705, %v2712, %v2716
      %v2718 = vshrl.u32 %v2468, 16
      %v2720 = vrot.slane %v2718, 4
      %v2721 = vor.u32 %v2720, %v2716
      %v2722 = vrot.slane %v2721, 4
      %v2724 = vshll.u32 %v2469, 16
      %v2726 = vrot.slane %v2724, 5
      %v2727 = vsel %vm705, %v2722, %v2726
      %v2729 = vshrl.u32 %v2470, 16
      %v2731 = vrot.slane %v2729, 4
      %v2732 = vshll.u32 %v2470, 16
      %v2734 = vrot.slane %v2732, 5
      %v2735 = vor.u32 %v2731, %v2734
      %v2736 = vrot.slane %v2735, 4
      %v2738 = vshll.u32 %v2471, 16
      %v2740 = vrot.slane %v2738, 5
      %v2741 = vsel %vm705, %v2736, %v2740
      %v2742 = vshrl.u32 %v2471, 16
      %v2744 = vrot.slane %v2742, 4
      %v2745 = vor.u32 %v2744, %v2740
      %v2746 = vrot.slane %v2745, 4
      %v2748 = vshll.u32 %v2472, 16
      %v2750 = vrot.slane %v2748, 5
      %v2751 = vsel %vm705, %v2746, %v2750
      %v2753 = vshrl.u32 %v2473, 16
      %v2755 = vrot.slane %v2753, 4
      %v2756 = vshll.u32 %v2473, 16
      %v2758 = vrot.slane %v2756, 5
      %v2759 = vor.u32 %v2755, %v2758
      %v2760 = vrot.slane %v2759, 4
      %v2762 = vshll.u32 %v2474, 16
      %v2764 = vrot.slane %v2762, 5
      %v2765 = vsel %vm705, %v2760, %v2764
      %v2766 = vshrl.u32 %v2474, 16
      %v2768 = vrot.slane %v2766, 4
      %v2769 = vor.u32 %v2768, %v2764
      %v2770 = vrot.slane %v2769, 4
      %v2772 = vshll.u32 %v2475, 16
      %v2774 = vrot.slane %v2772, 5
      %v2775 = vsel %vm705, %v2770, %v2774
      %v2777 = vshrl.u32 %v2476, 16
      %v2779 = vrot.slane %v2777, 4
      %v2780 = vshll.u32 %v2476, 16
      %v2782 = vrot.slane %v2780, 5
      %v2783 = vor.u32 %v2779, %v2782
      %v2784 = vrot.slane %v2783, 4
      %v2786 = vshll.u32 %v2477, 16
      %v2788 = vrot.slane %v2786, 5
      %v2789 = vsel %vm705, %v2784, %v2788
      %v2790 = vshrl.u32 %v2477, 16
      %v2792 = vrot.slane %v2790, 4
      %v2793 = vor.u32 %v2792, %v2788
      %v2794 = vrot.slane %v2793, 4
      %v2796 = vshll.u32 %v2478, 16
      %v2798 = vrot.slane %v2796, 5
      %v2799 = vsel %vm705, %v2794, %v2798
      %v2801 = vshrl.u32 %v2479, 16
      %v2803 = vrot.slane %v2801, 4
      %v2804 = vshll.u32 %v2479, 16
      %v2806 = vrot.slane %v2804, 5
      %v2807 = vor.u32 %v2803, %v2806
      %v2808 = vrot.slane %v2807, 4
      %v2810 = vshll.u32 %v2480, 16
      %v2812 = vrot.slane %v2810, 5
      %v2813 = vsel %vm705, %v2808, %v2812
      %v2814 = vshrl.u32 %v2480, 16
      %v2816 = vrot.slane %v2814, 4
      %v2817 = vor.u32 %v2816, %v2812
      %v2818 = vrot.slane %v2817, 4
      %v2820 = vshll.u32 %v2481, 16
      %v2822 = vrot.slane %v2820, 5
      %v2823 = vsel %vm705, %v2818, %v2822
      %v2825 = vshrl.u32 %v2482, 16
      %v2827 = vrot.slane %v2825, 4
      %v2828 = vshll.u32 %v2482, 16
      %v2830 = vrot.slane %v2828, 5
      %v2831 = vor.u32 %v2827, %v2830
      %v2832 = vrot.slane %v2831, 4
      %v2834 = vshll.u32 %v2483, 16
      %v2836 = vrot.slane %v2834, 5
      %v2837 = vsel %vm705, %v2832, %v2836
      %v2838 = vshrl.u32 %v2483, 16
      %v2840 = vrot.slane %v2838, 4
      %v2841 = vor.u32 %v2840, %v2836
      %v2842 = vrot.slane %v2841, 4
      %v2844 = vshll.u32 %v2484, 16
      %v2846 = vrot.slane %v2844, 5
      %v2847 = vsel %vm705, %v2842, %v2846
      %v2849 = vshrl.u32 %v2485, 16
      %v2851 = vrot.slane %v2849, 4
      %v2852 = vshll.u32 %v2485, 16
      %v2854 = vrot.slane %v2852, 5
      %v2855 = vor.u32 %v2851, %v2854
      %v2856 = vrot.slane %v2855, 4
      %v2858 = vshll.u32 %v2486, 16
      %v2860 = vrot.slane %v2858, 5
      %v2861 = vsel %vm705, %v2856, %v2860
      %v2862 = vshrl.u32 %v2486, 16
      %v2864 = vrot.slane %v2862, 4
      %v2865 = vor.u32 %v2864, %v2860
      %v2866 = vrot.slane %v2865, 4
      %v2868 = vshll.u32 %v2487, 16
      %v2870 = vrot.slane %v2868, 5
      %v2871 = vsel %vm705, %v2866, %v2870
      %v2872 = vld [vmem:[#allocation2] sm:$0xff]
      %v2873 = vld [vmem:[#allocation2 + $0x8] sm:$0xff]
      %v2874 = vld [vmem:[#allocation2 + $0x10] sm:$0xff]
      %v2875 = vld [vmem:[#allocation2 + $0x18] sm:$0xff]
      %v2876 = vld [vmem:[#allocation2 + $0x20] sm:$0xff]
      %v2877 = vld [vmem:[#allocation2 + $0x28] sm:$0xff]
      %v2878 = vld [vmem:[#allocation2 + $0x30] sm:$0xff]
      %v2879 = vld [vmem:[#allocation2 + $0x38] sm:$0xff]
      %v2880 = vld [vmem:[#allocation2 + $0x40] sm:$0xff]
      %v2881 = vld [vmem:[#allocation2 + $0x48] sm:$0xff]
      %v2882 = vld [vmem:[#allocation2 + $0x50] sm:$0xff]
      %v2883 = vld [vmem:[#allocation2 + $0x58] sm:$0xff]
      %v2884 = vld [vmem:[#allocation2 + $0x60] sm:$0xff]
      %v2885 = vld [vmem:[#allocation2 + $0x68] sm:$0xff]
      %v2886 = vld [vmem:[#allocation2 + $0x70] sm:$0xff]
      %v2887 = vld [vmem:[#allocation2 + $0x78] sm:$0xff]
      %v2888 = vld [vmem:[#allocation2 + $0x80] sm:$0xff]
      %v2889 = vld [vmem:[#allocation2 + $0x88] sm:$0xff]
      %v2890 = vld [vmem:[#allocation2 + $0x90] sm:$0xff]
      %v2891 = vld [vmem:[#allocation2 + $0x98] sm:$0xff]
      %v2892 = vld [vmem:[#allocation2 + $0xa0] sm:$0xff]
      %v2893 = vld [vmem:[#allocation2 + $0xa8] sm:$0xff]
      %v2894 = vld [vmem:[#allocation2 + $0xb0] sm:$0xff]
      %v2895 = vld [vmem:[#allocation2 + $0xb8] sm:$0xff]
      %v2896 = vld [vmem:[#allocation2 + $0xc0] sm:$0xff]
      %v2897 = vld [vmem:[#allocation2 + $0xc8] sm:$0xff]
      %v2898 = vld [vmem:[#allocation2 + $0xd0] sm:$0xff]
      %v2899 = vld [vmem:[#allocation2 + $0xd8] sm:$0xff]
      %v2900 = vld [vmem:[#allocation2 + $0xe0] sm:$0xff]
      %v2901 = vld [vmem:[#allocation2 + $0xe8] sm:$0xff]
      %v2902 = vld [vmem:[#allocation2 + $0xf0] sm:$0xff]
      %v2903 = vld [vmem:[#allocation2 + $0xf8] sm:$0xff]
      %s2904 = scalar_lea.vmem %s1, 8
      %v2905 = vld [vmem:[%s2904] sm:$0x3]
      %v2906 = vunpack.c.l.b16 %v2501
      %v2907 = vunpack.c.l.b16 %v2511
      %v2908 = vunpack.c.l.b16 %v2525
      %v2909 = vunpack.c.l.b16 %v2535
      %v2910 = vunpack.c.l.b16 %v2549
      %v2911 = vunpack.c.l.b16 %v2559
      %v2912 = vunpack.c.l.b16 %v2573
      %v2913 = vunpack.c.l.b16 %v2583
      %v2914 = vunpack.c.l.b16 %v2597
      %v2915 = vunpack.c.l.b16 %v2607
      %v2916 = vunpack.c.l.b16 %v2621
      %v2917 = vunpack.c.l.b16 %v2631
      %v2918 = vunpack.c.l.b16 %v2645
      %v2919 = vunpack.c.l.b16 %v2655
      %v2920 = vunpack.c.l.b16 %v2669
      %v2921 = vunpack.c.l.b16 %v2679
      %v2922 = vunpack.c.l.b16 %v2693
      %v2923 = vunpack.c.l.b16 %v2703
      %v2924 = vunpack.c.l.b16 %v2717
      %v2925 = vunpack.c.l.b16 %v2727
      %v2926 = vunpack.c.l.b16 %v2741
      %v2927 = vunpack.c.l.b16 %v2751
      %v2928 = vunpack.c.l.b16 %v2765
      %v2929 = vunpack.c.l.b16 %v2775
      %v2930 = vunpack.c.l.b16 %v2789
      %v2931 = vunpack.c.l.b16 %v2799
      %v2932 = vunpack.c.l.b16 %v2813
      %v2933 = vunpack.c.l.b16 %v2823
      %v2934 = vunpack.c.l.b16 %v2837
      %v2935 = vunpack.c.l.b16 %v2847
      %v2936 = vunpack.c.l.b16 %v2861
      %v2937 = vunpack.c.l.b16 %v2871
      %v2938 = vpack.c.b16 %v2907, %v2906
      %v2939 = vpack.c.b16 %v2909, %v2908
      %v2940 = vpack.c.b16 %v2911, %v2910
      %v2941 = vpack.c.b16 %v2913, %v2912
      %v2942 = vpack.c.b16 %v2915, %v2914
      %v2943 = vpack.c.b16 %v2917, %v2916
      %v2944 = vpack.c.b16 %v2919, %v2918
      %v2945 = vpack.c.b16 %v2921, %v2920
      %v2946 = vpack.c.b16 %v2923, %v2922
      %v2947 = vpack.c.b16 %v2925, %v2924
      %v2948 = vpack.c.b16 %v2927, %v2926
      %v2949 = vpack.c.b16 %v2929, %v2928
      %v2950 = vpack.c.b16 %v2931, %v2930
      %v2951 = vpack.c.b16 %v2933, %v2932
      %v2952 = vpack.c.b16 %v2935, %v2934
      %v2953 = vpack.c.b16 %v2937, %v2936
      %v2955 = vsel %vm377, %v2938, 0
      %v2958 = vsel %vm377, %v2939, 0
      %v2961 = vsel %vm377, %v2940, 0
      %v2964 = vsel %vm377, %v2941, 0
      %v2967 = vsel %vm377, %v2942, 0
      %v2970 = vsel %vm377, %v2943, 0
      %v2973 = vsel %vm377, %v2944, 0
      %v2976 = vsel %vm377, %v2945, 0
      %v2979 = vsel %vm377, %v2946, 0
      %v2982 = vsel %vm377, %v2947, 0
      %v2985 = vsel %vm377, %v2948, 0
      %v2988 = vsel %vm377, %v2949, 0
      %v2991 = vsel %vm377, %v2950, 0
      %v2994 = vsel %vm377, %v2951, 0
      %v2997 = vsel %vm377, %v2952, 0
      %v3000 = vsel %vm377, %v2953, 0
      %v3003 = vsel %vm426, %v2905, 0
      %3005 = vmatprep.subr.bf16.mxu0 0
      %3006 = vmatpush1.bf16.msra.mxu0 0
      %3007 = vmatprep.subr.bf16.mxu0 0
      %3008 = vmatpush1.bf16.msra.mxu0 0
      %3009 = vmatprep.subr.bf16.mxu0 0
      %3010 = vmatpush1.bf16.msra.mxu0 0
      %3011 = vmatprep.subr.bf16.mxu0 0
      %3012 = vmatpush1.bf16.msra.mxu0 0
      %3013 = vmatprep.subr.bf16.mxu0 0
      %3014 = vmatpush1.bf16.msra.mxu0 0
      %3015 = vmatprep.subr.bf16.mxu0 0
      %3016 = vmatpush1.bf16.msra.mxu0 0
      %3017 = vmatprep.subr.bf16.mxu0 0
      %3018 = vmatpush1.bf16.msra.mxu0 0
      %3019 = vmatprep.subr.bf16.mxu0 0
      %3020 = vmatpush1.bf16.msra.mxu0 %v3003
      %3021 = vmatprep.subr.bf16.mxu0 0
      %3022 = vmatpush2.bf16.msra.mxu0 0
      %3023 = vmatprep.subr.bf16.mxu0 0
      %3024 = vmatpush2.bf16.msra.mxu0 0
      %3025 = vmatprep.subr.bf16.mxu0 0
      %3026 = vmatpush2.bf16.msra.mxu0 0
      %3027 = vmatprep.subr.bf16.mxu0 0
      %3028 = vmatpush2.bf16.msra.mxu0 0
      %3029 = vmatprep.subr.bf16.mxu0 0
      %3030 = vmatpush2.bf16.msra.mxu0 0
      %3031 = vmatprep.subr.bf16.mxu0 0
      %3032 = vmatpush2.bf16.msra.mxu0 0
      %3033 = vmatprep.subr.bf16.mxu0 0
      %3034 = vmatpush2.bf16.msra.mxu0 0
      %3035 = vmatprep.subr.bf16.mxu0 0
      %3036 = vmatpush2.bf16.msra.mxu0 0
      %3037 = vmatprep.mubr.bf16.mxu0 0
      %3038 = vmatmul.mubr.bf16.gmra.mxu0 %v2955
      %v3039 = vpop.f32.mrf.mxu0
      %v3040 = vadd.f32 0.0, %v3039
      %v3041 = vpop.f32.mrf.mxu0
      %v3042 = vpop.f32.mrf.mxu0
      %v3043 = vadd.f32 0.0, %v3042
      %v3044 = vpop.f32.mrf.mxu0
      %3045 = vmatprep.mubr.bf16.mxu0 0
      %3046 = vmatmul.mubr.bf16.gmra.mxu0 %v2958
      %v3047 = vpop.f32.mrf.mxu0
      %v3048 = vadd.f32 0.0, %v3047
      %v3049 = vpop.f32.mrf.mxu0
      %v3050 = vpop.f32.mrf.mxu0
      %v3051 = vadd.f32 0.0, %v3050
      %v3052 = vpop.f32.mrf.mxu0
      %3053 = vmatprep.mubr.bf16.mxu0 0
      %3054 = vmatmul.mubr.bf16.gmra.mxu0 %v2961
      %v3055 = vpop.f32.mrf.mxu0
      %v3056 = vadd.f32 0.0, %v3055
      %v3057 = vpop.f32.mrf.mxu0
      %v3058 = vpop.f32.mrf.mxu0
      %v3059 = vadd.f32 0.0, %v3058
      %v3060 = vpop.f32.mrf.mxu0
      %3061 = vmatprep.mubr.bf16.mxu0 0
      %3062 = vmatmul.mubr.bf16.gmra.mxu0 %v2964
      %v3063 = vpop.f32.mrf.mxu0
      %v3064 = vadd.f32 0.0, %v3063
      %v3065 = vpop.f32.mrf.mxu0
      %v3066 = vpop.f32.mrf.mxu0
      %v3067 = vadd.f32 0.0, %v3066
      %v3068 = vpop.f32.mrf.mxu0
      %3069 = vmatprep.mubr.bf16.mxu0 0
      %3070 = vmatmul.mubr.bf16.gmra.mxu0 %v2967
      %v3071 = vpop.f32.mrf.mxu0
      %v3072 = vadd.f32 0.0, %v3071
      %v3073 = vpop.f32.mrf.mxu0
      %v3074 = vpop.f32.mrf.mxu0
      %v3075 = vadd.f32 0.0, %v3074
      %v3076 = vpop.f32.mrf.mxu0
      %3077 = vmatprep.mubr.bf16.mxu0 0
      %3078 = vmatmul.mubr.bf16.gmra.mxu0 %v2970
      %v3079 = vpop.f32.mrf.mxu0
      %v3080 = vadd.f32 0.0, %v3079
      %v3081 = vpop.f32.mrf.mxu0
      %v3082 = vpop.f32.mrf.mxu0
      %v3083 = vadd.f32 0.0, %v3082
      %v3084 = vpop.f32.mrf.mxu0
      %3085 = vmatprep.mubr.bf16.mxu0 0
      %3086 = vmatmul.mubr.bf16.gmra.mxu0 %v2973
      %v3087 = vpop.f32.mrf.mxu0
      %v3088 = vadd.f32 0.0, %v3087
      %v3089 = vpop.f32.mrf.mxu0
      %v3090 = vpop.f32.mrf.mxu0
      %v3091 = vadd.f32 0.0, %v3090
      %v3092 = vpop.f32.mrf.mxu0
      %3093 = vmatprep.mubr.bf16.mxu0 0
      %3094 = vmatmul.mubr.bf16.gmra.mxu0 %v2976
      %v3095 = vpop.f32.mrf.mxu0
      %v3096 = vadd.f32 0.0, %v3095
      %v3097 = vpop.f32.mrf.mxu0
      %v3098 = vpop.f32.mrf.mxu0
      %v3099 = vadd.f32 0.0, %v3098
      %v3100 = vpop.f32.mrf.mxu0
      %3101 = vmatprep.mubr.bf16.mxu0 0
      %3102 = vmatmul.mubr.bf16.gmra.mxu0 %v2979
      %v3103 = vpop.f32.mrf.mxu0
      %v3104 = vadd.f32 0.0, %v3103
      %v3105 = vpop.f32.mrf.mxu0
      %v3106 = vpop.f32.mrf.mxu0
      %v3107 = vadd.f32 0.0, %v3106
      %v3108 = vpop.f32.mrf.mxu0
      %3109 = vmatprep.mubr.bf16.mxu0 0
      %3110 = vmatmul.mubr.bf16.gmra.mxu0 %v2982
      %v3111 = vpop.f32.mrf.mxu0
      %v3112 = vadd.f32 0.0, %v3111
      %v3113 = vpop.f32.mrf.mxu0
      %v3114 = vpop.f32.mrf.mxu0
      %v3115 = vadd.f32 0.0, %v3114
      %v3116 = vpop.f32.mrf.mxu0
      %3117 = vmatprep.mubr.bf16.mxu0 0
      %3118 = vmatmul.mubr.bf16.gmra.mxu0 %v2985
      %v3119 = vpop.f32.mrf.mxu0
      %v3120 = vadd.f32 0.0, %v3119
      %v3121 = vpop.f32.mrf.mxu0
      %v3122 = vpop.f32.mrf.mxu0
      %v3123 = vadd.f32 0.0, %v3122
      %v3124 = vpop.f32.mrf.mxu0
      %3125 = vmatprep.mubr.bf16.mxu0 0
      %3126 = vmatmul.mubr.bf16.gmra.mxu0 %v2988
      %v3127 = vpop.f32.mrf.mxu0
      %v3128 = vadd.f32 0.0, %v3127
      %v3129 = vpop.f32.mrf.mxu0
      %v3130 = vpop.f32.mrf.mxu0
      %v3131 = vadd.f32 0.0, %v3130
      %v3132 = vpop.f32.mrf.mxu0
      %3133 = vmatprep.mubr.bf16.mxu0 0
      %3134 = vmatmul.mubr.bf16.gmra.mxu0 %v2991
      %v3135 = vpop.f32.mrf.mxu0
      %v3136 = vadd.f32 0.0, %v3135
      %v3137 = vpop.f32.mrf.mxu0
      %v3138 = vpop.f32.mrf.mxu0
      %v3139 = vadd.f32 0.0, %v3138
      %v3140 = vpop.f32.mrf.mxu0
      %3141 = vmatprep.mubr.bf16.mxu0 0
      %3142 = vmatmul.mubr.bf16.gmra.mxu0 %v2994
      %v3143 = vpop.f32.mrf.mxu0
      %v3144 = vadd.f32 0.0, %v3143
      %v3145 = vpop.f32.mrf.mxu0
      %v3146 = vpop.f32.mrf.mxu0
      %v3147 = vadd.f32 0.0, %v3146
      %v3148 = vpop.f32.mrf.mxu0
      %3149 = vmatprep.mubr.bf16.mxu0 0
      %3150 = vmatmul.mubr.bf16.gmra.mxu0 %v2997
      %v3151 = vpop.f32.mrf.mxu0
      %v3152 = vadd.f32 0.0, %v3151
      %v3153 = vpop.f32.mrf.mxu0
      %v3154 = vpop.f32.mrf.mxu0
      %v3155 = vadd.f32 0.0, %v3154
      %v3156 = vpop.f32.mrf.mxu0
      %3157 = vmatprep.mubr.bf16.mxu0 0
      %3158 = vmatmul.mubr.bf16.gmra.mxu0 %v3000
      %v3159 = vpop.f32.mrf.mxu0
      %v3160 = vadd.f32 0.0, %v3159
      %v3161 = vpop.f32.mrf.mxu0
      %v3162 = vpop.f32.mrf.mxu0
      %v3163 = vadd.f32 0.0, %v3162
      %v3164 = vpop.f32.mrf.mxu0
      %3165 = vdwg.mxu0
      %v3166 = vadd.f32 %v2872, %v3040
      %v3167 = vadd.f32 %v2873, %v3043
      %v3168 = vadd.f32 %v2874, %v3048
      %v3169 = vadd.f32 %v2875, %v3051
      %v3170 = vadd.f32 %v2876, %v3056
      %v3171 = vadd.f32 %v2877, %v3059
      %v3172 = vadd.f32 %v2878, %v3064
      %v3173 = vadd.f32 %v2879, %v3067
      %v3174 = vadd.f32 %v2880, %v3072
      %v3175 = vadd.f32 %v2881, %v3075
      %v3176 = vadd.f32 %v2882, %v3080
      %v3177 = vadd.f32 %v2883, %v3083
      %v3178 = vadd.f32 %v2884, %v3088
      %v3179 = vadd.f32 %v2885, %v3091
      %v3180 = vadd.f32 %v2886, %v3096
      %v3181 = vadd.f32 %v2887, %v3099
      %v3182 = vadd.f32 %v2888, %v3104
      %v3183 = vadd.f32 %v2889, %v3107
      %v3184 = vadd.f32 %v2890, %v3112
      %v3185 = vadd.f32 %v2891, %v3115
      %v3186 = vadd.f32 %v2892, %v3120
      %v3187 = vadd.f32 %v2893, %v3123
      %v3188 = vadd.f32 %v2894, %v3128
      %v3189 = vadd.f32 %v2895, %v3131
      %v3190 = vadd.f32 %v2896, %v3136
      %v3191 = vadd.f32 %v2897, %v3139
      %v3192 = vadd.f32 %v2898, %v3144
      %v3193 = vadd.f32 %v2899, %v3147
      %v3194 = vadd.f32 %v2900, %v3152
      %v3195 = vadd.f32 %v2901, %v3155
      %v3196 = vadd.f32 %v2902, %v3160
      %v3197 = vadd.f32 %v2903, %v3163
      %3198 = vst.msk [vmem:[#allocation2] sm:$0xff] %vm199, %v3166
      %3199 = vst.msk [vmem:[#allocation2 + $0x8] sm:$0xff] %vm199, %v3167
      %3200 = vst.msk [vmem:[#allocation2 + $0x10] sm:$0xff] %vm199, %v3168
      %3201 = vst.msk [vmem:[#allocation2 + $0x18] sm:$0xff] %vm199, %v3169
      %3202 = vst.msk [vmem:[#allocation2 + $0x20] sm:$0xff] %vm199, %v3170
      %3203 = vst.msk [vmem:[#allocation2 + $0x28] sm:$0xff] %vm199, %v3171
      %3204 = vst.msk [vmem:[#allocation2 + $0x30] sm:$0xff] %vm199, %v3172
      %3205 = vst.msk [vmem:[#allocation2 + $0x38] sm:$0xff] %vm199, %v3173
      %3206 = vst.msk [vmem:[#allocation2 + $0x40] sm:$0xff] %vm199, %v3174
      %3207 = vst.msk [vmem:[#allocation2 + $0x48] sm:$0xff] %vm199, %v3175
      %3208 = vst.msk [vmem:[#allocation2 + $0x50] sm:$0xff] %vm199, %v3176
      %3209 = vst.msk [vmem:[#allocation2 + $0x58] sm:$0xff] %vm199, %v3177
      %3210 = vst.msk [vmem:[#allocation2 + $0x60] sm:$0xff] %vm199, %v3178
      %3211 = vst.msk [vmem:[#allocation2 + $0x68] sm:$0xff] %vm199, %v3179
      %3212 = vst.msk [vmem:[#allocation2 + $0x70] sm:$0xff] %vm199, %v3180
      %3213 = vst.msk [vmem:[#allocation2 + $0x78] sm:$0xff] %vm199, %v3181
      %3214 = vst.msk [vmem:[#allocation2 + $0x80] sm:$0xff] %vm199, %v3182
      %3215 = vst.msk [vmem:[#allocation2 + $0x88] sm:$0xff] %vm199, %v3183
      %3216 = vst.msk [vmem:[#allocation2 + $0x90] sm:$0xff] %vm199, %v3184
      %3217 = vst.msk [vmem:[#allocation2 + $0x98] sm:$0xff] %vm199, %v3185
      %3218 = vst.msk [vmem:[#allocation2 + $0xa0] sm:$0xff] %vm199, %v3186
      %3219 = vst.msk [vmem:[#allocation2 + $0xa8] sm:$0xff] %vm199, %v3187
      %3220 = vst.msk [vmem:[#allocation2 + $0xb0] sm:$0xff] %vm199, %v3188
      %3221 = vst.msk [vmem:[#allocation2 + $0xb8] sm:$0xff] %vm199, %v3189
      %3222 = vst.msk [vmem:[#allocation2 + $0xc0] sm:$0xff] %vm199, %v3190
      %3223 = vst.msk [vmem:[#allocation2 + $0xc8] sm:$0xff] %vm199, %v3191
      %3224 = vst.msk [vmem:[#allocation2 + $0xd0] sm:$0xff] %vm199, %v3192
      %3225 = vst.msk [vmem:[#allocation2 + $0xd8] sm:$0xff] %vm199, %v3193
      %3226 = vst.msk [vmem:[#allocation2 + $0xe0] sm:$0xff] %vm199, %v3194
      %3227 = vst.msk [vmem:[#allocation2 + $0xe8] sm:$0xff] %vm199, %v3195
      %3228 = vst.msk [vmem:[#allocation2 + $0xf0] sm:$0xff] %vm199, %v3196
      %3229 = vst.msk [vmem:[#allocation2 + $0xf8] sm:$0xff] %vm199, %v3197
      %v3230 = vld [vmem:[%s2017] sm:$0xe]
      %v3231 = vld [vmem:[%s2017 + $0x4] sm:$0xf]
      %v3232 = vld [vmem:[%s2017 + $0x8] sm:$0x1]
      %v3233 = vld [vmem:[%s2017 + $0xc] sm:$0xe]
      %v3234 = vld [vmem:[%s2017 + $0x10] sm:$0xf]
      %v3235 = vld [vmem:[%s2017 + $0x14] sm:$0x1]
      %v3236 = vld [vmem:[%s2017 + $0x18] sm:$0xe]
      %v3237 = vld [vmem:[%s2017 + $0x1c] sm:$0xf]
      %v3238 = vld [vmem:[%s2017 + $0x20] sm:$0x1]
      %v3239 = vld [vmem:[%s2017 + $0x24] sm:$0xe]
      %v3240 = vld [vmem:[%s2017 + $0x28] sm:$0xf]
      %v3241 = vld [vmem:[%s2017 + $0x2c] sm:$0x1]
      %v3242 = vld [vmem:[%s2017 + $0x30] sm:$0xe]
      %v3243 = vld [vmem:[%s2017 + $0x34] sm:$0xf]
      %v3244 = vld [vmem:[%s2017 + $0x38] sm:$0x1]
      %v3245 = vld [vmem:[%s2017 + $0x3c] sm:$0xe]
      %v3246 = vld [vmem:[%s2017 + $0x40] sm:$0xf]
      %v3247 = vld [vmem:[%s2017 + $0x44] sm:$0x1]
      %v3248 = vld [vmem:[%s2017 + $0x48] sm:$0xe]
      %v3249 = vld [vmem:[%s2017 + $0x4c] sm:$0xf]
      %v3250 = vld [vmem:[%s2017 + $0x50] sm:$0x1]
      %v3251 = vld [vmem:[%s2017 + $0x54] sm:$0xe]
      %v3252 = vld [vmem:[%s2017 + $0x58] sm:$0xf]
      %v3253 = vld [vmem:[%s2017 + $0x5c] sm:$0x1]
      %v3254 = vld [vmem:[%s2017 + $0x60] sm:$0xe]
      %v3255 = vld [vmem:[%s2017 + $0x64] sm:$0xf]
      %v3256 = vld [vmem:[%s2017 + $0x68] sm:$0x1]
      %v3257 = vld [vmem:[%s2017 + $0x6c] sm:$0xe]
      %v3258 = vld [vmem:[%s2017 + $0x70] sm:$0xf]
      %v3259 = vld [vmem:[%s2017 + $0x74] sm:$0x1]
      %v3260 = vld [vmem:[%s2017 + $0x78] sm:$0xe]
      %v3261 = vld [vmem:[%s2017 + $0x7c] sm:$0xf]
      %v3262 = vld [vmem:[%s2017 + $0x80] sm:$0x1]
      %v3263 = vld [vmem:[%s2017 + $0x84] sm:$0xe]
      %v3264 = vld [vmem:[%s2017 + $0x88] sm:$0xf]
      %v3265 = vld [vmem:[%s2017 + $0x8c] sm:$0x1]
      %v3266 = vld [vmem:[%s2017 + $0x90] sm:$0xe]
      %v3267 = vld [vmem:[%s2017 + $0x94] sm:$0xf]
      %v3268 = vld [vmem:[%s2017 + $0x98] sm:$0x1]
      %v3269 = vld [vmem:[%s2017 + $0x9c] sm:$0xe]
      %v3270 = vld [vmem:[%s2017 + $0xa0] sm:$0xf]
      %v3271 = vld [vmem:[%s2017 + $0xa4] sm:$0x1]
      %v3272 = vld [vmem:[%s2017 + $0xa8] sm:$0xe]
      %v3273 = vld [vmem:[%s2017 + $0xac] sm:$0xf]
      %v3274 = vld [vmem:[%s2017 + $0xb0] sm:$0x1]
      %v3275 = vld [vmem:[%s2017 + $0xb4] sm:$0xe]
      %v3276 = vld [vmem:[%s2017 + $0xb8] sm:$0xf]
      %v3277 = vld [vmem:[%s2017 + $0xbc] sm:$0x1]
      %v3326 = vrot.slane %v3230, 5
      %v3327 = vrot.slane %v3326, 4
      %v3328 = vrot.slane %v3231, 5
      %v3329 = vsel %vm1546, %v3327, %v3328
      %v3330 = vrot.slane %v3328, 4
      %v3331 = vrot.slane %v3232, 5
      %v3332 = vsel %vm1546, %v3330, %v3331
      %v3333 = vrot.slane %v3233, 5
      %v3334 = vrot.slane %v3333, 4
      %v3335 = vrot.slane %v3234, 5
      %v3336 = vsel %vm1546, %v3334, %v3335
      %v3337 = vrot.slane %v3335, 4
      %v3338 = vrot.slane %v3235, 5
      %v3339 = vsel %vm1546, %v3337, %v3338
      %v3340 = vrot.slane %v3236, 5
      %v3341 = vrot.slane %v3340, 4
      %v3342 = vrot.slane %v3237, 5
      %v3343 = vsel %vm1546, %v3341, %v3342
      %v3344 = vrot.slane %v3342, 4
      %v3345 = vrot.slane %v3238, 5
      %v3346 = vsel %vm1546, %v3344, %v3345
      %v3347 = vrot.slane %v3239, 5
      %v3348 = vrot.slane %v3347, 4
      %v3349 = vrot.slane %v3240, 5
      %v3350 = vsel %vm1546, %v3348, %v3349
      %v3351 = vrot.slane %v3349, 4
      %v3352 = vrot.slane %v3241, 5
      %v3353 = vsel %vm1546, %v3351, %v3352
      %v3354 = vrot.slane %v3242, 5
      %v3355 = vrot.slane %v3354, 4
      %v3356 = vrot.slane %v3243, 5
      %v3357 = vsel %vm1546, %v3355, %v3356
      %v3358 = vrot.slane %v3356, 4
      %v3359 = vrot.slane %v3244, 5
      %v3360 = vsel %vm1546, %v3358, %v3359
      %v3361 = vrot.slane %v3245, 5
      %v3362 = vrot.slane %v3361, 4
      %v3363 = vrot.slane %v3246, 5
      %v3364 = vsel %vm1546, %v3362, %v3363
      %v3365 = vrot.slane %v3363, 4
      %v3366 = vrot.slane %v3247, 5
      %v3367 = vsel %vm1546, %v3365, %v3366
      %v3368 = vrot.slane %v3248, 5
      %v3369 = vrot.slane %v3368, 4
      %v3370 = vrot.slane %v3249, 5
      %v3371 = vsel %vm1546, %v3369, %v3370
      %v3372 = vrot.slane %v3370, 4
      %v3373 = vrot.slane %v3250, 5
      %v3374 = vsel %vm1546, %v3372, %v3373
      %v3375 = vrot.slane %v3251, 5
      %v3376 = vrot.slane %v3375, 4
      %v3377 = vrot.slane %v3252, 5
      %v3378 = vsel %vm1546, %v3376, %v3377
      %v3379 = vrot.slane %v3377, 4
      %v3380 = vrot.slane %v3253, 5
      %v3381 = vsel %vm1546, %v3379, %v3380
      %v3382 = vrot.slane %v3254, 5
      %v3383 = vrot.slane %v3382, 4
      %v3384 = vrot.slane %v3255, 5
      %v3385 = vsel %vm1546, %v3383, %v3384
      %v3386 = vrot.slane %v3384, 4
      %v3387 = vrot.slane %v3256, 5
      %v3388 = vsel %vm1546, %v3386, %v3387
      %v3389 = vrot.slane %v3257, 5
      %v3390 = vrot.slane %v3389, 4
      %v3391 = vrot.slane %v3258, 5
      %v3392 = vsel %vm1546, %v3390, %v3391
      %v3393 = vrot.slane %v3391, 4
      %v3394 = vrot.slane %v3259, 5
      %v3395 = vsel %vm1546, %v3393, %v3394
      %v3396 = vrot.slane %v3260, 5
      %v3397 = vrot.slane %v3396, 4
      %v3398 = vrot.slane %v3261, 5
      %v3399 = vsel %vm1546, %v3397, %v3398
      %v3400 = vrot.slane %v3398, 4
      %v3401 = vrot.slane %v3262, 5
      %v3402 = vsel %vm1546, %v3400, %v3401
      %v3403 = vrot.slane %v3263, 5
      %v3404 = vrot.slane %v3403, 4
      %v3405 = vrot.slane %v3264, 5
      %v3406 = vsel %vm1546, %v3404, %v3405
      %v3407 = vrot.slane %v3405, 4
      %v3408 = vrot.slane %v3265, 5
      %v3409 = vsel %vm1546, %v3407, %v3408
      %v3410 = vrot.slane %v3266, 5
      %v3411 = vrot.slane %v3410, 4
      %v3412 = vrot.slane %v3267, 5
      %v3413 = vsel %vm1546, %v3411, %v3412
      %v3414 = vrot.slane %v3412, 4
      %v3415 = vrot.slane %v3268, 5
      %v3416 = vsel %vm1546, %v3414, %v3415
      %v3417 = vrot.slane %v3269, 5
      %v3418 = vrot.slane %v3417, 4
      %v3419 = vrot.slane %v3270, 5
      %v3420 = vsel %vm1546, %v3418, %v3419
      %v3421 = vrot.slane %v3419, 4
      %v3422 = vrot.slane %v3271, 5
      %v3423 = vsel %vm1546, %v3421, %v3422
      %v3424 = vrot.slane %v3272, 5
      %v3425 = vrot.slane %v3424, 4
      %v3426 = vrot.slane %v3273, 5
      %v3427 = vsel %vm1546, %v3425, %v3426
      %v3428 = vrot.slane %v3426, 4
      %v3429 = vrot.slane %v3274, 5
      %v3430 = vsel %vm1546, %v3428, %v3429
      %v3431 = vrot.slane %v3275, 5
      %v3432 = vrot.slane %v3431, 4
      %v3433 = vrot.slane %v3276, 5
      %v3434 = vsel %vm1546, %v3432, %v3433
      %v3435 = vrot.slane %v3433, 4
      %v3436 = vrot.slane %v3277, 5
      %v3437 = vsel %vm1546, %v3435, %v3436
      %v3438 = vld [vmem:[#allocation2] sm:$0xff]
      %v3439 = vld [vmem:[#allocation2 + $0x8] sm:$0xff]
      %v3440 = vld [vmem:[#allocation2 + $0x10] sm:$0xff]
      %v3441 = vld [vmem:[#allocation2 + $0x18] sm:$0xff]
      %v3442 = vld [vmem:[#allocation2 + $0x20] sm:$0xff]
      %v3443 = vld [vmem:[#allocation2 + $0x28] sm:$0xff]
      %v3444 = vld [vmem:[#allocation2 + $0x30] sm:$0xff]
      %v3445 = vld [vmem:[#allocation2 + $0x38] sm:$0xff]
      %v3446 = vld [vmem:[#allocation2 + $0x40] sm:$0xff]
      %v3447 = vld [vmem:[#allocation2 + $0x48] sm:$0xff]
      %v3448 = vld [vmem:[#allocation2 + $0x50] sm:$0xff]
      %v3449 = vld [vmem:[#allocation2 + $0x58] sm:$0xff]
      %v3450 = vld [vmem:[#allocation2 + $0x60] sm:$0xff]
      %v3451 = vld [vmem:[#allocation2 + $0x68] sm:$0xff]
      %v3452 = vld [vmem:[#allocation2 + $0x70] sm:$0xff]
      %v3453 = vld [vmem:[#allocation2 + $0x78] sm:$0xff]
      %v3454 = vld [vmem:[#allocation2 + $0x80] sm:$0xff]
      %v3455 = vld [vmem:[#allocation2 + $0x88] sm:$0xff]
      %v3456 = vld [vmem:[#allocation2 + $0x90] sm:$0xff]
      %v3457 = vld [vmem:[#allocation2 + $0x98] sm:$0xff]
      %v3458 = vld [vmem:[#allocation2 + $0xa0] sm:$0xff]
      %v3459 = vld [vmem:[#allocation2 + $0xa8] sm:$0xff]
      %v3460 = vld [vmem:[#allocation2 + $0xb0] sm:$0xff]
      %v3461 = vld [vmem:[#allocation2 + $0xb8] sm:$0xff]
      %v3462 = vld [vmem:[#allocation2 + $0xc0] sm:$0xff]
      %v3463 = vld [vmem:[#allocation2 + $0xc8] sm:$0xff]
      %v3464 = vld [vmem:[#allocation2 + $0xd0] sm:$0xff]
      %v3465 = vld [vmem:[#allocation2 + $0xd8] sm:$0xff]
      %v3466 = vld [vmem:[#allocation2 + $0xe0] sm:$0xff]
      %v3467 = vld [vmem:[#allocation2 + $0xe8] sm:$0xff]
      %v3468 = vld [vmem:[#allocation2 + $0xf0] sm:$0xff]
      %v3469 = vld [vmem:[#allocation2 + $0xf8] sm:$0xff]
      %s3470 = scalar_lea.vmem %s1, 10
      %v3471 = vld [vmem:[%s3470] sm:$0x3]
      %v3472 = vunpack.c.l.b16 %v3329
      %v3473 = vunpack.c.l.b16 %v3332
      %v3474 = vunpack.c.l.b16 %v3336
      %v3475 = vunpack.c.l.b16 %v3339
      %v3476 = vunpack.c.l.b16 %v3343
      %v3477 = vunpack.c.l.b16 %v3346
      %v3478 = vunpack.c.l.b16 %v3350
      %v3479 = vunpack.c.l.b16 %v3353
      %v3480 = vunpack.c.l.b16 %v3357
      %v3481 = vunpack.c.l.b16 %v3360
      %v3482 = vunpack.c.l.b16 %v3364
      %v3483 = vunpack.c.l.b16 %v3367
      %v3484 = vunpack.c.l.b16 %v3371
      %v3485 = vunpack.c.l.b16 %v3374
      %v3486 = vunpack.c.l.b16 %v3378
      %v3487 = vunpack.c.l.b16 %v3381
      %v3488 = vunpack.c.l.b16 %v3385
      %v3489 = vunpack.c.l.b16 %v3388
      %v3490 = vunpack.c.l.b16 %v3392
      %v3491 = vunpack.c.l.b16 %v3395
      %v3492 = vunpack.c.l.b16 %v3399
      %v3493 = vunpack.c.l.b16 %v3402
      %v3494 = vunpack.c.l.b16 %v3406
      %v3495 = vunpack.c.l.b16 %v3409
      %v3496 = vunpack.c.l.b16 %v3413
      %v3497 = vunpack.c.l.b16 %v3416
      %v3498 = vunpack.c.l.b16 %v3420
      %v3499 = vunpack.c.l.b16 %v3423
      %v3500 = vunpack.c.l.b16 %v3427
      %v3501 = vunpack.c.l.b16 %v3430
      %v3502 = vunpack.c.l.b16 %v3434
      %v3503 = vunpack.c.l.b16 %v3437
      %v3504 = vpack.c.b16 %v3473, %v3472
      %v3505 = vpack.c.b16 %v3475, %v3474
      %v3506 = vpack.c.b16 %v3477, %v3476
      %v3507 = vpack.c.b16 %v3479, %v3478
      %v3508 = vpack.c.b16 %v3481, %v3480
      %v3509 = vpack.c.b16 %v3483, %v3482
      %v3510 = vpack.c.b16 %v3485, %v3484
      %v3511 = vpack.c.b16 %v3487, %v3486
      %v3512 = vpack.c.b16 %v3489, %v3488
      %v3513 = vpack.c.b16 %v3491, %v3490
      %v3514 = vpack.c.b16 %v3493, %v3492
      %v3515 = vpack.c.b16 %v3495, %v3494
      %v3516 = vpack.c.b16 %v3497, %v3496
      %v3517 = vpack.c.b16 %v3499, %v3498
      %v3518 = vpack.c.b16 %v3501, %v3500
      %v3519 = vpack.c.b16 %v3503, %v3502
      %v3521 = vsel %vm377, %v3504, 0
      %v3524 = vsel %vm377, %v3505, 0
      %v3527 = vsel %vm377, %v3506, 0
      %v3530 = vsel %vm377, %v3507, 0
      %v3533 = vsel %vm377, %v3508, 0
      %v3536 = vsel %vm377, %v3509, 0
      %v3539 = vsel %vm377, %v3510, 0
      %v3542 = vsel %vm377, %v3511, 0
      %v3545 = vsel %vm377, %v3512, 0
      %v3548 = vsel %vm377, %v3513, 0
      %v3551 = vsel %vm377, %v3514, 0
      %v3554 = vsel %vm377, %v3515, 0
      %v3557 = vsel %vm377, %v3516, 0
      %v3560 = vsel %vm377, %v3517, 0
      %v3563 = vsel %vm377, %v3518, 0
      %v3566 = vsel %vm377, %v3519, 0
      %v3569 = vsel %vm426, %v3471, 0
      %3571 = vmatprep.subr.bf16.mxu0 0
      %3572 = vmatpush1.bf16.msra.mxu0 0
      %3573 = vmatprep.subr.bf16.mxu0 0
      %3574 = vmatpush1.bf16.msra.mxu0 0
      %3575 = vmatprep.subr.bf16.mxu0 0
      %3576 = vmatpush1.bf16.msra.mxu0 0
      %3577 = vmatprep.subr.bf16.mxu0 0
      %3578 = vmatpush1.bf16.msra.mxu0 0
      %3579 = vmatprep.subr.bf16.mxu0 0
      %3580 = vmatpush1.bf16.msra.mxu0 0
      %3581 = vmatprep.subr.bf16.mxu0 0
      %3582 = vmatpush1.bf16.msra.mxu0 0
      %3583 = vmatprep.subr.bf16.mxu0 0
      %3584 = vmatpush1.bf16.msra.mxu0 0
      %3585 = vmatprep.subr.bf16.mxu0 0
      %3586 = vmatpush1.bf16.msra.mxu0 %v3569
      %3587 = vmatprep.subr.bf16.mxu0 0
      %3588 = vmatpush2.bf16.msra.mxu0 0
      %3589 = vmatprep.subr.bf16.mxu0 0
      %3590 = vmatpush2.bf16.msra.mxu0 0
      %3591 = vmatprep.subr.bf16.mxu0 0
      %3592 = vmatpush2.bf16.msra.mxu0 0
      %3593 = vmatprep.subr.bf16.mxu0 0
      %3594 = vmatpush2.bf16.msra.mxu0 0
      %3595 = vmatprep.subr.bf16.mxu0 0
      %3596 = vmatpush2.bf16.msra.mxu0 0
      %3597 = vmatprep.subr.bf16.mxu0 0
      %3598 = vmatpush2.bf16.msra.mxu0 0
      %3599 = vmatprep.subr.bf16.mxu0 0
      %3600 = vmatpush2.bf16.msra.mxu0 0
      %3601 = vmatprep.subr.bf16.mxu0 0
      %3602 = vmatpush2.bf16.msra.mxu0 0
      %3603 = vmatprep.mubr.bf16.mxu0 0
      %3604 = vmatmul.mubr.bf16.gmra.mxu0 %v3521
      %v3605 = vpop.f32.mrf.mxu0
      %v3606 = vadd.f32 0.0, %v3605
      %v3607 = vpop.f32.mrf.mxu0
      %v3608 = vpop.f32.mrf.mxu0
      %v3609 = vadd.f32 0.0, %v3608
      %v3610 = vpop.f32.mrf.mxu0
      %3611 = vmatprep.mubr.bf16.mxu0 0
      %3612 = vmatmul.mubr.bf16.gmra.mxu0 %v3524
      %v3613 = vpop.f32.mrf.mxu0
      %v3614 = vadd.f32 0.0, %v3613
      %v3615 = vpop.f32.mrf.mxu0
      %v3616 = vpop.f32.mrf.mxu0
      %v3617 = vadd.f32 0.0, %v3616
      %v3618 = vpop.f32.mrf.mxu0
      %3619 = vmatprep.mubr.bf16.mxu0 0
      %3620 = vmatmul.mubr.bf16.gmra.mxu0 %v3527
      %v3621 = vpop.f32.mrf.mxu0
      %v3622 = vadd.f32 0.0, %v3621
      %v3623 = vpop.f32.mrf.mxu0
      %v3624 = vpop.f32.mrf.mxu0
      %v3625 = vadd.f32 0.0, %v3624
      %v3626 = vpop.f32.mrf.mxu0
      %3627 = vmatprep.mubr.bf16.mxu0 0
      %3628 = vmatmul.mubr.bf16.gmra.mxu0 %v3530
      %v3629 = vpop.f32.mrf.mxu0
      %v3630 = vadd.f32 0.0, %v3629
      %v3631 = vpop.f32.mrf.mxu0
      %v3632 = vpop.f32.mrf.mxu0
      %v3633 = vadd.f32 0.0, %v3632
      %v3634 = vpop.f32.mrf.mxu0
      %3635 = vmatprep.mubr.bf16.mxu0 0
      %3636 = vmatmul.mubr.bf16.gmra.mxu0 %v3533
      %v3637 = vpop.f32.mrf.mxu0
      %v3638 = vadd.f32 0.0, %v3637
      %v3639 = vpop.f32.mrf.mxu0
      %v3640 = vpop.f32.mrf.mxu0
      %v3641 = vadd.f32 0.0, %v3640
      %v3642 = vpop.f32.mrf.mxu0
      %3643 = vmatprep.mubr.bf16.mxu0 0
      %3644 = vmatmul.mubr.bf16.gmra.mxu0 %v3536
      %v3645 = vpop.f32.mrf.mxu0
      %v3646 = vadd.f32 0.0, %v3645
      %v3647 = vpop.f32.mrf.mxu0
      %v3648 = vpop.f32.mrf.mxu0
      %v3649 = vadd.f32 0.0, %v3648
      %v3650 = vpop.f32.mrf.mxu0
      %3651 = vmatprep.mubr.bf16.mxu0 0
      %3652 = vmatmul.mubr.bf16.gmra.mxu0 %v3539
      %v3653 = vpop.f32.mrf.mxu0
      %v3654 = vadd.f32 0.0, %v3653
      %v3655 = vpop.f32.mrf.mxu0
      %v3656 = vpop.f32.mrf.mxu0
      %v3657 = vadd.f32 0.0, %v3656
      %v3658 = vpop.f32.mrf.mxu0
      %3659 = vmatprep.mubr.bf16.mxu0 0
      %3660 = vmatmul.mubr.bf16.gmra.mxu0 %v3542
      %v3661 = vpop.f32.mrf.mxu0
      %v3662 = vadd.f32 0.0, %v3661
      %v3663 = vpop.f32.mrf.mxu0
      %v3664 = vpop.f32.mrf.mxu0
      %v3665 = vadd.f32 0.0, %v3664
      %v3666 = vpop.f32.mrf.mxu0
      %3667 = vmatprep.mubr.bf16.mxu0 0
      %3668 = vmatmul.mubr.bf16.gmra.mxu0 %v3545
      %v3669 = vpop.f32.mrf.mxu0
      %v3670 = vadd.f32 0.0, %v3669
      %v3671 = vpop.f32.mrf.mxu0
      %v3672 = vpop.f32.mrf.mxu0
      %v3673 = vadd.f32 0.0, %v3672
      %v3674 = vpop.f32.mrf.mxu0
      %3675 = vmatprep.mubr.bf16.mxu0 0
      %3676 = vmatmul.mubr.bf16.gmra.mxu0 %v3548
      %v3677 = vpop.f32.mrf.mxu0
      %v3678 = vadd.f32 0.0, %v3677
      %v3679 = vpop.f32.mrf.mxu0
      %v3680 = vpop.f32.mrf.mxu0
      %v3681 = vadd.f32 0.0, %v3680
      %v3682 = vpop.f32.mrf.mxu0
      %3683 = vmatprep.mubr.bf16.mxu0 0
      %3684 = vmatmul.mubr.bf16.gmra.mxu0 %v3551
      %v3685 = vpop.f32.mrf.mxu0
      %v3686 = vadd.f32 0.0, %v3685
      %v3687 = vpop.f32.mrf.mxu0
      %v3688 = vpop.f32.mrf.mxu0
      %v3689 = vadd.f32 0.0, %v3688
      %v3690 = vpop.f32.mrf.mxu0
      %3691 = vmatprep.mubr.bf16.mxu0 0
      %3692 = vmatmul.mubr.bf16.gmra.mxu0 %v3554
      %v3693 = vpop.f32.mrf.mxu0
      %v3694 = vadd.f32 0.0, %v3693
      %v3695 = vpop.f32.mrf.mxu0
      %v3696 = vpop.f32.mrf.mxu0
      %v3697 = vadd.f32 0.0, %v3696
      %v3698 = vpop.f32.mrf.mxu0
      %3699 = vmatprep.mubr.bf16.mxu0 0
      %3700 = vmatmul.mubr.bf16.gmra.mxu0 %v3557
      %v3701 = vpop.f32.mrf.mxu0
      %v3702 = vadd.f32 0.0, %v3701
      %v3703 = vpop.f32.mrf.mxu0
      %v3704 = vpop.f32.mrf.mxu0
      %v3705 = vadd.f32 0.0, %v3704
      %v3706 = vpop.f32.mrf.mxu0
      %3707 = vmatprep.mubr.bf16.mxu0 0
      %3708 = vmatmul.mubr.bf16.gmra.mxu0 %v3560
      %v3709 = vpop.f32.mrf.mxu0
      %v3710 = vadd.f32 0.0, %v3709
      %v3711 = vpop.f32.mrf.mxu0
      %v3712 = vpop.f32.mrf.mxu0
      %v3713 = vadd.f32 0.0, %v3712
      %v3714 = vpop.f32.mrf.mxu0
      %3715 = vmatprep.mubr.bf16.mxu0 0
      %3716 = vmatmul.mubr.bf16.gmra.mxu0 %v3563
      %v3717 = vpop.f32.mrf.mxu0
      %v3718 = vadd.f32 0.0, %v3717
      %v3719 = vpop.f32.mrf.mxu0
      %v3720 = vpop.f32.mrf.mxu0
      %v3721 = vadd.f32 0.0, %v3720
      %v3722 = vpop.f32.mrf.mxu0
      %3723 = vmatprep.mubr.bf16.mxu0 0
      %3724 = vmatmul.mubr.bf16.gmra.mxu0 %v3566
      %v3725 = vpop.f32.mrf.mxu0
      %v3726 = vadd.f32 0.0, %v3725
      %v3727 = vpop.f32.mrf.mxu0
      %v3728 = vpop.f32.mrf.mxu0
      %v3729 = vadd.f32 0.0, %v3728
      %v3730 = vpop.f32.mrf.mxu0
      %3731 = vdwg.mxu0
      %v3732 = vadd.f32 %v3438, %v3606
      %v3733 = vadd.f32 %v3439, %v3609
      %v3734 = vadd.f32 %v3440, %v3614
      %v3735 = vadd.f32 %v3441, %v3617
      %v3736 = vadd.f32 %v3442, %v3622
      %v3737 = vadd.f32 %v3443, %v3625
      %v3738 = vadd.f32 %v3444, %v3630
      %v3739 = vadd.f32 %v3445, %v3633
      %v3740 = vadd.f32 %v3446, %v3638
      %v3741 = vadd.f32 %v3447, %v3641
      %v3742 = vadd.f32 %v3448, %v3646
      %v3743 = vadd.f32 %v3449, %v3649
      %v3744 = vadd.f32 %v3450, %v3654
      %v3745 = vadd.f32 %v3451, %v3657
      %v3746 = vadd.f32 %v3452, %v3662
      %v3747 = vadd.f32 %v3453, %v3665
      %v3748 = vadd.f32 %v3454, %v3670
      %v3749 = vadd.f32 %v3455, %v3673
      %v3750 = vadd.f32 %v3456, %v3678
      %v3751 = vadd.f32 %v3457, %v3681
      %v3752 = vadd.f32 %v3458, %v3686
      %v3753 = vadd.f32 %v3459, %v3689
      %v3754 = vadd.f32 %v3460, %v3694
      %v3755 = vadd.f32 %v3461, %v3697
      %v3756 = vadd.f32 %v3462, %v3702
      %v3757 = vadd.f32 %v3463, %v3705
      %v3758 = vadd.f32 %v3464, %v3710
      %v3759 = vadd.f32 %v3465, %v3713
      %v3760 = vadd.f32 %v3466, %v3718
      %v3761 = vadd.f32 %v3467, %v3721
      %v3762 = vadd.f32 %v3468, %v3726
      %v3763 = vadd.f32 %v3469, %v3729
      %3764 = vst.msk [vmem:[#allocation2] sm:$0xff] %vm199, %v3732
      %3765 = vst.msk [vmem:[#allocation2 + $0x8] sm:$0xff] %vm199, %v3733
      %3766 = vst.msk [vmem:[#allocation2 + $0x10] sm:$0xff] %vm199, %v3734
      %3767 = vst.msk [vmem:[#allocation2 + $0x18] sm:$0xff] %vm199, %v3735
      %3768 = vst.msk [vmem:[#allocation2 + $0x20] sm:$0xff] %vm199, %v3736
      %3769 = vst.msk [vmem:[#allocation2 + $0x28] sm:$0xff] %vm199, %v3737
      %3770 = vst.msk [vmem:[#allocation2 + $0x30] sm:$0xff] %vm199, %v3738
      %3771 = vst.msk [vmem:[#allocation2 + $0x38] sm:$0xff] %vm199, %v3739
      %3772 = vst.msk [vmem:[#allocation2 + $0x40] sm:$0xff] %vm199, %v3740
      %3773 = vst.msk [vmem:[#allocation2 + $0x48] sm:$0xff] %vm199, %v3741
      %3774 = vst.msk [vmem:[#allocation2 + $0x50] sm:$0xff] %vm199, %v3742
      %3775 = vst.msk [vmem:[#allocation2 + $0x58] sm:$0xff] %vm199, %v3743
      %3776 = vst.msk [vmem:[#allocation2 + $0x60] sm:$0xff] %vm199, %v3744
      %3777 = vst.msk [vmem:[#allocation2 + $0x68] sm:$0xff] %vm199, %v3745
      %3778 = vst.msk [vmem:[#allocation2 + $0x70] sm:$0xff] %vm199, %v3746
      %3779 = vst.msk [vmem:[#allocation2 + $0x78] sm:$0xff] %vm199, %v3747
      %3780 = vst.msk [vmem:[#allocation2 + $0x80] sm:$0xff] %vm199, %v3748
      %3781 = vst.msk [vmem:[#allocation2 + $0x88] sm:$0xff] %vm199, %v3749
      %3782 = vst.msk [vmem:[#allocation2 + $0x90] sm:$0xff] %vm199, %v3750
      %3783 = vst.msk [vmem:[#allocation2 + $0x98] sm:$0xff] %vm199, %v3751
      %3784 = vst.msk [vmem:[#allocation2 + $0xa0] sm:$0xff] %vm199, %v3752
      %3785 = vst.msk [vmem:[#allocation2 + $0xa8] sm:$0xff] %vm199, %v3753
      %3786 = vst.msk [vmem:[#allocation2 + $0xb0] sm:$0xff] %vm199, %v3754
      %3787 = vst.msk [vmem:[#allocation2 + $0xb8] sm:$0xff] %vm199, %v3755
      %3788 = vst.msk [vmem:[#allocation2 + $0xc0] sm:$0xff] %vm199, %v3756
      %3789 = vst.msk [vmem:[#allocation2 + $0xc8] sm:$0xff] %vm199, %v3757
      %3790 = vst.msk [vmem:[#allocation2 + $0xd0] sm:$0xff] %vm199, %v3758
      %3791 = vst.msk [vmem:[#allocation2 + $0xd8] sm:$0xff] %vm199, %v3759
      %3792 = vst.msk [vmem:[#allocation2 + $0xe0] sm:$0xff] %vm199, %v3760
      %3793 = vst.msk [vmem:[#allocation2 + $0xe8] sm:$0xff] %vm199, %v3761
      %3794 = vst.msk [vmem:[#allocation2 + $0xf0] sm:$0xff] %vm199, %v3762
      %3795 = vst.msk [vmem:[#allocation2 + $0xf8] sm:$0xff] %vm199, %v3763
      %s3796 = scalar_lea.vmem %s192, 24
      %v3797 = vld [vmem:[%s3796] sm:$0xf]
      %v3798 = vld [vmem:[%s3796 + $0x4] sm:$0xf]
      %v3799 = vld [vmem:[%s3796 + $0xc] sm:$0xf]
      %v3800 = vld [vmem:[%s3796 + $0x10] sm:$0xf]
      %v3801 = vld [vmem:[%s3796 + $0x18] sm:$0xf]
      %v3802 = vld [vmem:[%s3796 + $0x1c] sm:$0xf]
      %v3803 = vld [vmem:[%s3796 + $0x24] sm:$0xf]
      %v3804 = vld [vmem:[%s3796 + $0x28] sm:$0xf]
      %v3805 = vld [vmem:[%s3796 + $0x30] sm:$0xf]
      %v3806 = vld [vmem:[%s3796 + $0x34] sm:$0xf]
      %v3807 = vld [vmem:[%s3796 + $0x3c] sm:$0xf]
      %v3808 = vld [vmem:[%s3796 + $0x40] sm:$0xf]
      %v3809 = vld [vmem:[%s3796 + $0x48] sm:$0xf]
      %v3810 = vld [vmem:[%s3796 + $0x4c] sm:$0xf]
      %v3811 = vld [vmem:[%s3796 + $0x54] sm:$0xf]
      %v3812 = vld [vmem:[%s3796 + $0x58] sm:$0xf]
      %v3813 = vld [vmem:[%s3796 + $0x60] sm:$0xf]
      %v3814 = vld [vmem:[%s3796 + $0x64] sm:$0xf]
      %v3815 = vld [vmem:[%s3796 + $0x6c] sm:$0xf]
      %v3816 = vld [vmem:[%s3796 + $0x70] sm:$0xf]
      %v3817 = vld [vmem:[%s3796 + $0x78] sm:$0xf]
      %v3818 = vld [vmem:[%s3796 + $0x7c] sm:$0xf]
      %v3819 = vld [vmem:[%s3796 + $0x84] sm:$0xf]
      %v3820 = vld [vmem:[%s3796 + $0x88] sm:$0xf]
      %v3821 = vld [vmem:[%s3796 + $0x90] sm:$0xf]
      %v3822 = vld [vmem:[%s3796 + $0x94] sm:$0xf]
      %v3823 = vld [vmem:[%s3796 + $0x9c] sm:$0xf]
      %v3824 = vld [vmem:[%s3796 + $0xa0] sm:$0xf]
      %v3825 = vld [vmem:[%s3796 + $0xa8] sm:$0xf]
      %v3826 = vld [vmem:[%s3796 + $0xac] sm:$0xf]
      %v3827 = vld [vmem:[%s3796 + $0xb4] sm:$0xf]
      %v3828 = vld [vmem:[%s3796 + $0xb8] sm:$0xf]
      %v3829 = vld [vmem:[#allocation2] sm:$0xff]
      %v3830 = vld [vmem:[#allocation2 + $0x8] sm:$0xff]
      %v3831 = vld [vmem:[#allocation2 + $0x10] sm:$0xff]
      %v3832 = vld [vmem:[#allocation2 + $0x18] sm:$0xff]
      %v3833 = vld [vmem:[#allocation2 + $0x20] sm:$0xff]
      %v3834 = vld [vmem:[#allocation2 + $0x28] sm:$0xff]
      %v3835 = vld [vmem:[#allocation2 + $0x30] sm:$0xff]
      %v3836 = vld [vmem:[#allocation2 + $0x38] sm:$0xff]
      %v3837 = vld [vmem:[#allocation2 + $0x40] sm:$0xff]
      %v3838 = vld [vmem:[#allocation2 + $0x48] sm:$0xff]
      %v3839 = vld [vmem:[#allocation2 + $0x50] sm:$0xff]
      %v3840 = vld [vmem:[#allocation2 + $0x58] sm:$0xff]
      %v3841 = vld [vmem:[#allocation2 + $0x60] sm:$0xff]
      %v3842 = vld [vmem:[#allocation2 + $0x68] sm:$0xff]
      %v3843 = vld [vmem:[#allocation2 + $0x70] sm:$0xff]
      %v3844 = vld [vmem:[#allocation2 + $0x78] sm:$0xff]
      %v3845 = vld [vmem:[#allocation2 + $0x80] sm:$0xff]
      %v3846 = vld [vmem:[#allocation2 + $0x88] sm:$0xff]
      %v3847 = vld [vmem:[#allocation2 + $0x90] sm:$0xff]
      %v3848 = vld [vmem:[#allocation2 + $0x98] sm:$0xff]
      %v3849 = vld [vmem:[#allocation2 + $0xa0] sm:$0xff]
      %v3850 = vld [vmem:[#allocation2 + $0xa8] sm:$0xff]
      %v3851 = vld [vmem:[#allocation2 + $0xb0] sm:$0xff]
      %v3852 = vld [vmem:[#allocation2 + $0xb8] sm:$0xff]
      %v3853 = vld [vmem:[#allocation2 + $0xc0] sm:$0xff]
      %v3854 = vld [vmem:[#allocation2 + $0xc8] sm:$0xff]
      %v3855 = vld [vmem:[#allocation2 + $0xd0] sm:$0xff]
      %v3856 = vld [vmem:[#allocation2 + $0xd8] sm:$0xff]
      %v3857 = vld [vmem:[#allocation2 + $0xe0] sm:$0xff]
      %v3858 = vld [vmem:[#allocation2 + $0xe8] sm:$0xff]
      %v3859 = vld [vmem:[#allocation2 + $0xf0] sm:$0xff]
      %v3860 = vld [vmem:[#allocation2 + $0xf8] sm:$0xff]
      %s3861 = scalar_lea.vmem %s1, 12
      %v3862 = vld [vmem:[%s3861] sm:$0x3]
      %v3895 = vunpack.c.l.b16 %v3797
      %v3896 = vunpack.c.l.b16 %v3798
      %v3897 = vunpack.c.l.b16 %v3799
      %v3898 = vunpack.c.l.b16 %v3800
      %v3899 = vunpack.c.l.b16 %v3801
      %v3900 = vunpack.c.l.b16 %v3802
      %v3901 = vunpack.c.l.b16 %v3803
      %v3902 = vunpack.c.l.b16 %v3804
      %v3903 = vunpack.c.l.b16 %v3805
      %v3904 = vunpack.c.l.b16 %v3806
      %v3905 = vunpack.c.l.b16 %v3807
      %v3906 = vunpack.c.l.b16 %v3808
      %v3907 = vunpack.c.l.b16 %v3809
      %v3908 = vunpack.c.l.b16 %v3810
      %v3909 = vunpack.c.l.b16 %v3811
      %v3910 = vunpack.c.l.b16 %v3812
      %v3911 = vunpack.c.l.b16 %v3813
      %v3912 = vunpack.c.l.b16 %v3814
      %v3913 = vunpack.c.l.b16 %v3815
      %v3914 = vunpack.c.l.b16 %v3816
      %v3915 = vunpack.c.l.b16 %v3817
      %v3916 = vunpack.c.l.b16 %v3818
      %v3917 = vunpack.c.l.b16 %v3819
      %v3918 = vunpack.c.l.b16 %v3820
      %v3919 = vunpack.c.l.b16 %v3821
      %v3920 = vunpack.c.l.b16 %v3822
      %v3921 = vunpack.c.l.b16 %v3823
      %v3922 = vunpack.c.l.b16 %v3824
      %v3923 = vunpack.c.l.b16 %v3825
      %v3924 = vunpack.c.l.b16 %v3826
      %v3925 = vunpack.c.l.b16 %v3827
      %v3926 = vunpack.c.l.b16 %v3828
      %v3927 = vpack.c.b16 %v3896, %v3895
      %v3928 = vpack.c.b16 %v3898, %v3897
      %v3929 = vpack.c.b16 %v3900, %v3899
      %v3930 = vpack.c.b16 %v3902, %v3901
      %v3931 = vpack.c.b16 %v3904, %v3903
      %v3932 = vpack.c.b16 %v3906, %v3905
      %v3933 = vpack.c.b16 %v3908, %v3907
      %v3934 = vpack.c.b16 %v3910, %v3909
      %v3935 = vpack.c.b16 %v3912, %v3911
      %v3936 = vpack.c.b16 %v3914, %v3913
      %v3937 = vpack.c.b16 %v3916, %v3915
      %v3938 = vpack.c.b16 %v3918, %v3917
      %v3939 = vpack.c.b16 %v3920, %v3919
      %v3940 = vpack.c.b16 %v3922, %v3921
      %v3941 = vpack.c.b16 %v3924, %v3923
      %v3942 = vpack.c.b16 %v3926, %v3925
      %v3944 = vsel %vm377, %v3927, 0
      %v3947 = vsel %vm377, %v3928, 0
      %v3950 = vsel %vm377, %v3929, 0
      %v3953 = vsel %vm377, %v3930, 0
      %v3956 = vsel %vm377, %v3931, 0
      %v3959 = vsel %vm377, %v3932, 0
      %v3962 = vsel %vm377, %v3933, 0
      %v3965 = vsel %vm377, %v3934, 0
      %v3968 = vsel %vm377, %v3935, 0
      %v3971 = vsel %vm377, %v3936, 0
      %v3974 = vsel %vm377, %v3937, 0
      %v3977 = vsel %vm377, %v3938, 0
      %v3980 = vsel %vm377, %v3939, 0
      %v3983 = vsel %vm377, %v3940, 0
      %v3986 = vsel %vm377, %v3941, 0
      %v3989 = vsel %vm377, %v3942, 0
      %v3992 = vsel %vm426, %v3862, 0
      %3994 = vmatprep.subr.bf16.mxu0 0
      %3995 = vmatpush1.bf16.msra.mxu0 0
      %3996 = vmatprep.subr.bf16.mxu0 0
      %3997 = vmatpush1.bf16.msra.mxu0 0
      %3998 = vmatprep.subr.bf16.mxu0 0
      %3999 = vmatpush1.bf16.msra.mxu0 0
      %4000 = vmatprep.subr.bf16.mxu0 0
      %4001 = vmatpush1.bf16.msra.mxu0 0
      %4002 = vmatprep.subr.bf16.mxu0 0
      %4003 = vmatpush1.bf16.msra.mxu0 0
      %4004 = vmatprep.subr.bf16.mxu0 0
      %4005 = vmatpush1.bf16.msra.mxu0 0
      %4006 = vmatprep.subr.bf16.mxu0 0
      %4007 = vmatpush1.bf16.msra.mxu0 0
      %4008 = vmatprep.subr.bf16.mxu0 0
      %4009 = vmatpush1.bf16.msra.mxu0 %v3992
      %4010 = vmatprep.subr.bf16.mxu0 0
      %4011 = vmatpush2.bf16.msra.mxu0 0
      %4012 = vmatprep.subr.bf16.mxu0 0
      %4013 = vmatpush2.bf16.msra.mxu0 0
      %4014 = vmatprep.subr.bf16.mxu0 0
      %4015 = vmatpush2.bf16.msra.mxu0 0
      %4016 = vmatprep.subr.bf16.mxu0 0
      %4017 = vmatpush2.bf16.msra.mxu0 0
      %4018 = vmatprep.subr.bf16.mxu0 0
      %4019 = vmatpush2.bf16.msra.mxu0 0
      %4020 = vmatprep.subr.bf16.mxu0 0
      %4021 = vmatpush2.bf16.msra.mxu0 0
      %4022 = vmatprep.subr.bf16.mxu0 0
      %4023 = vmatpush2.bf16.msra.mxu0 0
      %4024 = vmatprep.subr.bf16.mxu0 0
      %4025 = vmatpush2.bf16.msra.mxu0 0
      %4026 = vmatprep.mubr.bf16.mxu0 0
      %4027 = vmatmul.mubr.bf16.gmra.mxu0 %v3944
      %v4028 = vpop.f32.mrf.mxu0
      %v4029 = vadd.f32 0.0, %v4028
      %v4030 = vpop.f32.mrf.mxu0
      %v4031 = vpop.f32.mrf.mxu0
      %v4032 = vadd.f32 0.0, %v4031
      %v4033 = vpop.f32.mrf.mxu0
      %4034 = vmatprep.mubr.bf16.mxu0 0
      %4035 = vmatmul.mubr.bf16.gmra.mxu0 %v3947
      %v4036 = vpop.f32.mrf.mxu0
      %v4037 = vadd.f32 0.0, %v4036
      %v4038 = vpop.f32.mrf.mxu0
      %v4039 = vpop.f32.mrf.mxu0
      %v4040 = vadd.f32 0.0, %v4039
      %v4041 = vpop.f32.mrf.mxu0
      %4042 = vmatprep.mubr.bf16.mxu0 0
      %4043 = vmatmul.mubr.bf16.gmra.mxu0 %v3950
      %v4044 = vpop.f32.mrf.mxu0
      %v4045 = vadd.f32 0.0, %v4044
      %v4046 = vpop.f32.mrf.mxu0
      %v4047 = vpop.f32.mrf.mxu0
      %v4048 = vadd.f32 0.0, %v4047
      %v4049 = vpop.f32.mrf.mxu0
      %4050 = vmatprep.mubr.bf16.mxu0 0
      %4051 = vmatmul.mubr.bf16.gmra.mxu0 %v3953
      %v4052 = vpop.f32.mrf.mxu0
      %v4053 = vadd.f32 0.0, %v4052
      %v4054 = vpop.f32.mrf.mxu0
      %v4055 = vpop.f32.mrf.mxu0
      %v4056 = vadd.f32 0.0, %v4055
      %v4057 = vpop.f32.mrf.mxu0
      %4058 = vmatprep.mubr.bf16.mxu0 0
      %4059 = vmatmul.mubr.bf16.gmra.mxu0 %v3956
      %v4060 = vpop.f32.mrf.mxu0
      %v4061 = vadd.f32 0.0, %v4060
      %v4062 = vpop.f32.mrf.mxu0
      %v4063 = vpop.f32.mrf.mxu0
      %v4064 = vadd.f32 0.0, %v4063
      %v4065 = vpop.f32.mrf.mxu0
      %4066 = vmatprep.mubr.bf16.mxu0 0
      %4067 = vmatmul.mubr.bf16.gmra.mxu0 %v3959
      %v4068 = vpop.f32.mrf.mxu0
      %v4069 = vadd.f32 0.0, %v4068
      %v4070 = vpop.f32.mrf.mxu0
      %v4071 = vpop.f32.mrf.mxu0
      %v4072 = vadd.f32 0.0, %v4071
      %v4073 = vpop.f32.mrf.mxu0
      %4074 = vmatprep.mubr.bf16.mxu0 0
      %4075 = vmatmul.mubr.bf16.gmra.mxu0 %v3962
      %v4076 = vpop.f32.mrf.mxu0
      %v4077 = vadd.f32 0.0, %v4076
      %v4078 = vpop.f32.mrf.mxu0
      %v4079 = vpop.f32.mrf.mxu0
      %v4080 = vadd.f32 0.0, %v4079
      %v4081 = vpop.f32.mrf.mxu0
      %4082 = vmatprep.mubr.bf16.mxu0 0
      %4083 = vmatmul.mubr.bf16.gmra.mxu0 %v3965
      %v4084 = vpop.f32.mrf.mxu0
      %v4085 = vadd.f32 0.0, %v4084
      %v4086 = vpop.f32.mrf.mxu0
      %v4087 = vpop.f32.mrf.mxu0
      %v4088 = vadd.f32 0.0, %v4087
      %v4089 = vpop.f32.mrf.mxu0
      %4090 = vmatprep.mubr.bf16.mxu0 0
      %4091 = vmatmul.mubr.bf16.gmra.mxu0 %v3968
      %v4092 = vpop.f32.mrf.mxu0
      %v4093 = vadd.f32 0.0, %v4092
      %v4094 = vpop.f32.mrf.mxu0
      %v4095 = vpop.f32.mrf.mxu0
      %v4096 = vadd.f32 0.0, %v4095
      %v4097 = vpop.f32.mrf.mxu0
      %4098 = vmatprep.mubr.bf16.mxu0 0
      %4099 = vmatmul.mubr.bf16.gmra.mxu0 %v3971
      %v4100 = vpop.f32.mrf.mxu0
      %v4101 = vadd.f32 0.0, %v4100
      %v4102 = vpop.f32.mrf.mxu0
      %v4103 = vpop.f32.mrf.mxu0
      %v4104 = vadd.f32 0.0, %v4103
      %v4105 = vpop.f32.mrf.mxu0
      %4106 = vmatprep.mubr.bf16.mxu0 0
      %4107 = vmatmul.mubr.bf16.gmra.mxu0 %v3974
      %v4108 = vpop.f32.mrf.mxu0
      %v4109 = vadd.f32 0.0, %v4108
      %v4110 = vpop.f32.mrf.mxu0
      %v4111 = vpop.f32.mrf.mxu0
      %v4112 = vadd.f32 0.0, %v4111
      %v4113 = vpop.f32.mrf.mxu0
      %4114 = vmatprep.mubr.bf16.mxu0 0
      %4115 = vmatmul.mubr.bf16.gmra.mxu0 %v3977
      %v4116 = vpop.f32.mrf.mxu0
      %v4117 = vadd.f32 0.0, %v4116
      %v4118 = vpop.f32.mrf.mxu0
      %v4119 = vpop.f32.mrf.mxu0
      %v4120 = vadd.f32 0.0, %v4119
      %v4121 = vpop.f32.mrf.mxu0
      %4122 = vmatprep.mubr.bf16.mxu0 0
      %4123 = vmatmul.mubr.bf16.gmra.mxu0 %v3980
      %v4124 = vpop.f32.mrf.mxu0
      %v4125 = vadd.f32 0.0, %v4124
      %v4126 = vpop.f32.mrf.mxu0
      %v4127 = vpop.f32.mrf.mxu0
      %v4128 = vadd.f32 0.0, %v4127
      %v4129 = vpop.f32.mrf.mxu0
      %4130 = vmatprep.mubr.bf16.mxu0 0
      %4131 = vmatmul.mubr.bf16.gmra.mxu0 %v3983
      %v4132 = vpop.f32.mrf.mxu0
      %v4133 = vadd.f32 0.0, %v4132
      %v4134 = vpop.f32.mrf.mxu0
      %v4135 = vpop.f32.mrf.mxu0
      %v4136 = vadd.f32 0.0, %v4135
      %v4137 = vpop.f32.mrf.mxu0
      %4138 = vmatprep.mubr.bf16.mxu0 0
      %4139 = vmatmul.mubr.bf16.gmra.mxu0 %v3986
      %v4140 = vpop.f32.mrf.mxu0
      %v4141 = vadd.f32 0.0, %v4140
      %v4142 = vpop.f32.mrf.mxu0
      %v4143 = vpop.f32.mrf.mxu0
      %v4144 = vadd.f32 0.0, %v4143
      %v4145 = vpop.f32.mrf.mxu0
      %4146 = vmatprep.mubr.bf16.mxu0 0
      %4147 = vmatmul.mubr.bf16.gmra.mxu0 %v3989
      %v4148 = vpop.f32.mrf.mxu0
      %v4149 = vadd.f32 0.0, %v4148
      %v4150 = vpop.f32.mrf.mxu0
      %v4151 = vpop.f32.mrf.mxu0
      %v4152 = vadd.f32 0.0, %v4151
      %v4153 = vpop.f32.mrf.mxu0
      %4154 = vdwg.mxu0
      %v4155 = vadd.f32 %v3829, %v4029
      %v4156 = vadd.f32 %v3830, %v4032
      %v4157 = vadd.f32 %v3831, %v4037
      %v4158 = vadd.f32 %v3832, %v4040
      %v4159 = vadd.f32 %v3833, %v4045
      %v4160 = vadd.f32 %v3834, %v4048
      %v4161 = vadd.f32 %v3835, %v4053
      %v4162 = vadd.f32 %v3836, %v4056
      %v4163 = vadd.f32 %v3837, %v4061
      %v4164 = vadd.f32 %v3838, %v4064
      %v4165 = vadd.f32 %v3839, %v4069
      %v4166 = vadd.f32 %v3840, %v4072
      %v4167 = vadd.f32 %v3841, %v4077
      %v4168 = vadd.f32 %v3842, %v4080
      %v4169 = vadd.f32 %v3843, %v4085
      %v4170 = vadd.f32 %v3844, %v4088
      %v4171 = vadd.f32 %v3845, %v4093
      %v4172 = vadd.f32 %v3846, %v4096
      %v4173 = vadd.f32 %v3847, %v4101
      %v4174 = vadd.f32 %v3848, %v4104
      %v4175 = vadd.f32 %v3849, %v4109
      %v4176 = vadd.f32 %v3850, %v4112
      %v4177 = vadd.f32 %v3851, %v4117
      %v4178 = vadd.f32 %v3852, %v4120
      %v4179 = vadd.f32 %v3853, %v4125
      %v4180 = vadd.f32 %v3854, %v4128
      %v4181 = vadd.f32 %v3855, %v4133
      %v4182 = vadd.f32 %v3856, %v4136
      %v4183 = vadd.f32 %v3857, %v4141
      %v4184 = vadd.f32 %v3858, %v4144
      %v4185 = vadd.f32 %v3859, %v4149
      %v4186 = vadd.f32 %v3860, %v4152
      %4187 = vst.msk [vmem:[#allocation2] sm:$0xff] %vm199, %v4155
      %4188 = vst.msk [vmem:[#allocation2 + $0x8] sm:$0xff] %vm199, %v4156
      %4189 = vst.msk [vmem:[#allocation2 + $0x10] sm:$0xff] %vm199, %v4157
      %4190 = vst.msk [vmem:[#allocation2 + $0x18] sm:$0xff] %vm199, %v4158
      %4191 = vst.msk [vmem:[#allocation2 + $0x20] sm:$0xff] %vm199, %v4159
      %4192 = vst.msk [vmem:[#allocation2 + $0x28] sm:$0xff] %vm199, %v4160
      %4193 = vst.msk [vmem:[#allocation2 + $0x30] sm:$0xff] %vm199, %v4161
      %4194 = vst.msk [vmem:[#allocation2 + $0x38] sm:$0xff] %vm199, %v4162
      %4195 = vst.msk [vmem:[#allocation2 + $0x40] sm:$0xff] %vm199, %v4163
      %4196 = vst.msk [vmem:[#allocation2 + $0x48] sm:$0xff] %vm199, %v4164
      %4197 = vst.msk [vmem:[#allocation2 + $0x50] sm:$0xff] %vm199, %v4165
      %4198 = vst.msk [vmem:[#allocation2 + $0x58] sm:$0xff] %vm199, %v4166
      %4199 = vst.msk [vmem:[#allocation2 + $0x60] sm:$0xff] %vm199, %v4167
      %4200 = vst.msk [vmem:[#allocation2 + $0x68] sm:$0xff] %vm199, %v4168
      %4201 = vst.msk [vmem:[#allocation2 + $0x70] sm:$0xff] %vm199, %v4169
      %4202 = vst.msk [vmem:[#allocation2 + $0x78] sm:$0xff] %vm199, %v4170
      %4203 = vst.msk [vmem:[#allocation2 + $0x80] sm:$0xff] %vm199, %v4171
      %4204 = vst.msk [vmem:[#allocation2 + $0x88] sm:$0xff] %vm199, %v4172
      %4205 = vst.msk [vmem:[#allocation2 + $0x90] sm:$0xff] %vm199, %v4173
      %4206 = vst.msk [vmem:[#allocation2 + $0x98] sm:$0xff] %vm199, %v4174
      %4207 = vst.msk [vmem:[#allocation2 + $0xa0] sm:$0xff] %vm199, %v4175
      %4208 = vst.msk [vmem:[#allocation2 + $0xa8] sm:$0xff] %vm199, %v4176
      %4209 = vst.msk [vmem:[#allocation2 + $0xb0] sm:$0xff] %vm199, %v4177
      %4210 = vst.msk [vmem:[#allocation2 + $0xb8] sm:$0xff] %vm199, %v4178
      %4211 = vst.msk [vmem:[#allocation2 + $0xc0] sm:$0xff] %vm199, %v4179
      %4212 = vst.msk [vmem:[#allocation2 + $0xc8] sm:$0xff] %vm199, %v4180
      %4213 = vst.msk [vmem:[#allocation2 + $0xd0] sm:$0xff] %vm199, %v4181
      %4214 = vst.msk [vmem:[#allocation2 + $0xd8] sm:$0xff] %vm199, %v4182
      %4215 = vst.msk [vmem:[#allocation2 + $0xe0] sm:$0xff] %vm199, %v4183
      %4216 = vst.msk [vmem:[#allocation2 + $0xe8] sm:$0xff] %vm199, %v4184
      %4217 = vst.msk [vmem:[#allocation2 + $0xf0] sm:$0xff] %vm199, %v4185
      %4218 = vst.msk [vmem:[#allocation2 + $0xf8] sm:$0xff] %vm199, %v4186
      %v4219 = vld [vmem:[%s3796] sm:$0xf]
      %v4220 = vld [vmem:[%s3796 + $0x4] sm:$0xf]
      %v4221 = vld [vmem:[%s3796 + $0x8] sm:$0x1]
      %v4222 = vld [vmem:[%s3796 + $0xc] sm:$0xf]
      %v4223 = vld [vmem:[%s3796 + $0x10] sm:$0xf]
      %v4224 = vld [vmem:[%s3796 + $0x14] sm:$0x1]
      %v4225 = vld [vmem:[%s3796 + $0x18] sm:$0xf]
      %v4226 = vld [vmem:[%s3796 + $0x1c] sm:$0xf]
      %v4227 = vld [vmem:[%s3796 + $0x20] sm:$0x1]
      %v4228 = vld [vmem:[%s3796 + $0x24] sm:$0xf]
      %v4229 = vld [vmem:[%s3796 + $0x28] sm:$0xf]
      %v4230 = vld [vmem:[%s3796 + $0x2c] sm:$0x1]
      %v4231 = vld [vmem:[%s3796 + $0x30] sm:$0xf]
      %v4232 = vld [vmem:[%s3796 + $0x34] sm:$0xf]
      %v4233 = vld [vmem:[%s3796 + $0x38] sm:$0x1]
      %v4234 = vld [vmem:[%s3796 + $0x3c] sm:$0xf]
      %v4235 = vld [vmem:[%s3796 + $0x40] sm:$0xf]
      %v4236 = vld [vmem:[%s3796 + $0x44] sm:$0x1]
      %v4237 = vld [vmem:[%s3796 + $0x48] sm:$0xf]
      %v4238 = vld [vmem:[%s3796 + $0x4c] sm:$0xf]
      %v4239 = vld [vmem:[%s3796 + $0x50] sm:$0x1]
      %v4240 = vld [vmem:[%s3796 + $0x54] sm:$0xf]
      %v4241 = vld [vmem:[%s3796 + $0x58] sm:$0xf]
      %v4242 = vld [vmem:[%s3796 + $0x5c] sm:$0x1]
      %v4243 = vld [vmem:[%s3796 + $0x60] sm:$0xf]
      %v4244 = vld [vmem:[%s3796 + $0x64] sm:$0xf]
      %v4245 = vld [vmem:[%s3796 + $0x68] sm:$0x1]
      %v4246 = vld [vmem:[%s3796 + $0x6c] sm:$0xf]
      %v4247 = vld [vmem:[%s3796 + $0x70] sm:$0xf]
      %v4248 = vld [vmem:[%s3796 + $0x74] sm:$0x1]
      %v4249 = vld [vmem:[%s3796 + $0x78] sm:$0xf]
      %v4250 = vld [vmem:[%s3796 + $0x7c] sm:$0xf]
      %v4251 = vld [vmem:[%s3796 + $0x80] sm:$0x1]
      %v4252 = vld [vmem:[%s3796 + $0x84] sm:$0xf]
      %v4253 = vld [vmem:[%s3796 + $0x88] sm:$0xf]
      %v4254 = vld [vmem:[%s3796 + $0x8c] sm:$0x1]
      %v4255 = vld [vmem:[%s3796 + $0x90] sm:$0xf]
      %v4256 = vld [vmem:[%s3796 + $0x94] sm:$0xf]
      %v4257 = vld [vmem:[%s3796 + $0x98] sm:$0x1]
      %v4258 = vld [vmem:[%s3796 + $0x9c] sm:$0xf]
      %v4259 = vld [vmem:[%s3796 + $0xa0] sm:$0xf]
      %v4260 = vld [vmem:[%s3796 + $0xa4] sm:$0x1]
      %v4261 = vld [vmem:[%s3796 + $0xa8] sm:$0xf]
      %v4262 = vld [vmem:[%s3796 + $0xac] sm:$0xf]
      %v4263 = vld [vmem:[%s3796 + $0xb0] sm:$0x1]
      %v4264 = vld [vmem:[%s3796 + $0xb4] sm:$0xf]
      %v4265 = vld [vmem:[%s3796 + $0xb8] sm:$0xf]
      %v4266 = vld [vmem:[%s3796 + $0xbc] sm:$0x1]
      %v4268 = vshrl.u32 %v4219, 16
      %v4270 = vrot.slane %v4268, 4
      %v4271 = vshll.u32 %v4219, 16
      %v4273 = vrot.slane %v4271, 5
      %v4274 = vor.u32 %v4270, %v4273
      %v4275 = vrot.slane %v4274, 4
      %v4277 = vshll.u32 %v4220, 16
      %v4279 = vrot.slane %v4277, 5
      %v4280 = vsel %vm705, %v4275, %v4279
      %v4281 = vshrl.u32 %v4220, 16
      %v4283 = vrot.slane %v4281, 4
      %v4284 = vor.u32 %v4283, %v4279
      %v4285 = vrot.slane %v4284, 4
      %v4287 = vshll.u32 %v4221, 16
      %v4289 = vrot.slane %v4287, 5
      %v4290 = vsel %vm705, %v4285, %v4289
      %v4292 = vshrl.u32 %v4222, 16
      %v4294 = vrot.slane %v4292, 4
      %v4295 = vshll.u32 %v4222, 16
      %v4297 = vrot.slane %v4295, 5
      %v4298 = vor.u32 %v4294, %v4297
      %v4299 = vrot.slane %v4298, 4
      %v4301 = vshll.u32 %v4223, 16
      %v4303 = vrot.slane %v4301, 5
      %v4304 = vsel %vm705, %v4299, %v4303
      %v4305 = vshrl.u32 %v4223, 16
      %v4307 = vrot.slane %v4305, 4
      %v4308 = vor.u32 %v4307, %v4303
      %v4309 = vrot.slane %v4308, 4
      %v4311 = vshll.u32 %v4224, 16
      %v4313 = vrot.slane %v4311, 5
      %v4314 = vsel %vm705, %v4309, %v4313
      %v4316 = vshrl.u32 %v4225, 16
      %v4318 = vrot.slane %v4316, 4
      %v4319 = vshll.u32 %v4225, 16
      %v4321 = vrot.slane %v4319, 5
      %v4322 = vor.u32 %v4318, %v4321
      %v4323 = vrot.slane %v4322, 4
      %v4325 = vshll.u32 %v4226, 16
      %v4327 = vrot.slane %v4325, 5
      %v4328 = vsel %vm705, %v4323, %v4327
      %v4329 = vshrl.u32 %v4226, 16
      %v4331 = vrot.slane %v4329, 4
      %v4332 = vor.u32 %v4331, %v4327
      %v4333 = vrot.slane %v4332, 4
      %v4335 = vshll.u32 %v4227, 16
      %v4337 = vrot.slane %v4335, 5
      %v4338 = vsel %vm705, %v4333, %v4337
      %v4340 = vshrl.u32 %v4228, 16
      %v4342 = vrot.slane %v4340, 4
      %v4343 = vshll.u32 %v4228, 16
      %v4345 = vrot.slane %v4343, 5
      %v4346 = vor.u32 %v4342, %v4345
      %v4347 = vrot.slane %v4346, 4
      %v4349 = vshll.u32 %v4229, 16
      %v4351 = vrot.slane %v4349, 5
      %v4352 = vsel %vm705, %v4347, %v4351
      %v4353 = vshrl.u32 %v4229, 16
      %v4355 = vrot.slane %v4353, 4
      %v4356 = vor.u32 %v4355, %v4351
      %v4357 = vrot.slane %v4356, 4
      %v4359 = vshll.u32 %v4230, 16
      %v4361 = vrot.slane %v4359, 5
      %v4362 = vsel %vm705, %v4357, %v4361
      %v4364 = vshrl.u32 %v4231, 16
      %v4366 = vrot.slane %v4364, 4
      %v4367 = vshll.u32 %v4231, 16
      %v4369 = vrot.slane %v4367, 5
      %v4370 = vor.u32 %v4366, %v4369
      %v4371 = vrot.slane %v4370, 4
      %v4373 = vshll.u32 %v4232, 16
      %v4375 = vrot.slane %v4373, 5
      %v4376 = vsel %vm705, %v4371, %v4375
      %v4377 = vshrl.u32 %v4232, 16
      %v4379 = vrot.slane %v4377, 4
      %v4380 = vor.u32 %v4379, %v4375
      %v4381 = vrot.slane %v4380, 4
      %v4383 = vshll.u32 %v4233, 16
      %v4385 = vrot.slane %v4383, 5
      %v4386 = vsel %vm705, %v4381, %v4385
      %v4388 = vshrl.u32 %v4234, 16
      %v4390 = vrot.slane %v4388, 4
      %v4391 = vshll.u32 %v4234, 16
      %v4393 = vrot.slane %v4391, 5
      %v4394 = vor.u32 %v4390, %v4393
      %v4395 = vrot.slane %v4394, 4
      %v4397 = vshll.u32 %v4235, 16
      %v4399 = vrot.slane %v4397, 5
      %v4400 = vsel %vm705, %v4395, %v4399
      %v4401 = vshrl.u32 %v4235, 16
      %v4403 = vrot.slane %v4401, 4
      %v4404 = vor.u32 %v4403, %v4399
      %v4405 = vrot.slane %v4404, 4
      %v4407 = vshll.u32 %v4236, 16
      %v4409 = vrot.slane %v4407, 5
      %v4410 = vsel %vm705, %v4405, %v4409
      %v4412 = vshrl.u32 %v4237, 16
      %v4414 = vrot.slane %v4412, 4
      %v4415 = vshll.u32 %v4237, 16
      %v4417 = vrot.slane %v4415, 5
      %v4418 = vor.u32 %v4414, %v4417
      %v4419 = vrot.slane %v4418, 4
      %v4421 = vshll.u32 %v4238, 16
      %v4423 = vrot.slane %v4421, 5
      %v4424 = vsel %vm705, %v4419, %v4423
      %v4425 = vshrl.u32 %v4238, 16
      %v4427 = vrot.slane %v4425, 4
      %v4428 = vor.u32 %v4427, %v4423
      %v4429 = vrot.slane %v4428, 4
      %v4431 = vshll.u32 %v4239, 16
      %v4433 = vrot.slane %v4431, 5
      %v4434 = vsel %vm705, %v4429, %v4433
      %v4436 = vshrl.u32 %v4240, 16
      %v4438 = vrot.slane %v4436, 4
      %v4439 = vshll.u32 %v4240, 16
      %v4441 = vrot.slane %v4439, 5
      %v4442 = vor.u32 %v4438, %v4441
      %v4443 = vrot.slane %v4442, 4
      %v4445 = vshll.u32 %v4241, 16
      %v4447 = vrot.slane %v4445, 5
      %v4448 = vsel %vm705, %v4443, %v4447
      %v4449 = vshrl.u32 %v4241, 16
      %v4451 = vrot.slane %v4449, 4
      %v4452 = vor.u32 %v4451, %v4447
      %v4453 = vrot.slane %v4452, 4
      %v4455 = vshll.u32 %v4242, 16
      %v4457 = vrot.slane %v4455, 5
      %v4458 = vsel %vm705, %v4453, %v4457
      %v4460 = vshrl.u32 %v4243, 16
      %v4462 = vrot.slane %v4460, 4
      %v4463 = vshll.u32 %v4243, 16
      %v4465 = vrot.slane %v4463, 5
      %v4466 = vor.u32 %v4462, %v4465
      %v4467 = vrot.slane %v4466, 4
      %v4469 = vshll.u32 %v4244, 16
      %v4471 = vrot.slane %v4469, 5
      %v4472 = vsel %vm705, %v4467, %v4471
      %v4473 = vshrl.u32 %v4244, 16
      %v4475 = vrot.slane %v4473, 4
      %v4476 = vor.u32 %v4475, %v4471
      %v4477 = vrot.slane %v4476, 4
      %v4479 = vshll.u32 %v4245, 16
      %v4481 = vrot.slane %v4479, 5
      %v4482 = vsel %vm705, %v4477, %v4481
      %v4484 = vshrl.u32 %v4246, 16
      %v4486 = vrot.slane %v4484, 4
      %v4487 = vshll.u32 %v4246, 16
      %v4489 = vrot.slane %v4487, 5
      %v4490 = vor.u32 %v4486, %v4489
      %v4491 = vrot.slane %v4490, 4
      %v4493 = vshll.u32 %v4247, 16
      %v4495 = vrot.slane %v4493, 5
      %v4496 = vsel %vm705, %v4491, %v4495
      %v4497 = vshrl.u32 %v4247, 16
      %v4499 = vrot.slane %v4497, 4
      %v4500 = vor.u32 %v4499, %v4495
      %v4501 = vrot.slane %v4500, 4
      %v4503 = vshll.u32 %v4248, 16
      %v4505 = vrot.slane %v4503, 5
      %v4506 = vsel %vm705, %v4501, %v4505
      %v4508 = vshrl.u32 %v4249, 16
      %v4510 = vrot.slane %v4508, 4
      %v4511 = vshll.u32 %v4249, 16
      %v4513 = vrot.slane %v4511, 5
      %v4514 = vor.u32 %v4510, %v4513
      %v4515 = vrot.slane %v4514, 4
      %v4517 = vshll.u32 %v4250, 16
      %v4519 = vrot.slane %v4517, 5
      %v4520 = vsel %vm705, %v4515, %v4519
      %v4521 = vshrl.u32 %v4250, 16
      %v4523 = vrot.slane %v4521, 4
      %v4524 = vor.u32 %v4523, %v4519
      %v4525 = vrot.slane %v4524, 4
      %v4527 = vshll.u32 %v4251, 16
      %v4529 = vrot.slane %v4527, 5
      %v4530 = vsel %vm705, %v4525, %v4529
      %v4532 = vshrl.u32 %v4252, 16
      %v4534 = vrot.slane %v4532, 4
      %v4535 = vshll.u32 %v4252, 16
      %v4537 = vrot.slane %v4535, 5
      %v4538 = vor.u32 %v4534, %v4537
      %v4539 = vrot.slane %v4538, 4
      %v4541 = vshll.u32 %v4253, 16
      %v4543 = vrot.slane %v4541, 5
      %v4544 = vsel %vm705, %v4539, %v4543
      %v4545 = vshrl.u32 %v4253, 16
      %v4547 = vrot.slane %v4545, 4
      %v4548 = vor.u32 %v4547, %v4543
      %v4549 = vrot.slane %v4548, 4
      %v4551 = vshll.u32 %v4254, 16
      %v4553 = vrot.slane %v4551, 5
      %v4554 = vsel %vm705, %v4549, %v4553
      %v4556 = vshrl.u32 %v4255, 16
      %v4558 = vrot.slane %v4556, 4
      %v4559 = vshll.u32 %v4255, 16
      %v4561 = vrot.slane %v4559, 5
      %v4562 = vor.u32 %v4558, %v4561
      %v4563 = vrot.slane %v4562, 4
      %v4565 = vshll.u32 %v4256, 16
      %v4567 = vrot.slane %v4565, 5
      %v4568 = vsel %vm705, %v4563, %v4567
      %v4569 = vshrl.u32 %v4256, 16
      %v4571 = vrot.slane %v4569, 4
      %v4572 = vor.u32 %v4571, %v4567
      %v4573 = vrot.slane %v4572, 4
      %v4575 = vshll.u32 %v4257, 16
      %v4577 = vrot.slane %v4575, 5
      %v4578 = vsel %vm705, %v4573, %v4577
      %v4580 = vshrl.u32 %v4258, 16
      %v4582 = vrot.slane %v4580, 4
      %v4583 = vshll.u32 %v4258, 16
      %v4585 = vrot.slane %v4583, 5
      %v4586 = vor.u32 %v4582, %v4585
      %v4587 = vrot.slane %v4586, 4
      %v4589 = vshll.u32 %v4259, 16
      %v4591 = vrot.slane %v4589, 5
      %v4592 = vsel %vm705, %v4587, %v4591
      %v4593 = vshrl.u32 %v4259, 16
      %v4595 = vrot.slane %v4593, 4
      %v4596 = vor.u32 %v4595, %v4591
      %v4597 = vrot.slane %v4596, 4
      %v4599 = vshll.u32 %v4260, 16
      %v4601 = vrot.slane %v4599, 5
      %v4602 = vsel %vm705, %v4597, %v4601
      %v4604 = vshrl.u32 %v4261, 16
      %v4606 = vrot.slane %v4604, 4
      %v4607 = vshll.u32 %v4261, 16
      %v4609 = vrot.slane %v4607, 5
      %v4610 = vor.u32 %v4606, %v4609
      %v4611 = vrot.slane %v4610, 4
      %v4613 = vshll.u32 %v4262, 16
      %v4615 = vrot.slane %v4613, 5
      %v4616 = vsel %vm705, %v4611, %v4615
      %v4617 = vshrl.u32 %v4262, 16
      %v4619 = vrot.slane %v4617, 4
      %v4620 = vor.u32 %v4619, %v4615
      %v4621 = vrot.slane %v4620, 4
      %v4623 = vshll.u32 %v4263, 16
      %v4625 = vrot.slane %v4623, 5
      %v4626 = vsel %vm705, %v4621, %v4625
      %v4628 = vshrl.u32 %v4264, 16
      %v4630 = vrot.slane %v4628, 4
      %v4631 = vshll.u32 %v4264, 16
      %v4633 = vrot.slane %v4631, 5
      %v4634 = vor.u32 %v4630, %v4633
      %v4635 = vrot.slane %v4634, 4
      %v4637 = vshll.u32 %v4265, 16
      %v4639 = vrot.slane %v4637, 5
      %v4640 = vsel %vm705, %v4635, %v4639
      %v4641 = vshrl.u32 %v4265, 16
      %v4643 = vrot.slane %v4641, 4
      %v4644 = vor.u32 %v4643, %v4639
      %v4645 = vrot.slane %v4644, 4
      %v4647 = vshll.u32 %v4266, 16
      %v4649 = vrot.slane %v4647, 5
      %v4650 = vsel %vm705, %v4645, %v4649
      %v4651 = vld [vmem:[#allocation2] sm:$0xff]
      %v4652 = vld [vmem:[#allocation2 + $0x8] sm:$0xff]
      %v4653 = vld [vmem:[#allocation2 + $0x10] sm:$0xff]
      %v4654 = vld [vmem:[#allocation2 + $0x18] sm:$0xff]
      %v4655 = vld [vmem:[#allocation2 + $0x20] sm:$0xff]
      %v4656 = vld [vmem:[#allocation2 + $0x28] sm:$0xff]
      %v4657 = vld [vmem:[#allocation2 + $0x30] sm:$0xff]
      %v4658 = vld [vmem:[#allocation2 + $0x38] sm:$0xff]
      %v4659 = vld [vmem:[#allocation2 + $0x40] sm:$0xff]
      %v4660 = vld [vmem:[#allocation2 + $0x48] sm:$0xff]
      %v4661 = vld [vmem:[#allocation2 + $0x50] sm:$0xff]
      %v4662 = vld [vmem:[#allocation2 + $0x58] sm:$0xff]
      %v4663 = vld [vmem:[#allocation2 + $0x60] sm:$0xff]
      %v4664 = vld [vmem:[#allocation2 + $0x68] sm:$0xff]
      %v4665 = vld [vmem:[#allocation2 + $0x70] sm:$0xff]
      %v4666 = vld [vmem:[#allocation2 + $0x78] sm:$0xff]
      %v4667 = vld [vmem:[#allocation2 + $0x80] sm:$0xff]
      %v4668 = vld [vmem:[#allocation2 + $0x88] sm:$0xff]
      %v4669 = vld [vmem:[#allocation2 + $0x90] sm:$0xff]
      %v4670 = vld [vmem:[#allocation2 + $0x98] sm:$0xff]
      %v4671 = vld [vmem:[#allocation2 + $0xa0] sm:$0xff]
      %v4672 = vld [vmem:[#allocation2 + $0xa8] sm:$0xff]
      %v4673 = vld [vmem:[#allocation2 + $0xb0] sm:$0xff]
      %v4674 = vld [vmem:[#allocation2 + $0xb8] sm:$0xff]
      %v4675 = vld [vmem:[#allocation2 + $0xc0] sm:$0xff]
      %v4676 = vld [vmem:[#allocation2 + $0xc8] sm:$0xff]
      %v4677 = vld [vmem:[#allocation2 + $0xd0] sm:$0xff]
      %v4678 = vld [vmem:[#allocation2 + $0xd8] sm:$0xff]
      %v4679 = vld [vmem:[#allocation2 + $0xe0] sm:$0xff]
      %v4680 = vld [vmem:[#allocation2 + $0xe8] sm:$0xff]
      %v4681 = vld [vmem:[#allocation2 + $0xf0] sm:$0xff]
      %v4682 = vld [vmem:[#allocation2 + $0xf8] sm:$0xff]
      %s4683 = scalar_lea.vmem %s1, 14
      %v4684 = vld [vmem:[%s4683] sm:$0x3]
      %v4685 = vunpack.c.l.b16 %v4280
      %v4686 = vunpack.c.l.b16 %v4290
      %v4687 = vunpack.c.l.b16 %v4304
      %v4688 = vunpack.c.l.b16 %v4314
      %v4689 = vunpack.c.l.b16 %v4328
      %v4690 = vunpack.c.l.b16 %v4338
      %v4691 = vunpack.c.l.b16 %v4352
      %v4692 = vunpack.c.l.b16 %v4362
      %v4693 = vunpack.c.l.b16 %v4376
      %v4694 = vunpack.c.l.b16 %v4386
      %v4695 = vunpack.c.l.b16 %v4400
      %v4696 = vunpack.c.l.b16 %v4410
      %v4697 = vunpack.c.l.b16 %v4424
      %v4698 = vunpack.c.l.b16 %v4434
      %v4699 = vunpack.c.l.b16 %v4448
      %v4700 = vunpack.c.l.b16 %v4458
      %v4701 = vunpack.c.l.b16 %v4472
      %v4702 = vunpack.c.l.b16 %v4482
      %v4703 = vunpack.c.l.b16 %v4496
      %v4704 = vunpack.c.l.b16 %v4506
      %v4705 = vunpack.c.l.b16 %v4520
      %v4706 = vunpack.c.l.b16 %v4530
      %v4707 = vunpack.c.l.b16 %v4544
      %v4708 = vunpack.c.l.b16 %v4554
      %v4709 = vunpack.c.l.b16 %v4568
      %v4710 = vunpack.c.l.b16 %v4578
      %v4711 = vunpack.c.l.b16 %v4592
      %v4712 = vunpack.c.l.b16 %v4602
      %v4713 = vunpack.c.l.b16 %v4616
      %v4714 = vunpack.c.l.b16 %v4626
      %v4715 = vunpack.c.l.b16 %v4640
      %v4716 = vunpack.c.l.b16 %v4650
      %v4717 = vpack.c.b16 %v4686, %v4685
      %v4718 = vpack.c.b16 %v4688, %v4687
      %v4719 = vpack.c.b16 %v4690, %v4689
      %v4720 = vpack.c.b16 %v4692, %v4691
      %v4721 = vpack.c.b16 %v4694, %v4693
      %v4722 = vpack.c.b16 %v4696, %v4695
      %v4723 = vpack.c.b16 %v4698, %v4697
      %v4724 = vpack.c.b16 %v4700, %v4699
      %v4725 = vpack.c.b16 %v4702, %v4701
      %v4726 = vpack.c.b16 %v4704, %v4703
      %v4727 = vpack.c.b16 %v4706, %v4705
      %v4728 = vpack.c.b16 %v4708, %v4707
      %v4729 = vpack.c.b16 %v4710, %v4709
      %v4730 = vpack.c.b16 %v4712, %v4711
      %v4731 = vpack.c.b16 %v4714, %v4713
      %v4732 = vpack.c.b16 %v4716, %v4715
      %v4734 = vsel %vm377, %v4717, 0
      %v4737 = vsel %vm377, %v4718, 0
      %v4740 = vsel %vm377, %v4719, 0
      %v4743 = vsel %vm377, %v4720, 0
      %v4746 = vsel %vm377, %v4721, 0
      %v4749 = vsel %vm377, %v4722, 0
      %v4752 = vsel %vm377, %v4723, 0
      %v4755 = vsel %vm377, %v4724, 0
      %v4758 = vsel %vm377, %v4725, 0
      %v4761 = vsel %vm377, %v4726, 0
      %v4764 = vsel %vm377, %v4727, 0
      %v4767 = vsel %vm377, %v4728, 0
      %v4770 = vsel %vm377, %v4729, 0
      %v4773 = vsel %vm377, %v4730, 0
      %v4776 = vsel %vm377, %v4731, 0
      %v4779 = vsel %vm377, %v4732, 0
      %v4782 = vsel %vm426, %v4684, 0
      %4784 = vmatprep.subr.bf16.mxu0 0
      %4785 = vmatpush1.bf16.msra.mxu0 0
      %4786 = vmatprep.subr.bf16.mxu0 0
      %4787 = vmatpush1.bf16.msra.mxu0 0
      %4788 = vmatprep.subr.bf16.mxu0 0
      %4789 = vmatpush1.bf16.msra.mxu0 0
      %4790 = vmatprep.subr.bf16.mxu0 0
      %4791 = vmatpush1.bf16.msra.mxu0 0
      %4792 = vmatprep.subr.bf16.mxu0 0
      %4793 = vmatpush1.bf16.msra.mxu0 0
      %4794 = vmatprep.subr.bf16.mxu0 0
      %4795 = vmatpush1.bf16.msra.mxu0 0
      %4796 = vmatprep.subr.bf16.mxu0 0
      %4797 = vmatpush1.bf16.msra.mxu0 0
      %4798 = vmatprep.subr.bf16.mxu0 0
      %4799 = vmatpush1.bf16.msra.mxu0 %v4782
      %4800 = vmatprep.subr.bf16.mxu0 0
      %4801 = vmatpush2.bf16.msra.mxu0 0
      %4802 = vmatprep.subr.bf16.mxu0 0
      %4803 = vmatpush2.bf16.msra.mxu0 0
      %4804 = vmatprep.subr.bf16.mxu0 0
      %4805 = vmatpush2.bf16.msra.mxu0 0
      %4806 = vmatprep.subr.bf16.mxu0 0
      %4807 = vmatpush2.bf16.msra.mxu0 0
      %4808 = vmatprep.subr.bf16.mxu0 0
      %4809 = vmatpush2.bf16.msra.mxu0 0
      %4810 = vmatprep.subr.bf16.mxu0 0
      %4811 = vmatpush2.bf16.msra.mxu0 0
      %4812 = vmatprep.subr.bf16.mxu0 0
      %4813 = vmatpush2.bf16.msra.mxu0 0
      %4814 = vmatprep.subr.bf16.mxu0 0
      %4815 = vmatpush2.bf16.msra.mxu0 0
      %4816 = vmatprep.mubr.bf16.mxu0 0
      %4817 = vmatmul.mubr.bf16.gmra.mxu0 %v4734
      %v4818 = vpop.f32.mrf.mxu0
      %v4819 = vadd.f32 0.0, %v4818
      %v4820 = vpop.f32.mrf.mxu0
      %v4821 = vpop.f32.mrf.mxu0
      %v4822 = vadd.f32 0.0, %v4821
      %v4823 = vpop.f32.mrf.mxu0
      %4824 = vmatprep.mubr.bf16.mxu0 0
      %4825 = vmatmul.mubr.bf16.gmra.mxu0 %v4737
      %v4826 = vpop.f32.mrf.mxu0
      %v4827 = vadd.f32 0.0, %v4826
      %v4828 = vpop.f32.mrf.mxu0
      %v4829 = vpop.f32.mrf.mxu0
      %v4830 = vadd.f32 0.0, %v4829
      %v4831 = vpop.f32.mrf.mxu0
      %4832 = vmatprep.mubr.bf16.mxu0 0
      %4833 = vmatmul.mubr.bf16.gmra.mxu0 %v4740
      %v4834 = vpop.f32.mrf.mxu0
      %v4835 = vadd.f32 0.0, %v4834
      %v4836 = vpop.f32.mrf.mxu0
      %v4837 = vpop.f32.mrf.mxu0
      %v4838 = vadd.f32 0.0, %v4837
      %v4839 = vpop.f32.mrf.mxu0
      %4840 = vmatprep.mubr.bf16.mxu0 0
      %4841 = vmatmul.mubr.bf16.gmra.mxu0 %v4743
      %v4842 = vpop.f32.mrf.mxu0
      %v4843 = vadd.f32 0.0, %v4842
      %v4844 = vpop.f32.mrf.mxu0
      %v4845 = vpop.f32.mrf.mxu0
      %v4846 = vadd.f32 0.0, %v4845
      %v4847 = vpop.f32.mrf.mxu0
      %4848 = vmatprep.mubr.bf16.mxu0 0
      %4849 = vmatmul.mubr.bf16.gmra.mxu0 %v4746
      %v4850 = vpop.f32.mrf.mxu0
      %v4851 = vadd.f32 0.0, %v4850
      %v4852 = vpop.f32.mrf.mxu0
      %v4853 = vpop.f32.mrf.mxu0
      %v4854 = vadd.f32 0.0, %v4853
      %v4855 = vpop.f32.mrf.mxu0
      %4856 = vmatprep.mubr.bf16.mxu0 0
      %4857 = vmatmul.mubr.bf16.gmra.mxu0 %v4749
      %v4858 = vpop.f32.mrf.mxu0
      %v4859 = vadd.f32 0.0, %v4858
      %v4860 = vpop.f32.mrf.mxu0
      %v4861 = vpop.f32.mrf.mxu0
      %v4862 = vadd.f32 0.0, %v4861
      %v4863 = vpop.f32.mrf.mxu0
      %4864 = vmatprep.mubr.bf16.mxu0 0
      %4865 = vmatmul.mubr.bf16.gmra.mxu0 %v4752
      %v4866 = vpop.f32.mrf.mxu0
      %v4867 = vadd.f32 0.0, %v4866
      %v4868 = vpop.f32.mrf.mxu0
      %v4869 = vpop.f32.mrf.mxu0
      %v4870 = vadd.f32 0.0, %v4869
      %v4871 = vpop.f32.mrf.mxu0
      %4872 = vmatprep.mubr.bf16.mxu0 0
      %4873 = vmatmul.mubr.bf16.gmra.mxu0 %v4755
      %v4874 = vpop.f32.mrf.mxu0
      %v4875 = vadd.f32 0.0, %v4874
      %v4876 = vpop.f32.mrf.mxu0
      %v4877 = vpop.f32.mrf.mxu0
      %v4878 = vadd.f32 0.0, %v4877
      %v4879 = vpop.f32.mrf.mxu0
      %4880 = vmatprep.mubr.bf16.mxu0 0
      %4881 = vmatmul.mubr.bf16.gmra.mxu0 %v4758
      %v4882 = vpop.f32.mrf.mxu0
      %v4883 = vadd.f32 0.0, %v4882
      %v4884 = vpop.f32.mrf.mxu0
      %v4885 = vpop.f32.mrf.mxu0
      %v4886 = vadd.f32 0.0, %v4885
      %v4887 = vpop.f32.mrf.mxu0
      %4888 = vmatprep.mubr.bf16.mxu0 0
      %4889 = vmatmul.mubr.bf16.gmra.mxu0 %v4761
      %v4890 = vpop.f32.mrf.mxu0
      %v4891 = vadd.f32 0.0, %v4890
      %v4892 = vpop.f32.mrf.mxu0
      %v4893 = vpop.f32.mrf.mxu0
      %v4894 = vadd.f32 0.0, %v4893
      %v4895 = vpop.f32.mrf.mxu0
      %4896 = vmatprep.mubr.bf16.mxu0 0
      %4897 = vmatmul.mubr.bf16.gmra.mxu0 %v4764
      %v4898 = vpop.f32.mrf.mxu0
      %v4899 = vadd.f32 0.0, %v4898
      %v4900 = vpop.f32.mrf.mxu0
      %v4901 = vpop.f32.mrf.mxu0
      %v4902 = vadd.f32 0.0, %v4901
      %v4903 = vpop.f32.mrf.mxu0
      %4904 = vmatprep.mubr.bf16.mxu0 0
      %4905 = vmatmul.mubr.bf16.gmra.mxu0 %v4767
      %v4906 = vpop.f32.mrf.mxu0
      %v4907 = vadd.f32 0.0, %v4906
      %v4908 = vpop.f32.mrf.mxu0
      %v4909 = vpop.f32.mrf.mxu0
      %v4910 = vadd.f32 0.0, %v4909
      %v4911 = vpop.f32.mrf.mxu0
      %4912 = vmatprep.mubr.bf16.mxu0 0
      %4913 = vmatmul.mubr.bf16.gmra.mxu0 %v4770
      %v4914 = vpop.f32.mrf.mxu0
      %v4915 = vadd.f32 0.0, %v4914
      %v4916 = vpop.f32.mrf.mxu0
      %v4917 = vpop.f32.mrf.mxu0
      %v4918 = vadd.f32 0.0, %v4917
      %v4919 = vpop.f32.mrf.mxu0
      %4920 = vmatprep.mubr.bf16.mxu0 0
      %4921 = vmatmul.mubr.bf16.gmra.mxu0 %v4773
      %v4922 = vpop.f32.mrf.mxu0
      %v4923 = vadd.f32 0.0, %v4922
      %v4924 = vpop.f32.mrf.mxu0
      %v4925 = vpop.f32.mrf.mxu0
      %v4926 = vadd.f32 0.0, %v4925
      %v4927 = vpop.f32.mrf.mxu0
      %4928 = vmatprep.mubr.bf16.mxu0 0
      %4929 = vmatmul.mubr.bf16.gmra.mxu0 %v4776
      %v4930 = vpop.f32.mrf.mxu0
      %v4931 = vadd.f32 0.0, %v4930
      %v4932 = vpop.f32.mrf.mxu0
      %v4933 = vpop.f32.mrf.mxu0
      %v4934 = vadd.f32 0.0, %v4933
      %v4935 = vpop.f32.mrf.mxu0
      %4936 = vmatprep.mubr.bf16.mxu0 0
      %4937 = vmatmul.mubr.bf16.gmra.mxu0 %v4779
      %v4938 = vpop.f32.mrf.mxu0
      %v4939 = vadd.f32 0.0, %v4938
      %v4940 = vpop.f32.mrf.mxu0
      %v4941 = vpop.f32.mrf.mxu0
      %v4942 = vadd.f32 0.0, %v4941
      %v4943 = vpop.f32.mrf.mxu0
      %4944 = vdwg.mxu0
      %v4945 = vadd.f32 %v4651, %v4819
      %v4946 = vadd.f32 %v4652, %v4822
      %v4947 = vadd.f32 %v4653, %v4827
      %v4948 = vadd.f32 %v4654, %v4830
      %v4949 = vadd.f32 %v4655, %v4835
      %v4950 = vadd.f32 %v4656, %v4838
      %v4951 = vadd.f32 %v4657, %v4843
      %v4952 = vadd.f32 %v4658, %v4846
      %v4953 = vadd.f32 %v4659, %v4851
      %v4954 = vadd.f32 %v4660, %v4854
      %v4955 = vadd.f32 %v4661, %v4859
      %v4956 = vadd.f32 %v4662, %v4862
      %v4957 = vadd.f32 %v4663, %v4867
      %v4958 = vadd.f32 %v4664, %v4870
      %v4959 = vadd.f32 %v4665, %v4875
      %v4960 = vadd.f32 %v4666, %v4878
      %v4961 = vadd.f32 %v4667, %v4883
      %v4962 = vadd.f32 %v4668, %v4886
      %v4963 = vadd.f32 %v4669, %v4891
      %v4964 = vadd.f32 %v4670, %v4894
      %v4965 = vadd.f32 %v4671, %v4899
      %v4966 = vadd.f32 %v4672, %v4902
      %v4967 = vadd.f32 %v4673, %v4907
      %v4968 = vadd.f32 %v4674, %v4910
      %v4969 = vadd.f32 %v4675, %v4915
      %v4970 = vadd.f32 %v4676, %v4918
      %v4971 = vadd.f32 %v4677, %v4923
      %v4972 = vadd.f32 %v4678, %v4926
      %v4973 = vadd.f32 %v4679, %v4931
      %v4974 = vadd.f32 %v4680, %v4934
      %v4975 = vadd.f32 %v4681, %v4939
      %v4976 = vadd.f32 %v4682, %v4942
      %4977 = vst.msk [vmem:[#allocation2] sm:$0xff] %vm199, %v4945
      %4978 = vst.msk [vmem:[#allocation2 + $0x8] sm:$0xff] %vm199, %v4946
      %4979 = vst.msk [vmem:[#allocation2 + $0x10] sm:$0xff] %vm199, %v4947
      %4980 = vst.msk [vmem:[#allocation2 + $0x18] sm:$0xff] %vm199, %v4948
      %4981 = vst.msk [vmem:[#allocation2 + $0x20] sm:$0xff] %vm199, %v4949
      %4982 = vst.msk [vmem:[#allocation2 + $0x28] sm:$0xff] %vm199, %v4950
      %4983 = vst.msk [vmem:[#allocation2 + $0x30] sm:$0xff] %vm199, %v4951
      %4984 = vst.msk [vmem:[#allocation2 + $0x38] sm:$0xff] %vm199, %v4952
      %4985 = vst.msk [vmem:[#allocation2 + $0x40] sm:$0xff] %vm199, %v4953
      %4986 = vst.msk [vmem:[#allocation2 + $0x48] sm:$0xff] %vm199, %v4954
      %4987 = vst.msk [vmem:[#allocation2 + $0x50] sm:$0xff] %vm199, %v4955
      %4988 = vst.msk [vmem:[#allocation2 + $0x58] sm:$0xff] %vm199, %v4956
      %4989 = vst.msk [vmem:[#allocation2 + $0x60] sm:$0xff] %vm199, %v4957
      %4990 = vst.msk [vmem:[#allocation2 + $0x68] sm:$0xff] %vm199, %v4958
      %4991 = vst.msk [vmem:[#allocation2 + $0x70] sm:$0xff] %vm199, %v4959
      %4992 = vst.msk [vmem:[#allocation2 + $0x78] sm:$0xff] %vm199, %v4960
      %4993 = vst.msk [vmem:[#allocation2 + $0x80] sm:$0xff] %vm199, %v4961
      %4994 = vst.msk [vmem:[#allocation2 + $0x88] sm:$0xff] %vm199, %v4962
      %4995 = vst.msk [vmem:[#allocation2 + $0x90] sm:$0xff] %vm199, %v4963
      %4996 = vst.msk [vmem:[#allocation2 + $0x98] sm:$0xff] %vm199, %v4964
      %4997 = vst.msk [vmem:[#allocation2 + $0xa0] sm:$0xff] %vm199, %v4965
      %4998 = vst.msk [vmem:[#allocation2 + $0xa8] sm:$0xff] %vm199, %v4966
      %4999 = vst.msk [vmem:[#allocation2 + $0xb0] sm:$0xff] %vm199, %v4967
      %5000 = vst.msk [vmem:[#allocation2 + $0xb8] sm:$0xff] %vm199, %v4968
      %5001 = vst.msk [vmem:[#allocation2 + $0xc0] sm:$0xff] %vm199, %v4969
      %5002 = vst.msk [vmem:[#allocation2 + $0xc8] sm:$0xff] %vm199, %v4970
      %5003 = vst.msk [vmem:[#allocation2 + $0xd0] sm:$0xff] %vm199, %v4971
      %5004 = vst.msk [vmem:[#allocation2 + $0xd8] sm:$0xff] %vm199, %v4972
      %5005 = vst.msk [vmem:[#allocation2 + $0xe0] sm:$0xff] %vm199, %v4973
      %5006 = vst.msk [vmem:[#allocation2 + $0xe8] sm:$0xff] %vm199, %v4974
      %5007 = vst.msk [vmem:[#allocation2 + $0xf0] sm:$0xff] %vm199, %v4975
      %5008 = vst.msk [vmem:[#allocation2 + $0xf8] sm:$0xff] %vm199, %v4976
      %v5009 = vld [vmem:[%s3796] sm:$0xe]
      %v5010 = vld [vmem:[%s3796 + $0x4] sm:$0xf]
      %v5011 = vld [vmem:[%s3796 + $0x8] sm:$0x1]
      %v5012 = vld [vmem:[%s3796 + $0xc] sm:$0xe]
      %v5013 = vld [vmem:[%s3796 + $0x10] sm:$0xf]
      %v5014 = vld [vmem:[%s3796 + $0x14] sm:$0x1]
      %v5015 = vld [vmem:[%s3796 + $0x18] sm:$0xe]
      %v5016 = vld [vmem:[%s3796 + $0x1c] sm:$0xf]
      %v5017 = vld [vmem:[%s3796 + $0x20] sm:$0x1]
      %v5018 = vld [vmem:[%s3796 + $0x24] sm:$0xe]
      %v5019 = vld [vmem:[%s3796 + $0x28] sm:$0xf]
      %v5020 = vld [vmem:[%s3796 + $0x2c] sm:$0x1]
      %v5021 = vld [vmem:[%s3796 + $0x30] sm:$0xe]
      %v5022 = vld [vmem:[%s3796 + $0x34] sm:$0xf]
      %v5023 = vld [vmem:[%s3796 + $0x38] sm:$0x1]
      %v5024 = vld [vmem:[%s3796 + $0x3c] sm:$0xe]
      %v5025 = vld [vmem:[%s3796 + $0x40] sm:$0xf]
      %v5026 = vld [vmem:[%s3796 + $0x44] sm:$0x1]
      %v5027 = vld [vmem:[%s3796 + $0x48] sm:$0xe]
      %v5028 = vld [vmem:[%s3796 + $0x4c] sm:$0xf]
      %v5029 = vld [vmem:[%s3796 + $0x50] sm:$0x1]
      %v5030 = vld [vmem:[%s3796 + $0x54] sm:$0xe]
      %v5031 = vld [vmem:[%s3796 + $0x58] sm:$0xf]
      %v5032 = vld [vmem:[%s3796 + $0x5c] sm:$0x1]
      %v5033 = vld [vmem:[%s3796 + $0x60] sm:$0xe]
      %v5034 = vld [vmem:[%s3796 + $0x64] sm:$0xf]
      %v5035 = vld [vmem:[%s3796 + $0x68] sm:$0x1]
      %v5036 = vld [vmem:[%s3796 + $0x6c] sm:$0xe]
      %v5037 = vld [vmem:[%s3796 + $0x70] sm:$0xf]
      %v5038 = vld [vmem:[%s3796 + $0x74] sm:$0x1]
      %v5039 = vld [vmem:[%s3796 + $0x78] sm:$0xe]
      %v5040 = vld [vmem:[%s3796 + $0x7c] sm:$0xf]
      %v5041 = vld [vmem:[%s3796 + $0x80] sm:$0x1]
      %v5042 = vld [vmem:[%s3796 + $0x84] sm:$0xe]
      %v5043 = vld [vmem:[%s3796 + $0x88] sm:$0xf]
      %v5044 = vld [vmem:[%s3796 + $0x8c] sm:$0x1]
      %v5045 = vld [vmem:[%s3796 + $0x90] sm:$0xe]
      %v5046 = vld [vmem:[%s3796 + $0x94] sm:$0xf]
      %v5047 = vld [vmem:[%s3796 + $0x98] sm:$0x1]
      %v5048 = vld [vmem:[%s3796 + $0x9c] sm:$0xe]
      %v5049 = vld [vmem:[%s3796 + $0xa0] sm:$0xf]
      %v5050 = vld [vmem:[%s3796 + $0xa4] sm:$0x1]
      %v5051 = vld [vmem:[%s3796 + $0xa8] sm:$0xe]
      %v5052 = vld [vmem:[%s3796 + $0xac] sm:$0xf]
      %v5053 = vld [vmem:[%s3796 + $0xb0] sm:$0x1]
      %v5054 = vld [vmem:[%s3796 + $0xb4] sm:$0xe]
      %v5055 = vld [vmem:[%s3796 + $0xb8] sm:$0xf]
      %v5056 = vld [vmem:[%s3796 + $0xbc] sm:$0x1]
      %v5105 = vrot.slane %v5009, 5
      %v5106 = vrot.slane %v5105, 4
      %v5107 = vrot.slane %v5010, 5
      %v5108 = vsel %vm1546, %v5106, %v5107
      %v5109 = vrot.slane %v5107, 4
      %v5110 = vrot.slane %v5011, 5
      %v5111 = vsel %vm1546, %v5109, %v5110
      %v5112 = vrot.slane %v5012, 5
      %v5113 = vrot.slane %v5112, 4
      %v5114 = vrot.slane %v5013, 5
      %v5115 = vsel %vm1546, %v5113, %v5114
      %v5116 = vrot.slane %v5114, 4
      %v5117 = vrot.slane %v5014, 5
      %v5118 = vsel %vm1546, %v5116, %v5117
      %v5119 = vrot.slane %v5015, 5
      %v5120 = vrot.slane %v5119, 4
      %v5121 = vrot.slane %v5016, 5
      %v5122 = vsel %vm1546, %v5120, %v5121
      %v5123 = vrot.slane %v5121, 4
      %v5124 = vrot.slane %v5017, 5
      %v5125 = vsel %vm1546, %v5123, %v5124
      %v5126 = vrot.slane %v5018, 5
      %v5127 = vrot.slane %v5126, 4
      %v5128 = vrot.slane %v5019, 5
      %v5129 = vsel %vm1546, %v5127, %v5128
      %v5130 = vrot.slane %v5128, 4
      %v5131 = vrot.slane %v5020, 5
      %v5132 = vsel %vm1546, %v5130, %v5131
      %v5133 = vrot.slane %v5021, 5
      %v5134 = vrot.slane %v5133, 4
      %v5135 = vrot.slane %v5022, 5
      %v5136 = vsel %vm1546, %v5134, %v5135
      %v5137 = vrot.slane %v5135, 4
      %v5138 = vrot.slane %v5023, 5
      %v5139 = vsel %vm1546, %v5137, %v5138
      %v5140 = vrot.slane %v5024, 5
      %v5141 = vrot.slane %v5140, 4
      %v5142 = vrot.slane %v5025, 5
      %v5143 = vsel %vm1546, %v5141, %v5142
      %v5144 = vrot.slane %v5142, 4
      %v5145 = vrot.slane %v5026, 5
      %v5146 = vsel %vm1546, %v5144, %v5145
      %v5147 = vrot.slane %v5027, 5
      %v5148 = vrot.slane %v5147, 4
      %v5149 = vrot.slane %v5028, 5
      %v5150 = vsel %vm1546, %v5148, %v5149
      %v5151 = vrot.slane %v5149, 4
      %v5152 = vrot.slane %v5029, 5
      %v5153 = vsel %vm1546, %v5151, %v5152
      %v5154 = vrot.slane %v5030, 5
      %v5155 = vrot.slane %v5154, 4
      %v5156 = vrot.slane %v5031, 5
      %v5157 = vsel %vm1546, %v5155, %v5156
      %v5158 = vrot.slane %v5156, 4
      %v5159 = vrot.slane %v5032, 5
      %v5160 = vsel %vm1546, %v5158, %v5159
      %v5161 = vrot.slane %v5033, 5
      %v5162 = vrot.slane %v5161, 4
      %v5163 = vrot.slane %v5034, 5
      %v5164 = vsel %vm1546, %v5162, %v5163
      %v5165 = vrot.slane %v5163, 4
      %v5166 = vrot.slane %v5035, 5
      %v5167 = vsel %vm1546, %v5165, %v5166
      %v5168 = vrot.slane %v5036, 5
      %v5169 = vrot.slane %v5168, 4
      %v5170 = vrot.slane %v5037, 5
      %v5171 = vsel %vm1546, %v5169, %v5170
      %v5172 = vrot.slane %v5170, 4
      %v5173 = vrot.slane %v5038, 5
      %v5174 = vsel %vm1546, %v5172, %v5173
      %v5175 = vrot.slane %v5039, 5
      %v5176 = vrot.slane %v5175, 4
      %v5177 = vrot.slane %v5040, 5
      %v5178 = vsel %vm1546, %v5176, %v5177
      %v5179 = vrot.slane %v5177, 4
      %v5180 = vrot.slane %v5041, 5
      %v5181 = vsel %vm1546, %v5179, %v5180
      %v5182 = vrot.slane %v5042, 5
      %v5183 = vrot.slane %v5182, 4
      %v5184 = vrot.slane %v5043, 5
      %v5185 = vsel %vm1546, %v5183, %v5184
      %v5186 = vrot.slane %v5184, 4
      %v5187 = vrot.slane %v5044, 5
      %v5188 = vsel %vm1546, %v5186, %v5187
      %v5189 = vrot.slane %v5045, 5
      %v5190 = vrot.slane %v5189, 4
      %v5191 = vrot.slane %v5046, 5
      %v5192 = vsel %vm1546, %v5190, %v5191
      %v5193 = vrot.slane %v5191, 4
      %v5194 = vrot.slane %v5047, 5
      %v5195 = vsel %vm1546, %v5193, %v5194
      %v5196 = vrot.slane %v5048, 5
      %v5197 = vrot.slane %v5196, 4
      %v5198 = vrot.slane %v5049, 5
      %v5199 = vsel %vm1546, %v5197, %v5198
      %v5200 = vrot.slane %v5198, 4
      %v5201 = vrot.slane %v5050, 5
      %v5202 = vsel %vm1546, %v5200, %v5201
      %v5203 = vrot.slane %v5051, 5
      %v5204 = vrot.slane %v5203, 4
      %v5205 = vrot.slane %v5052, 5
      %v5206 = vsel %vm1546, %v5204, %v5205
      %v5207 = vrot.slane %v5205, 4
      %v5208 = vrot.slane %v5053, 5
      %v5209 = vsel %vm1546, %v5207, %v5208
      %v5210 = vrot.slane %v5054, 5
      %v5211 = vrot.slane %v5210, 4
      %v5212 = vrot.slane %v5055, 5
      %v5213 = vsel %vm1546, %v5211, %v5212
      %v5214 = vrot.slane %v5212, 4
      %v5215 = vrot.slane %v5056, 5
      %v5216 = vsel %vm1546, %v5214, %v5215
      %v5217 = vld [vmem:[#allocation2] sm:$0xff]
      %v5218 = vld [vmem:[#allocation2 + $0x8] sm:$0xff]
      %v5219 = vld [vmem:[#allocation2 + $0x10] sm:$0xff]
      %v5220 = vld [vmem:[#allocation2 + $0x18] sm:$0xff]
      %v5221 = vld [vmem:[#allocation2 + $0x20] sm:$0xff]
      %v5222 = vld [vmem:[#allocation2 + $0x28] sm:$0xff]
      %v5223 = vld [vmem:[#allocation2 + $0x30] sm:$0xff]
      %v5224 = vld [vmem:[#allocation2 + $0x38] sm:$0xff]
      %v5225 = vld [vmem:[#allocation2 + $0x40] sm:$0xff]
      %v5226 = vld [vmem:[#allocation2 + $0x48] sm:$0xff]
      %v5227 = vld [vmem:[#allocation2 + $0x50] sm:$0xff]
      %v5228 = vld [vmem:[#allocation2 + $0x58] sm:$0xff]
      %v5229 = vld [vmem:[#allocation2 + $0x60] sm:$0xff]
      %v5230 = vld [vmem:[#allocation2 + $0x68] sm:$0xff]
      %v5231 = vld [vmem:[#allocation2 + $0x70] sm:$0xff]
      %v5232 = vld [vmem:[#allocation2 + $0x78] sm:$0xff]
      %v5233 = vld [vmem:[#allocation2 + $0x80] sm:$0xff]
      %v5234 = vld [vmem:[#allocation2 + $0x88] sm:$0xff]
      %v5235 = vld [vmem:[#allocation2 + $0x90] sm:$0xff]
      %v5236 = vld [vmem:[#allocation2 + $0x98] sm:$0xff]
      %v5237 = vld [vmem:[#allocation2 + $0xa0] sm:$0xff]
      %v5238 = vld [vmem:[#allocation2 + $0xa8] sm:$0xff]
      %v5239 = vld [vmem:[#allocation2 + $0xb0] sm:$0xff]
      %v5240 = vld [vmem:[#allocation2 + $0xb8] sm:$0xff]
      %v5241 = vld [vmem:[#allocation2 + $0xc0] sm:$0xff]
      %v5242 = vld [vmem:[#allocation2 + $0xc8] sm:$0xff]
      %v5243 = vld [vmem:[#allocation2 + $0xd0] sm:$0xff]
      %v5244 = vld [vmem:[#allocation2 + $0xd8] sm:$0xff]
      %v5245 = vld [vmem:[#allocation2 + $0xe0] sm:$0xff]
      %v5246 = vld [vmem:[#allocation2 + $0xe8] sm:$0xff]
      %v5247 = vld [vmem:[#allocation2 + $0xf0] sm:$0xff]
      %v5248 = vld [vmem:[#allocation2 + $0xf8] sm:$0xff]
      %s5249 = scalar_lea.vmem %s1, 16
      %v5250 = vld [vmem:[%s5249] sm:$0x3]
      %v5251 = vunpack.c.l.b16 %v5108
      %v5252 = vunpack.c.l.b16 %v5111
      %v5253 = vunpack.c.l.b16 %v5115
      %v5254 = vunpack.c.l.b16 %v5118
      %v5255 = vunpack.c.l.b16 %v5122
      %v5256 = vunpack.c.l.b16 %v5125
      %v5257 = vunpack.c.l.b16 %v5129
      %v5258 = vunpack.c.l.b16 %v5132
      %v5259 = vunpack.c.l.b16 %v5136
      %v5260 = vunpack.c.l.b16 %v5139
      %v5261 = vunpack.c.l.b16 %v5143
      %v5262 = vunpack.c.l.b16 %v5146
      %v5263 = vunpack.c.l.b16 %v5150
      %v5264 = vunpack.c.l.b16 %v5153
      %v5265 = vunpack.c.l.b16 %v5157
      %v5266 = vunpack.c.l.b16 %v5160
      %v5267 = vunpack.c.l.b16 %v5164
      %v5268 = vunpack.c.l.b16 %v5167
      %v5269 = vunpack.c.l.b16 %v5171
      %v5270 = vunpack.c.l.b16 %v5174
      %v5271 = vunpack.c.l.b16 %v5178
      %v5272 = vunpack.c.l.b16 %v5181
      %v5273 = vunpack.c.l.b16 %v5185
      %v5274 = vunpack.c.l.b16 %v5188
      %v5275 = vunpack.c.l.b16 %v5192
      %v5276 = vunpack.c.l.b16 %v5195
      %v5277 = vunpack.c.l.b16 %v5199
      %v5278 = vunpack.c.l.b16 %v5202
      %v5279 = vunpack.c.l.b16 %v5206
      %v5280 = vunpack.c.l.b16 %v5209
      %v5281 = vunpack.c.l.b16 %v5213
      %v5282 = vunpack.c.l.b16 %v5216
      %v5283 = vpack.c.b16 %v5252, %v5251
      %v5284 = vpack.c.b16 %v5254, %v5253
      %v5285 = vpack.c.b16 %v5256, %v5255
      %v5286 = vpack.c.b16 %v5258, %v5257
      %v5287 = vpack.c.b16 %v5260, %v5259
      %v5288 = vpack.c.b16 %v5262, %v5261
      %v5289 = vpack.c.b16 %v5264, %v5263
      %v5290 = vpack.c.b16 %v5266, %v5265
      %v5291 = vpack.c.b16 %v5268, %v5267
      %v5292 = vpack.c.b16 %v5270, %v5269
      %v5293 = vpack.c.b16 %v5272, %v5271
      %v5294 = vpack.c.b16 %v5274, %v5273
      %v5295 = vpack.c.b16 %v5276, %v5275
      %v5296 = vpack.c.b16 %v5278, %v5277
      %v5297 = vpack.c.b16 %v5280, %v5279
      %v5298 = vpack.c.b16 %v5282, %v5281
      %v5300 = vsel %vm377, %v5283, 0
      %v5303 = vsel %vm377, %v5284, 0
      %v5306 = vsel %vm377, %v5285, 0
      %v5309 = vsel %vm377, %v5286, 0
      %v5312 = vsel %vm377, %v5287, 0
      %v5315 = vsel %vm377, %v5288, 0
      %v5318 = vsel %vm377, %v5289, 0
      %v5321 = vsel %vm377, %v5290, 0
      %v5324 = vsel %vm377, %v5291, 0
      %v5327 = vsel %vm377, %v5292, 0
      %v5330 = vsel %vm377, %v5293, 0
      %v5333 = vsel %vm377, %v5294, 0
      %v5336 = vsel %vm377, %v5295, 0
      %v5339 = vsel %vm377, %v5296, 0
      %v5342 = vsel %vm377, %v5297, 0
      %v5345 = vsel %vm377, %v5298, 0
      %v5348 = vsel %vm426, %v5250, 0
      %5350 = vmatprep.subr.bf16.mxu0 0
      %5351 = vmatpush1.bf16.msra.mxu0 0
      %5352 = vmatprep.subr.bf16.mxu0 0
      %5353 = vmatpush1.bf16.msra.mxu0 0
      %5354 = vmatprep.subr.bf16.mxu0 0
      %5355 = vmatpush1.bf16.msra.mxu0 0
      %5356 = vmatprep.subr.bf16.mxu0 0
      %5357 = vmatpush1.bf16.msra.mxu0 0
      %5358 = vmatprep.subr.bf16.mxu0 0
      %5359 = vmatpush1.bf16.msra.mxu0 0
      %5360 = vmatprep.subr.bf16.mxu0 0
      %5361 = vmatpush1.bf16.msra.mxu0 0
      %5362 = vmatprep.subr.bf16.mxu0 0
      %5363 = vmatpush1.bf16.msra.mxu0 0
      %5364 = vmatprep.subr.bf16.mxu0 0
      %5365 = vmatpush1.bf16.msra.mxu0 %v5348
      %5366 = vmatprep.subr.bf16.mxu0 0
      %5367 = vmatpush2.bf16.msra.mxu0 0
      %5368 = vmatprep.subr.bf16.mxu0 0
      %5369 = vmatpush2.bf16.msra.mxu0 0
      %5370 = vmatprep.subr.bf16.mxu0 0
      %5371 = vmatpush2.bf16.msra.mxu0 0
      %5372 = vmatprep.subr.bf16.mxu0 0
      %5373 = vmatpush2.bf16.msra.mxu0 0
      %5374 = vmatprep.subr.bf16.mxu0 0
      %5375 = vmatpush2.bf16.msra.mxu0 0
      %5376 = vmatprep.subr.bf16.mxu0 0
      %5377 = vmatpush2.bf16.msra.mxu0 0
      %5378 = vmatprep.subr.bf16.mxu0 0
      %5379 = vmatpush2.bf16.msra.mxu0 0
      %5380 = vmatprep.subr.bf16.mxu0 0
      %5381 = vmatpush2.bf16.msra.mxu0 0
      %5382 = vmatprep.mubr.bf16.mxu0 0
      %5383 = vmatmul.mubr.bf16.gmra.mxu0 %v5300
      %v5384 = vpop.f32.mrf.mxu0
      %v5385 = vadd.f32 0.0, %v5384
      %v5386 = vpop.f32.mrf.mxu0
      %v5387 = vpop.f32.mrf.mxu0
      %v5388 = vadd.f32 0.0, %v5387
      %v5389 = vpop.f32.mrf.mxu0
      %5390 = vmatprep.mubr.bf16.mxu0 0
      %5391 = vmatmul.mubr.bf16.gmra.mxu0 %v5303
      %v5392 = vpop.f32.mrf.mxu0
      %v5393 = vadd.f32 0.0, %v5392
      %v5394 = vpop.f32.mrf.mxu0
      %v5395 = vpop.f32.mrf.mxu0
      %v5396 = vadd.f32 0.0, %v5395
      %v5397 = vpop.f32.mrf.mxu0
      %5398 = vmatprep.mubr.bf16.mxu0 0
      %5399 = vmatmul.mubr.bf16.gmra.mxu0 %v5306
      %v5400 = vpop.f32.mrf.mxu0
      %v5401 = vadd.f32 0.0, %v5400
      %v5402 = vpop.f32.mrf.mxu0
      %v5403 = vpop.f32.mrf.mxu0
      %v5404 = vadd.f32 0.0, %v5403
      %v5405 = vpop.f32.mrf.mxu0
      %5406 = vmatprep.mubr.bf16.mxu0 0
      %5407 = vmatmul.mubr.bf16.gmra.mxu0 %v5309
      %v5408 = vpop.f32.mrf.mxu0
      %v5409 = vadd.f32 0.0, %v5408
      %v5410 = vpop.f32.mrf.mxu0
      %v5411 = vpop.f32.mrf.mxu0
      %v5412 = vadd.f32 0.0, %v5411
      %v5413 = vpop.f32.mrf.mxu0
      %5414 = vmatprep.mubr.bf16.mxu0 0
      %5415 = vmatmul.mubr.bf16.gmra.mxu0 %v5312
      %v5416 = vpop.f32.mrf.mxu0
      %v5417 = vadd.f32 0.0, %v5416
      %v5418 = vpop.f32.mrf.mxu0
      %v5419 = vpop.f32.mrf.mxu0
      %v5420 = vadd.f32 0.0, %v5419
      %v5421 = vpop.f32.mrf.mxu0
      %5422 = vmatprep.mubr.bf16.mxu0 0
      %5423 = vmatmul.mubr.bf16.gmra.mxu0 %v5315
      %v5424 = vpop.f32.mrf.mxu0
      %v5425 = vadd.f32 0.0, %v5424
      %v5426 = vpop.f32.mrf.mxu0
      %v5427 = vpop.f32.mrf.mxu0
      %v5428 = vadd.f32 0.0, %v5427
      %v5429 = vpop.f32.mrf.mxu0
      %5430 = vmatprep.mubr.bf16.mxu0 0
      %5431 = vmatmul.mubr.bf16.gmra.mxu0 %v5318
      %v5432 = vpop.f32.mrf.mxu0
      %v5433 = vadd.f32 0.0, %v5432
      %v5434 = vpop.f32.mrf.mxu0
      %v5435 = vpop.f32.mrf.mxu0
      %v5436 = vadd.f32 0.0, %v5435
      %v5437 = vpop.f32.mrf.mxu0
      %5438 = vmatprep.mubr.bf16.mxu0 0
      %5439 = vmatmul.mubr.bf16.gmra.mxu0 %v5321
      %v5440 = vpop.f32.mrf.mxu0
      %v5441 = vadd.f32 0.0, %v5440
      %v5442 = vpop.f32.mrf.mxu0
      %v5443 = vpop.f32.mrf.mxu0
      %v5444 = vadd.f32 0.0, %v5443
      %v5445 = vpop.f32.mrf.mxu0
      %5446 = vmatprep.mubr.bf16.mxu0 0
      %5447 = vmatmul.mubr.bf16.gmra.mxu0 %v5324
      %v5448 = vpop.f32.mrf.mxu0
      %v5449 = vadd.f32 0.0, %v5448
      %v5450 = vpop.f32.mrf.mxu0
      %v5451 = vpop.f32.mrf.mxu0
      %v5452 = vadd.f32 0.0, %v5451
      %v5453 = vpop.f32.mrf.mxu0
      %5454 = vmatprep.mubr.bf16.mxu0 0
      %5455 = vmatmul.mubr.bf16.gmra.mxu0 %v5327
      %v5456 = vpop.f32.mrf.mxu0
      %v5457 = vadd.f32 0.0, %v5456
      %v5458 = vpop.f32.mrf.mxu0
      %v5459 = vpop.f32.mrf.mxu0
      %v5460 = vadd.f32 0.0, %v5459
      %v5461 = vpop.f32.mrf.mxu0
      %5462 = vmatprep.mubr.bf16.mxu0 0
      %5463 = vmatmul.mubr.bf16.gmra.mxu0 %v5330
      %v5464 = vpop.f32.mrf.mxu0
      %v5465 = vadd.f32 0.0, %v5464
      %v5466 = vpop.f32.mrf.mxu0
      %v5467 = vpop.f32.mrf.mxu0
      %v5468 = vadd.f32 0.0, %v5467
      %v5469 = vpop.f32.mrf.mxu0
      %5470 = vmatprep.mubr.bf16.mxu0 0
      %5471 = vmatmul.mubr.bf16.gmra.mxu0 %v5333
      %v5472 = vpop.f32.mrf.mxu0
      %v5473 = vadd.f32 0.0, %v5472
      %v5474 = vpop.f32.mrf.mxu0
      %v5475 = vpop.f32.mrf.mxu0
      %v5476 = vadd.f32 0.0, %v5475
      %v5477 = vpop.f32.mrf.mxu0
      %5478 = vmatprep.mubr.bf16.mxu0 0
      %5479 = vmatmul.mubr.bf16.gmra.mxu0 %v5336
      %v5480 = vpop.f32.mrf.mxu0
      %v5481 = vadd.f32 0.0, %v5480
      %v5482 = vpop.f32.mrf.mxu0
      %v5483 = vpop.f32.mrf.mxu0
      %v5484 = vadd.f32 0.0, %v5483
      %v5485 = vpop.f32.mrf.mxu0
      %5486 = vmatprep.mubr.bf16.mxu0 0
      %5487 = vmatmul.mubr.bf16.gmra.mxu0 %v5339
      %v5488 = vpop.f32.mrf.mxu0
      %v5489 = vadd.f32 0.0, %v5488
      %v5490 = vpop.f32.mrf.mxu0
      %v5491 = vpop.f32.mrf.mxu0
      %v5492 = vadd.f32 0.0, %v5491
      %v5493 = vpop.f32.mrf.mxu0
      %5494 = vmatprep.mubr.bf16.mxu0 0
      %5495 = vmatmul.mubr.bf16.gmra.mxu0 %v5342
      %v5496 = vpop.f32.mrf.mxu0
      %v5497 = vadd.f32 0.0, %v5496
      %v5498 = vpop.f32.mrf.mxu0
      %v5499 = vpop.f32.mrf.mxu0
      %v5500 = vadd.f32 0.0, %v5499
      %v5501 = vpop.f32.mrf.mxu0
      %5502 = vmatprep.mubr.bf16.mxu0 0
      %5503 = vmatmul.mubr.bf16.gmra.mxu0 %v5345
      %v5504 = vpop.f32.mrf.mxu0
      %v5505 = vadd.f32 0.0, %v5504
      %v5506 = vpop.f32.mrf.mxu0
      %v5507 = vpop.f32.mrf.mxu0
      %v5508 = vadd.f32 0.0, %v5507
      %v5509 = vpop.f32.mrf.mxu0
      %5510 = vdwg.mxu0
      %v5511 = vadd.f32 %v5217, %v5385
      %v5512 = vadd.f32 %v5218, %v5388
      %v5513 = vadd.f32 %v5219, %v5393
      %v5514 = vadd.f32 %v5220, %v5396
      %v5515 = vadd.f32 %v5221, %v5401
      %v5516 = vadd.f32 %v5222, %v5404
      %v5517 = vadd.f32 %v5223, %v5409
      %v5518 = vadd.f32 %v5224, %v5412
      %v5519 = vadd.f32 %v5225, %v5417
      %v5520 = vadd.f32 %v5226, %v5420
      %v5521 = vadd.f32 %v5227, %v5425
      %v5522 = vadd.f32 %v5228, %v5428
      %v5523 = vadd.f32 %v5229, %v5433
      %v5524 = vadd.f32 %v5230, %v5436
      %v5525 = vadd.f32 %v5231, %v5441
      %v5526 = vadd.f32 %v5232, %v5444
      %v5527 = vadd.f32 %v5233, %v5449
      %v5528 = vadd.f32 %v5234, %v5452
      %v5529 = vadd.f32 %v5235, %v5457
      %v5530 = vadd.f32 %v5236, %v5460
      %v5531 = vadd.f32 %v5237, %v5465
      %v5532 = vadd.f32 %v5238, %v5468
      %v5533 = vadd.f32 %v5239, %v5473
      %v5534 = vadd.f32 %v5240, %v5476
      %v5535 = vadd.f32 %v5241, %v5481
      %v5536 = vadd.f32 %v5242, %v5484
      %v5537 = vadd.f32 %v5243, %v5489
      %v5538 = vadd.f32 %v5244, %v5492
      %v5539 = vadd.f32 %v5245, %v5497
      %v5540 = vadd.f32 %v5246, %v5500
      %v5541 = vadd.f32 %v5247, %v5505
      %v5542 = vadd.f32 %v5248, %v5508
      %5543 = vst.msk [vmem:[#allocation2] sm:$0xff] %vm199, %v5511
      %5544 = vst.msk [vmem:[#allocation2 + $0x8] sm:$0xff] %vm199, %v5512
      %5545 = vst.msk [vmem:[#allocation2 + $0x10] sm:$0xff] %vm199, %v5513
      %5546 = vst.msk [vmem:[#allocation2 + $0x18] sm:$0xff] %vm199, %v5514
      %5547 = vst.msk [vmem:[#allocation2 + $0x20] sm:$0xff] %vm199, %v5515
      %5548 = vst.msk [vmem:[#allocation2 + $0x28] sm:$0xff] %vm199, %v5516
      %5549 = vst.msk [vmem:[#allocation2 + $0x30] sm:$0xff] %vm199, %v5517
      %5550 = vst.msk [vmem:[#allocation2 + $0x38] sm:$0xff] %vm199, %v5518
      %5551 = vst.msk [vmem:[#allocation2 + $0x40] sm:$0xff] %vm199, %v5519
      %5552 = vst.msk [vmem:[#allocation2 + $0x48] sm:$0xff] %vm199, %v5520
      %5553 = vst.msk [vmem:[#allocation2 + $0x50] sm:$0xff] %vm199, %v5521
      %5554 = vst.msk [vmem:[#allocation2 + $0x58] sm:$0xff] %vm199, %v5522
      %5555 = vst.msk [vmem:[#allocation2 + $0x60] sm:$0xff] %vm199, %v5523
      %5556 = vst.msk [vmem:[#allocation2 + $0x68] sm:$0xff] %vm199, %v5524
      %5557 = vst.msk [vmem:[#allocation2 + $0x70] sm:$0xff] %vm199, %v5525
      %5558 = vst.msk [vmem:[#allocation2 + $0x78] sm:$0xff] %vm199, %v5526
      %5559 = vst.msk [vmem:[#allocation2 + $0x80] sm:$0xff] %vm199, %v5527
      %5560 = vst.msk [vmem:[#allocation2 + $0x88] sm:$0xff] %vm199, %v5528
      %5561 = vst.msk [vmem:[#allocation2 + $0x90] sm:$0xff] %vm199, %v5529
      %5562 = vst.msk [vmem:[#allocation2 + $0x98] sm:$0xff] %vm199, %v5530
      %5563 = vst.msk [vmem:[#allocation2 + $0xa0] sm:$0xff] %vm199, %v5531
      %5564 = vst.msk [vmem:[#allocation2 + $0xa8] sm:$0xff] %vm199, %v5532
      %5565 = vst.msk [vmem:[#allocation2 + $0xb0] sm:$0xff] %vm199, %v5533
      %5566 = vst.msk [vmem:[#allocation2 + $0xb8] sm:$0xff] %vm199, %v5534
      %5567 = vst.msk [vmem:[#allocation2 + $0xc0] sm:$0xff] %vm199, %v5535
      %5568 = vst.msk [vmem:[#allocation2 + $0xc8] sm:$0xff] %vm199, %v5536
      %5569 = vst.msk [vmem:[#allocation2 + $0xd0] sm:$0xff] %vm199, %v5537
      %5570 = vst.msk [vmem:[#allocation2 + $0xd8] sm:$0xff] %vm199, %v5538
      %5571 = vst.msk [vmem:[#allocation2 + $0xe0] sm:$0xff] %vm199, %v5539
      %5572 = vst.msk [vmem:[#allocation2 + $0xe8] sm:$0xff] %vm199, %v5540
      %5573 = vst.msk [vmem:[#allocation2 + $0xf0] sm:$0xff] %vm199, %v5541
      %5574 = vst.msk [vmem:[#allocation2 + $0xf8] sm:$0xff] %vm199, %v5542
      %v5575 = vld [vmem:[#allocation2] sm:$0xff]
      %v5576 = vld [vmem:[#allocation2 + $0x8] sm:$0xff]
      %v5577 = vld [vmem:[#allocation2 + $0x10] sm:$0xff]
      %v5578 = vld [vmem:[#allocation2 + $0x18] sm:$0xff]
      %v5579 = vld [vmem:[#allocation2 + $0x20] sm:$0xff]
      %v5580 = vld [vmem:[#allocation2 + $0x28] sm:$0xff]
      %v5581 = vld [vmem:[#allocation2 + $0x30] sm:$0xff]
      %v5582 = vld [vmem:[#allocation2 + $0x38] sm:$0xff]
      %v5583 = vld [vmem:[#allocation2 + $0x40] sm:$0xff]
      %v5584 = vld [vmem:[#allocation2 + $0x48] sm:$0xff]
      %v5585 = vld [vmem:[#allocation2 + $0x50] sm:$0xff]
      %v5586 = vld [vmem:[#allocation2 + $0x58] sm:$0xff]
      %v5587 = vld [vmem:[#allocation2 + $0x60] sm:$0xff]
      %v5588 = vld [vmem:[#allocation2 + $0x68] sm:$0xff]
      %v5589 = vld [vmem:[#allocation2 + $0x70] sm:$0xff]
      %v5590 = vld [vmem:[#allocation2 + $0x78] sm:$0xff]
      %v5591 = vld [vmem:[#allocation2 + $0x80] sm:$0xff]
      %v5592 = vld [vmem:[#allocation2 + $0x88] sm:$0xff]
      %v5593 = vld [vmem:[#allocation2 + $0x90] sm:$0xff]
      %v5594 = vld [vmem:[#allocation2 + $0x98] sm:$0xff]
      %v5595 = vld [vmem:[#allocation2 + $0xa0] sm:$0xff]
      %v5596 = vld [vmem:[#allocation2 + $0xa8] sm:$0xff]
      %v5597 = vld [vmem:[#allocation2 + $0xb0] sm:$0xff]
      %v5598 = vld [vmem:[#allocation2 + $0xb8] sm:$0xff]
      %v5599 = vld [vmem:[#allocation2 + $0xc0] sm:$0xff]
      %v5600 = vld [vmem:[#allocation2 + $0xc8] sm:$0xff]
      %v5601 = vld [vmem:[#allocation2 + $0xd0] sm:$0xff]
      %v5602 = vld [vmem:[#allocation2 + $0xd8] sm:$0xff]
      %v5603 = vld [vmem:[#allocation2 + $0xe0] sm:$0xff]
      %v5604 = vld [vmem:[#allocation2 + $0xe8] sm:$0xff]
      %v5605 = vld [vmem:[#allocation2 + $0xf0] sm:$0xff]
      %v5606 = vld [vmem:[#allocation2 + $0xf8] sm:$0xff]
      %v5607 = vld [vmem:[%s2] sm:$0x1]
      %v5609 = vlaneseq
      %v5610 = vshrl.u32 %v5609, 7
      %v5611 = vsub.s32 0, %v5610
      %v5612 = vrot.slane %v5607, %v5611
      %v5614 = vmul.f32 %v5575, %v5612
      %v5615 = vmul.f32 %v5576, %v5612
      %v5616 = vmul.f32 %v5577, %v5612
      %v5617 = vmul.f32 %v5578, %v5612
      %v5618 = vmul.f32 %v5579, %v5612
      %v5619 = vmul.f32 %v5580, %v5612
      %v5620 = vmul.f32 %v5581, %v5612
      %v5621 = vmul.f32 %v5582, %v5612
      %v5622 = vmul.f32 %v5583, %v5612
      %v5623 = vmul.f32 %v5584, %v5612
      %v5624 = vmul.f32 %v5585, %v5612
      %v5625 = vmul.f32 %v5586, %v5612
      %v5626 = vmul.f32 %v5587, %v5612
      %v5627 = vmul.f32 %v5588, %v5612
      %v5628 = vmul.f32 %v5589, %v5612
      %v5629 = vmul.f32 %v5590, %v5612
      %v5630 = vmul.f32 %v5591, %v5612
      %v5631 = vmul.f32 %v5592, %v5612
      %v5632 = vmul.f32 %v5593, %v5612
      %v5633 = vmul.f32 %v5594, %v5612
      %v5634 = vmul.f32 %v5595, %v5612
      %v5635 = vmul.f32 %v5596, %v5612
      %v5636 = vmul.f32 %v5597, %v5612
      %v5637 = vmul.f32 %v5598, %v5612
      %v5638 = vmul.f32 %v5599, %v5612
      %v5639 = vmul.f32 %v5600, %v5612
      %v5640 = vmul.f32 %v5601, %v5612
      %v5641 = vmul.f32 %v5602, %v5612
      %v5642 = vmul.f32 %v5603, %v5612
      %v5643 = vmul.f32 %v5604, %v5612
      %v5644 = vmul.f32 %v5605, %v5612
      %v5645 = vmul.f32 %v5606, %v5612
      %v5646 = vld [vmem:[%s3] sm:$0x1]
      %v5648 = vlaneseq
      %v5649 = vshrl.u32 %v5648, 7
      %v5650 = vsub.s32 0, %v5649
      %v5651 = vrot.slane %v5646, %v5650
      %v5653 = vadd.f32 %v5614, %v5651
      %v5654 = vadd.f32 %v5615, %v5651
      %v5655 = vadd.f32 %v5616, %v5651
      %v5656 = vadd.f32 %v5617, %v5651
      %v5657 = vadd.f32 %v5618, %v5651
      %v5658 = vadd.f32 %v5619, %v5651
      %v5659 = vadd.f32 %v5620, %v5651
      %v5660 = vadd.f32 %v5621, %v5651
      %v5661 = vadd.f32 %v5622, %v5651
      %v5662 = vadd.f32 %v5623, %v5651
      %v5663 = vadd.f32 %v5624, %v5651
      %v5664 = vadd.f32 %v5625, %v5651
      %v5665 = vadd.f32 %v5626, %v5651
      %v5666 = vadd.f32 %v5627, %v5651
      %v5667 = vadd.f32 %v5628, %v5651
      %v5668 = vadd.f32 %v5629, %v5651
      %v5669 = vadd.f32 %v5630, %v5651
      %v5670 = vadd.f32 %v5631, %v5651
      %v5671 = vadd.f32 %v5632, %v5651
      %v5672 = vadd.f32 %v5633, %v5651
      %v5673 = vadd.f32 %v5634, %v5651
      %v5674 = vadd.f32 %v5635, %v5651
      %v5675 = vadd.f32 %v5636, %v5651
      %v5676 = vadd.f32 %v5637, %v5651
      %v5677 = vadd.f32 %v5638, %v5651
      %v5678 = vadd.f32 %v5639, %v5651
      %v5679 = vadd.f32 %v5640, %v5651
      %v5680 = vadd.f32 %v5641, %v5651
      %v5681 = vadd.f32 %v5642, %v5651
      %v5682 = vadd.f32 %v5643, %v5651
      %v5683 = vadd.f32 %v5644, %v5651
      %v5684 = vadd.f32 %v5645, %v5651
      %v5685 = vmax.f32 %v5653, 0.0
      %v5686 = vmax.f32 %v5654, 0.0
      %v5687 = vmax.f32 %v5655, 0.0
      %v5688 = vmax.f32 %v5656, 0.0
      %v5689 = vmax.f32 %v5657, 0.0
      %v5690 = vmax.f32 %v5658, 0.0
      %v5691 = vmax.f32 %v5659, 0.0
      %v5692 = vmax.f32 %v5660, 0.0
      %v5693 = vmax.f32 %v5661, 0.0
      %v5694 = vmax.f32 %v5662, 0.0
      %v5695 = vmax.f32 %v5663, 0.0
      %v5696 = vmax.f32 %v5664, 0.0
      %v5697 = vmax.f32 %v5665, 0.0
      %v5698 = vmax.f32 %v5666, 0.0
      %v5699 = vmax.f32 %v5667, 0.0
      %v5700 = vmax.f32 %v5668, 0.0
      %v5701 = vmax.f32 %v5669, 0.0
      %v5702 = vmax.f32 %v5670, 0.0
      %v5703 = vmax.f32 %v5671, 0.0
      %v5704 = vmax.f32 %v5672, 0.0
      %v5705 = vmax.f32 %v5673, 0.0
      %v5706 = vmax.f32 %v5674, 0.0
      %v5707 = vmax.f32 %v5675, 0.0
      %v5708 = vmax.f32 %v5676, 0.0
      %v5709 = vmax.f32 %v5677, 0.0
      %v5710 = vmax.f32 %v5678, 0.0
      %v5711 = vmax.f32 %v5679, 0.0
      %v5712 = vmax.f32 %v5680, 0.0
      %v5713 = vmax.f32 %v5681, 0.0
      %v5714 = vmax.f32 %v5682, 0.0
      %v5715 = vmax.f32 %v5683, 0.0
      %v5716 = vmax.f32 %v5684, 0.0
      %5717 = vst.msk [vmem:[%s197] sm:$0xff] %vm199, %v5685
      %5718 = vst.msk [vmem:[%s197 + $0x8] sm:$0xff] %vm199, %v5686
      %5719 = vst.msk [vmem:[%s197 + $0x10] sm:$0xff] %vm199, %v5687
      %5720 = vst.msk [vmem:[%s197 + $0x18] sm:$0xff] %vm199, %v5688
      %5721 = vst.msk [vmem:[%s197 + $0x20] sm:$0xff] %vm199, %v5689
      %5722 = vst.msk [vmem:[%s197 + $0x28] sm:$0xff] %vm199, %v5690
      %5723 = vst.msk [vmem:[%s197 + $0x30] sm:$0xff] %vm199, %v5691
      %5724 = vst.msk [vmem:[%s197 + $0x38] sm:$0xff] %vm199, %v5692
      %5725 = vst.msk [vmem:[%s197 + $0x40] sm:$0xff] %vm199, %v5693
      %5726 = vst.msk [vmem:[%s197 + $0x48] sm:$0xff] %vm199, %v5694
      %5727 = vst.msk [vmem:[%s197 + $0x50] sm:$0xff] %vm199, %v5695
      %5728 = vst.msk [vmem:[%s197 + $0x58] sm:$0xff] %vm199, %v5696
      %5729 = vst.msk [vmem:[%s197 + $0x60] sm:$0xff] %vm199, %v5697
      %5730 = vst.msk [vmem:[%s197 + $0x68] sm:$0xff] %vm199, %v5698
      %5731 = vst.msk [vmem:[%s197 + $0x70] sm:$0xff] %vm199, %v5699
      %5732 = vst.msk [vmem:[%s197 + $0x78] sm:$0xff] %vm199, %v5700
      %5733 = vst.msk [vmem:[%s197 + $0x80] sm:$0xff] %vm199, %v5701
      %5734 = vst.msk [vmem:[%s197 + $0x88] sm:$0xff] %vm199, %v5702
      %5735 = vst.msk [vmem:[%s197 + $0x90] sm:$0xff] %vm199, %v5703
      %5736 = vst.msk [vmem:[%s197 + $0x98] sm:$0xff] %vm199, %v5704
      %5737 = vst.msk [vmem:[%s197 + $0xa0] sm:$0xff] %vm199, %v5705
      %5738 = vst.msk [vmem:[%s197 + $0xa8] sm:$0xff] %vm199, %v5706
      %5739 = vst.msk [vmem:[%s197 + $0xb0] sm:$0xff] %vm199, %v5707
      %5740 = vst.msk [vmem:[%s197 + $0xb8] sm:$0xff] %vm199, %v5708
      %5741 = vst.msk [vmem:[%s197 + $0xc0] sm:$0xff] %vm199, %v5709
      %5742 = vst.msk [vmem:[%s197 + $0xc8] sm:$0xff] %vm199, %v5710
      %5743 = vst.msk [vmem:[%s197 + $0xd0] sm:$0xff] %vm199, %v5711
      %5744 = vst.msk [vmem:[%s197 + $0xd8] sm:$0xff] %vm199, %v5712
      %5745 = vst.msk [vmem:[%s197 + $0xe0] sm:$0xff] %vm199, %v5713
      %5746 = vst.msk [vmem:[%s197 + $0xe8] sm:$0xff] %vm199, %v5714
      %5747 = vst.msk [vmem:[%s197 + $0xf0] sm:$0xff] %vm199, %v5715
      %5748 = vst.msk [vmem:[%s197 + $0xf8] sm:$0xff] %vm199, %v5716
      %p5749 = scmp.lt.s32.totalorder %s15, 1
      %s5750 = scalar_select %p5749, %s15, 1
      %s5751 = smul.addr %s5750, 32
      %s5752 = smul.addr %s5751, 8
      %s5753 = scalar_lea.vmem %s4, %s5752
      // Predicated region
      $region37: #{tpu_custom_call.1} parent=35 // pred_check
        %p5754 = pneg %p122
      $region38: #{tpu_custom_call.1} parent=35 // pred_check_branch
        %5756 = sbr.rel (%p5754) target = $region40
      $region39: #{tpu_custom_call.1} parent=35 // pred_region
        _
      $region40: #{tpu_custom_call.1} parent=35 // pred_fallthru
        _
    $region36: #{tpu_custom_call.1} parent=5 // pred_fallthru
      _
    %p5757 = scmp.le.s32.totalorder 2, %s10
    // Predicated region
    $region41: #{tpu_custom_call.1} parent=5 // pred_check
      %p5758 = pneg %p5757
    $region42: #{tpu_custom_call.1} parent=5 // pred_check_branch
      %5760 = sbr.rel (%p5758) target = $region44
    $region43: #{tpu_custom_call.1} parent=5 // pred_region
      %s5761 = ssub.s32 %s10, 2
      // Predicated region
      $region45: #{tpu_custom_call.1} parent=43 // pred_check
        %p5762 = pneg %p128
      $region46: #{tpu_custom_call.1} parent=43 // pred_check_branch
        %5764 = sbr.rel (%p5762) target = $region48
      $region47: #{tpu_custom_call.1} parent=43 // pred_region
        %p5765 = scmp.lt.s32.totalorder %s16, 1
        %s5766 = scalar_select %p5765, %s16, 1
        %s5767 = smul.addr %s5766, 32
        %s5768 = smul.addr %s5767, 8
        %s5769 = scalar_lea.vmem %s4, %s5768
      $region48: #{tpu_custom_call.1} parent=43 // pred_fallthru
        _
    $region44: #{tpu_custom_call.1} parent=5 // pred_fallthru
      _
  $region6: #{tpu_custom_call.1} parent=0 // loop_footer
    %s14 = sadd.s32 1, %s10
  $region7: #{tpu_custom_call.1} parent=0 // loop_footer_branch
    %9 = sbr.rel target = $region3
  $region8: #{tpu_custom_call.1} parent=0 // loop_exit
    _

</llo_original>
